<compile_context>
chip_gen: v5e
topology: v5e:2x2
jax: 0.10.0
libtpu: 0.0.40
codegen_flags: <defaults>
</compile_context>

<pallas_src>
import functools
import math

import jax
import jax.numpy as jnp
from jax.experimental import pallas as pl
from jax.experimental.pallas import tpu as pltpu


# ----------------------------------------------------------------------------
# Fused encoder kernel (embedding add + all layers), one grid step per batch row
# ----------------------------------------------------------------------------
def encoder_stack_kernel(x_ref, pe_ref,
                         wq_ref, bq_ref, wk_ref, bk_ref, wv_ref, bv_ref,
                         wo_ref, bo_ref,
                         g1_ref, be1_ref,
                         w1_ref, b1_ref, w2_ref, b2_ref,
                         g2_ref, be2_ref,
                         out_ref,
                         *, n_layers: int, n_heads: int, eps: float = 1e-12):
    _, S, D = x_ref.shape
    dh = D // n_heads
    scale = 1.0 / math.sqrt(dh)
    bf16 = jnp.bfloat16

    def layer_norm(y, g, b):
        mu = jnp.mean(y, axis=-1, keepdims=True)
        var = jnp.mean((y - mu) ** 2, axis=-1, keepdims=True)
        return (y - mu) * jax.lax.rsqrt(var + eps) * g + b

    # Token embedding (gathered in the wrapper) + sinusoidal positional encoding.
    x = x_ref[0] + pe_ref[...]                       # (S, D) f32 residual stream

    # Static unroll over layers: stacked weights are indexed with Python ints,
    # activations stay in vregs/VMEM for the whole stack (no HBM round trips).
    for l in range(n_layers):
        x_bf = x.astype(bf16)
        wo = wo_ref[l]                               # (D, D) bf16

        # --- multi-head self-attention (bf16 MXU operands, f32 accumulate) ---
        q = jnp.dot(x_bf, wq_ref[l], preferred_element_type=jnp.float32) + bq_ref[l]
        k = jnp.dot(x_bf, wk_ref[l], preferred_element_type=jnp.float32) + bk_ref[l]
        v = jnp.dot(x_bf, wv_ref[l], preferred_element_type=jnp.float32) + bv_ref[l]

        attn = jnp.zeros((S, D), jnp.float32)
        for h in range(n_heads):                     # static; no concat over heads
            sl = slice(h * dh, (h + 1) * dh)
            qh = q[:, sl].astype(bf16)
            khT = k[:, sl].T.astype(bf16)
            vh = v[:, sl].astype(bf16)

            s = jnp.dot(qh, khT, preferred_element_type=jnp.float32) * scale
            # TODO(synk): mask=None in this configuration; an additive attention
            # mask would be added to `s` here.
            s = s - jnp.max(s, axis=-1, keepdims=True)
            p = jnp.exp(s)
            # Exact normalization (the approx EUP reciprocal cost 1e-2 of final
            # accuracy after LayerNorm amplification; re-enable
            # pl.reciprocal(..., approx=True) at large S if tolerance allows).
            p = p / jnp.sum(p, axis=-1, keepdims=True)

            ctx_h = jnp.dot(p.astype(bf16), vh, preferred_element_type=jnp.float32)
            # Accumulate through the matching row-slice of Wo instead of
            # materializing a lane concat of the per-head contexts.
            attn = attn + jnp.dot(ctx_h.astype(bf16), wo[sl, :],
                                  preferred_element_type=jnp.float32)
        attn = attn + bo_ref[l]

        # --- residual + layer norms + position-wise feed forward --------------
        resid1 = layer_norm(attn + x, g1_ref[l], be1_ref[l])

        # NOTE: FFN consumes the attention output (matches the PyTorch forward),
        # not resid1.
        h1 = jnp.dot(attn.astype(bf16), w1_ref[l],
                     preferred_element_type=jnp.float32) + b1_ref[l]
        h1 = jnp.maximum(h1, 0.0)
        ff = jnp.dot(h1.astype(bf16), w2_ref[l],
                     preferred_element_type=jnp.float32) + b2_ref[l]

        x = layer_norm(ff + resid1, g2_ref[l], be2_ref[l])

    out_ref[0] = x


# ----------------------------------------------------------------------------
# Wrapper: one fused pallas_call for the whole encoder
# ----------------------------------------------------------------------------
def encoder_forward(tokens, params, *, n_heads, mask=None):
    # TODO(synk): mask is unused (mask=None configuration); an additive mask
    # would be passed as an extra (S, S) input and applied to the scores.
    del mask

    # Gather-based embedding: no one-hot, no V-wide matmul.
    emb = jnp.take(params["emb"], tokens, axis=0)            # (B, S, D) f32
    B, S, D = emb.shape
    L = params["wq"].shape[0]
    F = params["w1"].shape[-1]

    bf = lambda a: a.astype(jnp.bfloat16)                    # halve weight DMA bytes
    full = lambda shape: pl.BlockSpec(shape, lambda b: (0,) * len(shape))
    # At real sizes, add pipeline_mode=pl.Buffered(1) to these grid-invariant
    # weight specs (single-buffer) and raise vmem_limit_bytes for v7x's 64 MiB.

    kernel = functools.partial(encoder_stack_kernel, n_layers=L, n_heads=n_heads)
    return pl.pallas_call(
        kernel,
        out_shape=jax.ShapeDtypeStruct((B, S, D), jnp.float32),
        grid_spec=pltpu.PrefetchScalarGridSpec(
            num_scalar_prefetch=0,
            grid=(B,),
            in_specs=[
                pl.BlockSpec((1, S, D), lambda b: (b, 0, 0)),   # embedded tokens
                full((S, D)),                                   # positional encoding
                full((L, D, D)), full((L, 1, D)),               # Wq, bq
                full((L, D, D)), full((L, 1, D)),               # Wk, bk
                full((L, D, D)), full((L, 1, D)),               # Wv, bv
                full((L, D, D)), full((L, 1, D)),               # Wo, bo
                full((L, 1, D)), full((L, 1, D)),               # gamma1, beta1
                full((L, D, F)), full((L, 1, F)),               # W1, b1
                full((L, F, D)), full((L, 1, D)),               # W2, b2
                full((L, 1, D)), full((L, 1, D)),               # gamma2, beta2
            ],
            out_specs=pl.BlockSpec((1, S, D), lambda b: (b, 0, 0))),
        compiler_params=pltpu.CompilerParams(
            dimension_semantics=("parallel",)),                 # both TCs on v7x
    )(emb, params["pe"],
      bf(params["wq"]), params["bq"], bf(params["wk"]), params["bk"],
      bf(params["wv"]), params["bv"], bf(params["wo"]), params["bo"],
      params["g1"], params["be1"],
      bf(params["w1"]), params["b1"], bf(params["w2"]), params["b2"],
      params["g2"], params["be2"])


# ----------------------------------------------------------------------------
# Parameter construction (deterministic, synthetic); weights stacked per layer
# ----------------------------------------------------------------------------
def sinusoidal_pe(seq_len, d_model):
    pos = jnp.arange(seq_len, dtype=jnp.float32)[:, None]
    i = jnp.arange(d_model, dtype=jnp.float32)[None, :]
    angle = pos / jnp.power(10000.0, (2.0 * jnp.floor(i / 2.0)) / d_model)
    return jnp.where((jnp.arange(d_model) % 2) == 0,
                     jnp.sin(angle), jnp.cos(angle)).astype(jnp.float32)


def init_params(key, n_layers, n_tokens, d_model, seq_len, d_ff):
    L, D, F = n_layers, d_model, d_ff
    ks = jax.random.split(key, 17)

    def w(k, shape, fan_in):
        return jax.random.normal(k, shape, jnp.float32) / math.sqrt(fan_in)

    def b(k, shape):
        return 0.1 * jax.random.normal(k, shape, jnp.float32)

    return {
        "emb": 0.02 * jax.random.normal(ks[0], (n_tokens, D), jnp.float32),
        "pe": sinusoidal_pe(seq_len, D),
        "wq": w(ks[1], (L, D, D), D), "bq": b(ks[2], (L, 1, D)),
        "wk": w(ks[3], (L, D, D), D), "bk": b(ks[4], (L, 1, D)),
        "wv": w(ks[5], (L, D, D), D), "bv": b(ks[6], (L, 1, D)),
        "wo": w(ks[7], (L, D, D), D), "bo": b(ks[8], (L, 1, D)),
        "g1": 1.0 + b(ks[9], (L, 1, D)), "be1": b(ks[10], (L, 1, D)),
        "w1": w(ks[11], (L, D, F), D), "b1": b(ks[12], (L, 1, F)),
        "w2": w(ks[13], (L, F, D), F), "b2": b(ks[14], (L, 1, D)),
        "g2": 1.0 + b(ks[15], (L, 1, D)), "be2": b(ks[16], (L, 1, D)),
    }


# ----------------------------------------------------------------------------
# Pure-JAX reference, arithmetically mirroring the kernel:
#   bf16 MXU operands / f32 accumulation, same softmax formulation
#   (subtract max, exp, exact divide), lax.rsqrt LayerNorm, same score scaling.
# ----------------------------------------------------------------------------
def reference_forward(tokens, params, *, n_heads, eps=1e-12):
    bf16 = jnp.bfloat16

    def mm(a, b):
        return jnp.dot(a.astype(bf16), b.astype(bf16),
                       preferred_element_type=jnp.float32)

    def ln(y, g, b):
        mu = jnp.mean(y, -1, keepdims=True)
        var = jnp.mean((y - mu) ** 2, -1, keepdims=True)
        return (y - mu) * jax.lax.rsqrt(var + eps) * g + b

    x = params["emb"][tokens] + params["pe"][None]
    B, S, D = x.shape
    H = n_heads
    dh = D // H
    scale = 1.0 / math.sqrt(dh)
    L = params["wq"].shape[0]
    for l in range(L):
        q = mm(x, params["wq"][l]) + params["bq"][l]
        k = mm(x, params["wk"][l]) + params["bk"][l]
        v = mm(x, params["wv"][l]) + params["bv"][l]
        qh = q.reshape(B, S, H, dh).transpose(0, 2, 1, 3)
        kh = k.reshape(B, S, H, dh).transpose(0, 2, 1, 3)
        vh = v.reshape(B, S, H, dh).transpose(0, 2, 1, 3)
        s = jnp.einsum("bhqd,bhkd->bhqk", qh.astype(bf16), kh.astype(bf16),
                       preferred_element_type=jnp.float32) * scale
        s = s - jnp.max(s, axis=-1, keepdims=True)
        p = jnp.exp(s)
        p = p / jnp.sum(p, axis=-1, keepdims=True)
        ctx = jnp.einsum("bhqk,bhkd->bhqd", p.astype(bf16), vh.astype(bf16),
                         preferred_element_type=jnp.float32)
        ctx = ctx.transpose(0, 2, 1, 3).reshape(B, S, D)
        attn = mm(ctx, params["wo"][l]) + params["bo"][l]
        resid1 = ln(attn + x, params["g1"][l], params["be1"][l])
        h1 = jnp.maximum(mm(attn, params["w1"][l]) + params["b1"][l], 0.0)
        ff = mm(h1, params["w2"][l]) + params["b2"][l]
        x = ln(ff + resid1, params["g2"][l], params["be2"][l])
    return x


# ----------------------------------------------------------------------------
if __name__ == "__main__":
    B, S = 2, 8
    D_MODEL, N_HEADS, N_LAYERS, N_TOKENS = 32, 4, 2, 50
    D_FF = 4 * D_MODEL

    key = jax.random.PRNGKey(0)
    tok_key, param_key = jax.random.split(key)
    tokens = jax.random.randint(tok_key, (B, S), 0, N_TOKENS, dtype=jnp.int32)
    params = init_params(param_key, N_LAYERS, N_TOKENS, D_MODEL, S, D_FF)

    fwd = jax.jit(functools.partial(encoder_forward, n_heads=N_HEADS))
    out = jax.block_until_ready(fwd(tokens, params))

    ref = reference_forward(tokens, params, n_heads=N_HEADS)
    assert out.shape == (B, S, D_MODEL)
    # Kernel and reference use identical bf16-operand / f32-accumulate math and
    # exact softmax normalization, so only accumulation-order noise remains.
    err = float(jnp.max(jnp.abs(out - ref)))
    assert err < 1e-2, f"mismatch vs pure-JAX reference: max abs err {err}"

    print("KERNEL_OK")
</pallas_src>

<mosaic_0001>
module attributes {stable_mosaic.version = 11 : i64} {
  func.func @encoder_stack_kernel(%arg0: i32, %arg1: memref<1x8x32xf32, #tpu.memory_space<vmem>>, %arg2: memref<8x32xf32, #tpu.memory_space<vmem>>, %arg3: memref<2x32x32xbf16, #tpu.memory_space<vmem>>, %arg4: memref<2x1x32xf32, #tpu.memory_space<vmem>>, %arg5: memref<2x32x32xbf16, #tpu.memory_space<vmem>>, %arg6: memref<2x1x32xf32, #tpu.memory_space<vmem>>, %arg7: memref<2x32x32xbf16, #tpu.memory_space<vmem>>, %arg8: memref<2x1x32xf32, #tpu.memory_space<vmem>>, %arg9: memref<2x32x32xbf16, #tpu.memory_space<vmem>>, %arg10: memref<2x1x32xf32, #tpu.memory_space<vmem>>, %arg11: memref<2x1x32xf32, #tpu.memory_space<vmem>>, %arg12: memref<2x1x32xf32, #tpu.memory_space<vmem>>, %arg13: memref<2x32x128xbf16, #tpu.memory_space<vmem>>, %arg14: memref<2x1x128xf32, #tpu.memory_space<vmem>>, %arg15: memref<2x128x32xbf16, #tpu.memory_space<vmem>>, %arg16: memref<2x1x32xf32, #tpu.memory_space<vmem>>, %arg17: memref<2x1x32xf32, #tpu.memory_space<vmem>>, %arg18: memref<2x1x32xf32, #tpu.memory_space<vmem>>, %arg19: memref<1x8x32xf32, #tpu.memory_space<vmem>>) attributes {dimension_semantics = [#tpu.dimension_semantics<parallel>], iteration_bounds = array<i64: 2>, scalar_prefetch = 0 : i64, scratch_operands = 0 : i64, tpu.core_type = #tpu.core_type<tc>, window_params = [{transform_indices = @transform_0, window_bounds = array<i64: 1, 8, 32>}, {pipeline_mode = #tpu.pipeline_mode<synchronous>, transform_indices = @transform_1, window_bounds = array<i64: 8, 32>}, {pipeline_mode = #tpu.pipeline_mode<synchronous>, transform_indices = @transform_2, window_bounds = array<i64: 2, 32, 32>}, {pipeline_mode = #tpu.pipeline_mode<synchronous>, transform_indices = @transform_3, window_bounds = array<i64: 2, 1, 32>}, {pipeline_mode = #tpu.pipeline_mode<synchronous>, transform_indices = @transform_4, window_bounds = array<i64: 2, 32, 32>}, {pipeline_mode = #tpu.pipeline_mode<synchronous>, transform_indices = @transform_5, window_bounds = array<i64: 2, 1, 32>}, {pipeline_mode = #tpu.pipeline_mode<synchronous>, transform_indices = @transform_6, window_bounds = array<i64: 2, 32, 32>}, {pipeline_mode = #tpu.pipeline_mode<synchronous>, transform_indices = @transform_7, window_bounds = array<i64: 2, 1, 32>}, {pipeline_mode = #tpu.pipeline_mode<synchronous>, transform_indices = @transform_8, window_bounds = array<i64: 2, 32, 32>}, {pipeline_mode = #tpu.pipeline_mode<synchronous>, transform_indices = @transform_9, window_bounds = array<i64: 2, 1, 32>}, {pipeline_mode = #tpu.pipeline_mode<synchronous>, transform_indices = @transform_10, window_bounds = array<i64: 2, 1, 32>}, {pipeline_mode = #tpu.pipeline_mode<synchronous>, transform_indices = @transform_11, window_bounds = array<i64: 2, 1, 32>}, {pipeline_mode = #tpu.pipeline_mode<synchronous>, transform_indices = @transform_12, window_bounds = array<i64: 2, 32, 128>}, {pipeline_mode = #tpu.pipeline_mode<synchronous>, transform_indices = @transform_13, window_bounds = array<i64: 2, 1, 128>}, {pipeline_mode = #tpu.pipeline_mode<synchronous>, transform_indices = @transform_14, window_bounds = array<i64: 2, 128, 32>}, {pipeline_mode = #tpu.pipeline_mode<synchronous>, transform_indices = @transform_15, window_bounds = array<i64: 2, 1, 32>}, {pipeline_mode = #tpu.pipeline_mode<synchronous>, transform_indices = @transform_16, window_bounds = array<i64: 2, 1, 32>}, {pipeline_mode = #tpu.pipeline_mode<synchronous>, transform_indices = @transform_17, window_bounds = array<i64: 2, 1, 32>}, {transform_indices = @transform_18, window_bounds = array<i64: 1, 8, 32>}]} {
    %c0 = arith.constant 0 : index
    %c0_0 = arith.constant 0 : index
    %c0_1 = arith.constant 0 : index
    %0 = vector.load %arg1[%c0, %c0_0, %c0_1] : memref<1x8x32xf32, #tpu.memory_space<vmem>>, vector<1x8x32xf32>
    %1 = vector.shape_cast %0 : vector<1x8x32xf32> to vector<8x32xf32>
    %c0_2 = arith.constant 0 : index
    %c0_3 = arith.constant 0 : index
    %2 = vector.load %arg2[%c0_2, %c0_3] : memref<8x32xf32, #tpu.memory_space<vmem>>, vector<8x32xf32>
    %3 = arith.addf %1, %2 : vector<8x32xf32>
    %4 = arith.truncf %3 : vector<8x32xf32> to vector<8x32xbf16>
    %c0_4 = arith.constant 0 : index
    %c0_5 = arith.constant 0 : index
    %c0_6 = arith.constant 0 : index
    %5 = vector.load %arg9[%c0_4, %c0_5, %c0_6] : memref<2x32x32xbf16, #tpu.memory_space<vmem>>, vector<1x32x32xbf16>
    %6 = vector.shape_cast %5 : vector<1x32x32xbf16> to vector<32x32xbf16>
    %c0_7 = arith.constant 0 : index
    %c0_8 = arith.constant 0 : index
    %c0_9 = arith.constant 0 : index
    %7 = vector.load %arg3[%c0_7, %c0_8, %c0_9] : memref<2x32x32xbf16, #tpu.memory_space<vmem>>, vector<1x32x32xbf16>
    %8 = vector.shape_cast %7 : vector<1x32x32xbf16> to vector<32x32xbf16>
    %cst = arith.constant dense<0.000000e+00> : vector<8x32xf32>
    %9 = tpu.matmul %4, %8, %cst {dimension_numbers = #tpu.dot_dimension_numbers<[1], [0], [0], [1], [0, 0, 1, 1], [], []>} : vector<8x32xbf16>, vector<32x32xbf16>, vector<8x32xf32> -> vector<8x32xf32>
    %c0_10 = arith.constant 0 : index
    %c0_11 = arith.constant 0 : index
    %c0_12 = arith.constant 0 : index
    %10 = vector.load %arg4[%c0_10, %c0_11, %c0_12] : memref<2x1x32xf32, #tpu.memory_space<vmem>>, vector<1x1x32xf32>
    %11 = vector.shape_cast %10 : vector<1x1x32xf32> to vector<1x32xf32>
    %12 = vector.broadcast %11 : vector<1x32xf32> to vector<8x32xf32>
    %13 = arith.addf %9, %12 : vector<8x32xf32>
    %c0_13 = arith.constant 0 : index
    %c0_14 = arith.constant 0 : index
    %c0_15 = arith.constant 0 : index
    %14 = vector.load %arg5[%c0_13, %c0_14, %c0_15] : memref<2x32x32xbf16, #tpu.memory_space<vmem>>, vector<1x32x32xbf16>
    %15 = vector.shape_cast %14 : vector<1x32x32xbf16> to vector<32x32xbf16>
    %cst_16 = arith.constant dense<0.000000e+00> : vector<8x32xf32>
    %16 = tpu.matmul %4, %15, %cst_16 {dimension_numbers = #tpu.dot_dimension_numbers<[1], [0], [0], [1], [0, 0, 1, 1], [], []>} : vector<8x32xbf16>, vector<32x32xbf16>, vector<8x32xf32> -> vector<8x32xf32>
    %c0_17 = arith.constant 0 : index
    %c0_18 = arith.constant 0 : index
    %c0_19 = arith.constant 0 : index
    %17 = vector.load %arg6[%c0_17, %c0_18, %c0_19] : memref<2x1x32xf32, #tpu.memory_space<vmem>>, vector<1x1x32xf32>
    %18 = vector.shape_cast %17 : vector<1x1x32xf32> to vector<1x32xf32>
    %19 = vector.broadcast %18 : vector<1x32xf32> to vector<8x32xf32>
    %20 = arith.addf %16, %19 : vector<8x32xf32>
    %c0_20 = arith.constant 0 : index
    %c0_21 = arith.constant 0 : index
    %c0_22 = arith.constant 0 : index
    %21 = vector.load %arg7[%c0_20, %c0_21, %c0_22] : memref<2x32x32xbf16, #tpu.memory_space<vmem>>, vector<1x32x32xbf16>
    %22 = vector.shape_cast %21 : vector<1x32x32xbf16> to vector<32x32xbf16>
    %cst_23 = arith.constant dense<0.000000e+00> : vector<8x32xf32>
    %23 = tpu.matmul %4, %22, %cst_23 {dimension_numbers = #tpu.dot_dimension_numbers<[1], [0], [0], [1], [0, 0, 1, 1], [], []>} : vector<8x32xbf16>, vector<32x32xbf16>, vector<8x32xf32> -> vector<8x32xf32>
    %c0_24 = arith.constant 0 : index
    %c0_25 = arith.constant 0 : index
    %c0_26 = arith.constant 0 : index
    %24 = vector.load %arg8[%c0_24, %c0_25, %c0_26] : memref<2x1x32xf32, #tpu.memory_space<vmem>>, vector<1x1x32xf32>
    %25 = vector.shape_cast %24 : vector<1x1x32xf32> to vector<1x32xf32>
    %26 = vector.broadcast %25 : vector<1x32xf32> to vector<8x32xf32>
    %27 = arith.addf %23, %26 : vector<8x32xf32>
    %cst_27 = arith.constant 0.000000e+00 : f32
    %28 = vector.broadcast %cst_27 : f32 to vector<8x32xf32>
    %29 = vector.extract_strided_slice %13 {offsets = [0, 0], sizes = [8, 8], strides = [1, 1]} : vector<8x32xf32> to vector<8x8xf32>
    %30 = arith.truncf %29 : vector<8x8xf32> to vector<8x8xbf16>
    %31 = vector.extract_strided_slice %20 {offsets = [0, 0], sizes = [8, 8], strides = [1, 1]} : vector<8x32xf32> to vector<8x8xf32>
    %32 = tpu.transpose %31, [1, 0] : vector<8x8xf32> -> vector<8x8xf32>
    %33 = arith.truncf %32 : vector<8x8xf32> to vector<8x8xbf16>
    %34 = vector.extract_strided_slice %27 {offsets = [0, 0], sizes = [8, 8], strides = [1, 1]} : vector<8x32xf32> to vector<8x8xf32>
    %35 = arith.truncf %34 : vector<8x8xf32> to vector<8x8xbf16>
    %cst_28 = arith.constant dense<0.000000e+00> : vector<8x8xf32>
    %36 = tpu.matmul %30, %33, %cst_28 {dimension_numbers = #tpu.dot_dimension_numbers<[1], [0], [0], [1], [0, 0, 1, 1], [], []>} : vector<8x8xbf16>, vector<8x8xbf16>, vector<8x8xf32> -> vector<8x8xf32>
    %cst_29 = arith.constant 0.353553385 : f32
    %37 = vector.broadcast %cst_29 : f32 to vector<8x8xf32>
    %38 = arith.mulf %36, %37 : vector<8x8xf32>
    %cst_30 = arith.constant dense<0xFF800000> : vector<8xf32>
    %39 = vector.multi_reduction <maximumf>, %38, %cst_30 [1] : vector<8x8xf32> to vector<8xf32>
    %40 = vector.shape_cast %39 : vector<8xf32> to vector<8x1xf32>
    %41 = vector.broadcast %40 : vector<8x1xf32> to vector<8x8xf32>
    %42 = arith.subf %38, %41 : vector<8x8xf32>
    %43 = math.exp %42 : vector<8x8xf32>
    %cst_31 = arith.constant dense<0.000000e+00> : vector<8xf32>
    %44 = vector.multi_reduction <add>, %43, %cst_31 [1] : vector<8x8xf32> to vector<8xf32>
    %45 = vector.shape_cast %44 : vector<8xf32> to vector<8x1xf32>
    %46 = vector.broadcast %45 : vector<8x1xf32> to vector<8x8xf32>
    %47 = arith.divf %43, %46 : vector<8x8xf32>
    %48 = arith.truncf %47 : vector<8x8xf32> to vector<8x8xbf16>
    %cst_32 = arith.constant dense<0.000000e+00> : vector<8x8xf32>
    %49 = tpu.matmul %48, %35, %cst_32 {dimension_numbers = #tpu.dot_dimension_numbers<[1], [0], [0], [1], [0, 0, 1, 1], [], []>} : vector<8x8xbf16>, vector<8x8xbf16>, vector<8x8xf32> -> vector<8x8xf32>
    %50 = arith.truncf %49 : vector<8x8xf32> to vector<8x8xbf16>
    %51 = vector.extract_strided_slice %6 {offsets = [0, 0], sizes = [8, 32], strides = [1, 1]} : vector<32x32xbf16> to vector<8x32xbf16>
    %cst_33 = arith.constant dense<0.000000e+00> : vector<8x32xf32>
    %52 = tpu.matmul %50, %51, %cst_33 {dimension_numbers = #tpu.dot_dimension_numbers<[1], [0], [0], [1], [0, 0, 1, 1], [], []>} : vector<8x8xbf16>, vector<8x32xbf16>, vector<8x32xf32> -> vector<8x32xf32>
    %53 = arith.addf %28, %52 : vector<8x32xf32>
    %54 = vector.extract_strided_slice %13 {offsets = [0, 8], sizes = [8, 8], strides = [1, 1]} : vector<8x32xf32> to vector<8x8xf32>
    %55 = arith.truncf %54 : vector<8x8xf32> to vector<8x8xbf16>
    %56 = vector.extract_strided_slice %20 {offsets = [0, 8], sizes = [8, 8], strides = [1, 1]} : vector<8x32xf32> to vector<8x8xf32>
    %57 = tpu.transpose %56, [1, 0] : vector<8x8xf32> -> vector<8x8xf32>
    %58 = arith.truncf %57 : vector<8x8xf32> to vector<8x8xbf16>
    %59 = vector.extract_strided_slice %27 {offsets = [0, 8], sizes = [8, 8], strides = [1, 1]} : vector<8x32xf32> to vector<8x8xf32>
    %60 = arith.truncf %59 : vector<8x8xf32> to vector<8x8xbf16>
    %cst_34 = arith.constant dense<0.000000e+00> : vector<8x8xf32>
    %61 = tpu.matmul %55, %58, %cst_34 {dimension_numbers = #tpu.dot_dimension_numbers<[1], [0], [0], [1], [0, 0, 1, 1], [], []>} : vector<8x8xbf16>, vector<8x8xbf16>, vector<8x8xf32> -> vector<8x8xf32>
    %cst_35 = arith.constant 0.353553385 : f32
    %62 = vector.broadcast %cst_35 : f32 to vector<8x8xf32>
    %63 = arith.mulf %61, %62 : vector<8x8xf32>
    %cst_36 = arith.constant dense<0xFF800000> : vector<8xf32>
    %64 = vector.multi_reduction <maximumf>, %63, %cst_36 [1] : vector<8x8xf32> to vector<8xf32>
    %65 = vector.shape_cast %64 : vector<8xf32> to vector<8x1xf32>
    %66 = vector.broadcast %65 : vector<8x1xf32> to vector<8x8xf32>
    %67 = arith.subf %63, %66 : vector<8x8xf32>
    %68 = math.exp %67 : vector<8x8xf32>
    %cst_37 = arith.constant dense<0.000000e+00> : vector<8xf32>
    %69 = vector.multi_reduction <add>, %68, %cst_37 [1] : vector<8x8xf32> to vector<8xf32>
    %70 = vector.shape_cast %69 : vector<8xf32> to vector<8x1xf32>
    %71 = vector.broadcast %70 : vector<8x1xf32> to vector<8x8xf32>
    %72 = arith.divf %68, %71 : vector<8x8xf32>
    %73 = arith.truncf %72 : vector<8x8xf32> to vector<8x8xbf16>
    %cst_38 = arith.constant dense<0.000000e+00> : vector<8x8xf32>
    %74 = tpu.matmul %73, %60, %cst_38 {dimension_numbers = #tpu.dot_dimension_numbers<[1], [0], [0], [1], [0, 0, 1, 1], [], []>} : vector<8x8xbf16>, vector<8x8xbf16>, vector<8x8xf32> -> vector<8x8xf32>
    %75 = arith.truncf %74 : vector<8x8xf32> to vector<8x8xbf16>
    %76 = vector.extract_strided_slice %6 {offsets = [8, 0], sizes = [8, 32], strides = [1, 1]} : vector<32x32xbf16> to vector<8x32xbf16>
    %cst_39 = arith.constant dense<0.000000e+00> : vector<8x32xf32>
    %77 = tpu.matmul %75, %76, %cst_39 {dimension_numbers = #tpu.dot_dimension_numbers<[1], [0], [0], [1], [0, 0, 1, 1], [], []>} : vector<8x8xbf16>, vector<8x32xbf16>, vector<8x32xf32> -> vector<8x32xf32>
    %78 = arith.addf %53, %77 : vector<8x32xf32>
    %79 = vector.extract_strided_slice %13 {offsets = [0, 16], sizes = [8, 8], strides = [1, 1]} : vector<8x32xf32> to vector<8x8xf32>
    %80 = arith.truncf %79 : vector<8x8xf32> to vector<8x8xbf16>
    %81 = vector.extract_strided_slice %20 {offsets = [0, 16], sizes = [8, 8], strides = [1, 1]} : vector<8x32xf32> to vector<8x8xf32>
    %82 = tpu.transpose %81, [1, 0] : vector<8x8xf32> -> vector<8x8xf32>
    %83 = arith.truncf %82 : vector<8x8xf32> to vector<8x8xbf16>
    %84 = vector.extract_strided_slice %27 {offsets = [0, 16], sizes = [8, 8], strides = [1, 1]} : vector<8x32xf32> to vector<8x8xf32>
    %85 = arith.truncf %84 : vector<8x8xf32> to vector<8x8xbf16>
    %cst_40 = arith.constant dense<0.000000e+00> : vector<8x8xf32>
    %86 = tpu.matmul %80, %83, %cst_40 {dimension_numbers = #tpu.dot_dimension_numbers<[1], [0], [0], [1], [0, 0, 1, 1], [], []>} : vector<8x8xbf16>, vector<8x8xbf16>, vector<8x8xf32> -> vector<8x8xf32>
    %cst_41 = arith.constant 0.353553385 : f32
    %87 = vector.broadcast %cst_41 : f32 to vector<8x8xf32>
    %88 = arith.mulf %86, %87 : vector<8x8xf32>
    %cst_42 = arith.constant dense<0xFF800000> : vector<8xf32>
    %89 = vector.multi_reduction <maximumf>, %88, %cst_42 [1] : vector<8x8xf32> to vector<8xf32>
    %90 = vector.shape_cast %89 : vector<8xf32> to vector<8x1xf32>
    %91 = vector.broadcast %90 : vector<8x1xf32> to vector<8x8xf32>
    %92 = arith.subf %88, %91 : vector<8x8xf32>
    %93 = math.exp %92 : vector<8x8xf32>
    %cst_43 = arith.constant dense<0.000000e+00> : vector<8xf32>
    %94 = vector.multi_reduction <add>, %93, %cst_43 [1] : vector<8x8xf32> to vector<8xf32>
    %95 = vector.shape_cast %94 : vector<8xf32> to vector<8x1xf32>
    %96 = vector.broadcast %95 : vector<8x1xf32> to vector<8x8xf32>
    %97 = arith.divf %93, %96 : vector<8x8xf32>
    %98 = arith.truncf %97 : vector<8x8xf32> to vector<8x8xbf16>
    %cst_44 = arith.constant dense<0.000000e+00> : vector<8x8xf32>
    %99 = tpu.matmul %98, %85, %cst_44 {dimension_numbers = #tpu.dot_dimension_numbers<[1], [0], [0], [1], [0, 0, 1, 1], [], []>} : vector<8x8xbf16>, vector<8x8xbf16>, vector<8x8xf32> -> vector<8x8xf32>
    %100 = arith.truncf %99 : vector<8x8xf32> to vector<8x8xbf16>
    %101 = vector.extract_strided_slice %6 {offsets = [16, 0], sizes = [8, 32], strides = [1, 1]} : vector<32x32xbf16> to vector<8x32xbf16>
    %cst_45 = arith.constant dense<0.000000e+00> : vector<8x32xf32>
    %102 = tpu.matmul %100, %101, %cst_45 {dimension_numbers = #tpu.dot_dimension_numbers<[1], [0], [0], [1], [0, 0, 1, 1], [], []>} : vector<8x8xbf16>, vector<8x32xbf16>, vector<8x32xf32> -> vector<8x32xf32>
    %103 = arith.addf %78, %102 : vector<8x32xf32>
    %104 = vector.extract_strided_slice %13 {offsets = [0, 24], sizes = [8, 8], strides = [1, 1]} : vector<8x32xf32> to vector<8x8xf32>
    %105 = arith.truncf %104 : vector<8x8xf32> to vector<8x8xbf16>
    %106 = vector.extract_strided_slice %20 {offsets = [0, 24], sizes = [8, 8], strides = [1, 1]} : vector<8x32xf32> to vector<8x8xf32>
    %107 = tpu.transpose %106, [1, 0] : vector<8x8xf32> -> vector<8x8xf32>
    %108 = arith.truncf %107 : vector<8x8xf32> to vector<8x8xbf16>
    %109 = vector.extract_strided_slice %27 {offsets = [0, 24], sizes = [8, 8], strides = [1, 1]} : vector<8x32xf32> to vector<8x8xf32>
    %110 = arith.truncf %109 : vector<8x8xf32> to vector<8x8xbf16>
    %cst_46 = arith.constant dense<0.000000e+00> : vector<8x8xf32>
    %111 = tpu.matmul %105, %108, %cst_46 {dimension_numbers = #tpu.dot_dimension_numbers<[1], [0], [0], [1], [0, 0, 1, 1], [], []>} : vector<8x8xbf16>, vector<8x8xbf16>, vector<8x8xf32> -> vector<8x8xf32>
    %cst_47 = arith.constant 0.353553385 : f32
    %112 = vector.broadcast %cst_47 : f32 to vector<8x8xf32>
    %113 = arith.mulf %111, %112 : vector<8x8xf32>
    %cst_48 = arith.constant dense<0xFF800000> : vector<8xf32>
    %114 = vector.multi_reduction <maximumf>, %113, %cst_48 [1] : vector<8x8xf32> to vector<8xf32>
    %115 = vector.shape_cast %114 : vector<8xf32> to vector<8x1xf32>
    %116 = vector.broadcast %115 : vector<8x1xf32> to vector<8x8xf32>
    %117 = arith.subf %113, %116 : vector<8x8xf32>
    %118 = math.exp %117 : vector<8x8xf32>
    %cst_49 = arith.constant dense<0.000000e+00> : vector<8xf32>
    %119 = vector.multi_reduction <add>, %118, %cst_49 [1] : vector<8x8xf32> to vector<8xf32>
    %120 = vector.shape_cast %119 : vector<8xf32> to vector<8x1xf32>
    %121 = vector.broadcast %120 : vector<8x1xf32> to vector<8x8xf32>
    %122 = arith.divf %118, %121 : vector<8x8xf32>
    %123 = arith.truncf %122 : vector<8x8xf32> to vector<8x8xbf16>
    %cst_50 = arith.constant dense<0.000000e+00> : vector<8x8xf32>
    %124 = tpu.matmul %123, %110, %cst_50 {dimension_numbers = #tpu.dot_dimension_numbers<[1], [0], [0], [1], [0, 0, 1, 1], [], []>} : vector<8x8xbf16>, vector<8x8xbf16>, vector<8x8xf32> -> vector<8x8xf32>
    %125 = arith.truncf %124 : vector<8x8xf32> to vector<8x8xbf16>
    %126 = vector.extract_strided_slice %6 {offsets = [24, 0], sizes = [8, 32], strides = [1, 1]} : vector<32x32xbf16> to vector<8x32xbf16>
    %cst_51 = arith.constant dense<0.000000e+00> : vector<8x32xf32>
    %127 = tpu.matmul %125, %126, %cst_51 {dimension_numbers = #tpu.dot_dimension_numbers<[1], [0], [0], [1], [0, 0, 1, 1], [], []>} : vector<8x8xbf16>, vector<8x32xbf16>, vector<8x32xf32> -> vector<8x32xf32>
    %128 = arith.addf %103, %127 : vector<8x32xf32>
    %c0_52 = arith.constant 0 : index
    %c0_53 = arith.constant 0 : index
    %c0_54 = arith.constant 0 : index
    %129 = vector.load %arg10[%c0_52, %c0_53, %c0_54] : memref<2x1x32xf32, #tpu.memory_space<vmem>>, vector<1x1x32xf32>
    %130 = vector.shape_cast %129 : vector<1x1x32xf32> to vector<1x32xf32>
    %131 = vector.broadcast %130 : vector<1x32xf32> to vector<8x32xf32>
    %132 = arith.addf %128, %131 : vector<8x32xf32>
    %133 = arith.addf %132, %3 : vector<8x32xf32>
    %c0_55 = arith.constant 0 : index
    %c0_56 = arith.constant 0 : index
    %c0_57 = arith.constant 0 : index
    %134 = vector.load %arg11[%c0_55, %c0_56, %c0_57] : memref<2x1x32xf32, #tpu.memory_space<vmem>>, vector<1x1x32xf32>
    %135 = vector.shape_cast %134 : vector<1x1x32xf32> to vector<1x32xf32>
    %c0_58 = arith.constant 0 : index
    %c0_59 = arith.constant 0 : index
    %c0_60 = arith.constant 0 : index
    %136 = vector.load %arg12[%c0_58, %c0_59, %c0_60] : memref<2x1x32xf32, #tpu.memory_space<vmem>>, vector<1x1x32xf32>
    %137 = vector.shape_cast %136 : vector<1x1x32xf32> to vector<1x32xf32>
    %cst_61 = arith.constant dense<0.000000e+00> : vector<8xf32>
    %138 = vector.multi_reduction <add>, %133, %cst_61 [1] : vector<8x32xf32> to vector<8xf32>
    %139 = vector.shape_cast %138 : vector<8xf32> to vector<8x1xf32>
    %cst_62 = arith.constant 3.200000e+01 : f32
    %140 = vector.broadcast %cst_62 : f32 to vector<8x1xf32>
    %141 = arith.divf %139, %140 : vector<8x1xf32>
    %142 = vector.broadcast %141 : vector<8x1xf32> to vector<8x32xf32>
    %143 = arith.subf %133, %142 : vector<8x32xf32>
    %144 = arith.mulf %143, %143 : vector<8x32xf32>
    %cst_63 = arith.constant dense<0.000000e+00> : vector<8xf32>
    %145 = vector.multi_reduction <add>, %144, %cst_63 [1] : vector<8x32xf32> to vector<8xf32>
    %146 = vector.shape_cast %145 : vector<8xf32> to vector<8x1xf32>
    %cst_64 = arith.constant 3.200000e+01 : f32
    %147 = vector.broadcast %cst_64 : f32 to vector<8x1xf32>
    %148 = arith.divf %146, %147 : vector<8x1xf32>
    %149 = vector.broadcast %141 : vector<8x1xf32> to vector<8x32xf32>
    %150 = arith.subf %133, %149 : vector<8x32xf32>
    %cst_65 = arith.constant 9.99999996E-13 : f32
    %151 = vector.broadcast %cst_65 : f32 to vector<8x1xf32>
    %152 = arith.addf %148, %151 : vector<8x1xf32>
    %153 = math.rsqrt %152 : vector<8x1xf32>
    %154 = vector.broadcast %153 : vector<8x1xf32> to vector<8x32xf32>
    %155 = arith.mulf %150, %154 : vector<8x32xf32>
    %156 = vector.broadcast %135 : vector<1x32xf32> to vector<8x32xf32>
    %157 = arith.mulf %155, %156 : vector<8x32xf32>
    %158 = vector.broadcast %137 : vector<1x32xf32> to vector<8x32xf32>
    %159 = arith.addf %157, %158 : vector<8x32xf32>
    %160 = arith.truncf %132 : vector<8x32xf32> to vector<8x32xbf16>
    %c0_66 = arith.constant 0 : index
    %c0_67 = arith.constant 0 : index
    %c0_68 = arith.constant 0 : index
    %161 = vector.load %arg13[%c0_66, %c0_67, %c0_68] : memref<2x32x128xbf16, #tpu.memory_space<vmem>>, vector<1x32x128xbf16>
    %162 = vector.shape_cast %161 : vector<1x32x128xbf16> to vector<32x128xbf16>
    %cst_69 = arith.constant dense<0.000000e+00> : vector<8x128xf32>
    %163 = tpu.matmul %160, %162, %cst_69 {dimension_numbers = #tpu.dot_dimension_numbers<[1], [0], [0], [1], [0, 0, 1, 1], [], []>} : vector<8x32xbf16>, vector<32x128xbf16>, vector<8x128xf32> -> vector<8x128xf32>
    %c0_70 = arith.constant 0 : index
    %c0_71 = arith.constant 0 : index
    %c0_72 = arith.constant 0 : index
    %164 = vector.load %arg14[%c0_70, %c0_71, %c0_72] : memref<2x1x128xf32, #tpu.memory_space<vmem>>, vector<1x1x128xf32>
    %165 = vector.shape_cast %164 : vector<1x1x128xf32> to vector<1x128xf32>
    %166 = vector.broadcast %165 : vector<1x128xf32> to vector<8x128xf32>
    %167 = arith.addf %163, %166 : vector<8x128xf32>
    %cst_73 = arith.constant 0.000000e+00 : f32
    %168 = vector.broadcast %cst_73 : f32 to vector<8x128xf32>
    %169 = arith.maximumf %167, %168 : vector<8x128xf32>
    %170 = arith.truncf %169 : vector<8x128xf32> to vector<8x128xbf16>
    %c0_74 = arith.constant 0 : index
    %c0_75 = arith.constant 0 : index
    %c0_76 = arith.constant 0 : index
    %171 = vector.load %arg15[%c0_74, %c0_75, %c0_76] : memref<2x128x32xbf16, #tpu.memory_space<vmem>>, vector<1x128x32xbf16>
    %172 = vector.shape_cast %171 : vector<1x128x32xbf16> to vector<128x32xbf16>
    %cst_77 = arith.constant dense<0.000000e+00> : vector<8x32xf32>
    %173 = tpu.matmul %170, %172, %cst_77 {dimension_numbers = #tpu.dot_dimension_numbers<[1], [0], [0], [1], [0, 0, 1, 1], [], []>} : vector<8x128xbf16>, vector<128x32xbf16>, vector<8x32xf32> -> vector<8x32xf32>
    %c0_78 = arith.constant 0 : index
    %c0_79 = arith.constant 0 : index
    %c0_80 = arith.constant 0 : index
    %174 = vector.load %arg16[%c0_78, %c0_79, %c0_80] : memref<2x1x32xf32, #tpu.memory_space<vmem>>, vector<1x1x32xf32>
    %175 = vector.shape_cast %174 : vector<1x1x32xf32> to vector<1x32xf32>
    %176 = vector.broadcast %175 : vector<1x32xf32> to vector<8x32xf32>
    %177 = arith.addf %173, %176 : vector<8x32xf32>
    %178 = arith.addf %177, %159 : vector<8x32xf32>
    %c0_81 = arith.constant 0 : index
    %c0_82 = arith.constant 0 : index
    %c0_83 = arith.constant 0 : index
    %179 = vector.load %arg17[%c0_81, %c0_82, %c0_83] : memref<2x1x32xf32, #tpu.memory_space<vmem>>, vector<1x1x32xf32>
    %180 = vector.shape_cast %179 : vector<1x1x32xf32> to vector<1x32xf32>
    %c0_84 = arith.constant 0 : index
    %c0_85 = arith.constant 0 : index
    %c0_86 = arith.constant 0 : index
    %181 = vector.load %arg18[%c0_84, %c0_85, %c0_86] : memref<2x1x32xf32, #tpu.memory_space<vmem>>, vector<1x1x32xf32>
    %182 = vector.shape_cast %181 : vector<1x1x32xf32> to vector<1x32xf32>
    %cst_87 = arith.constant dense<0.000000e+00> : vector<8xf32>
    %183 = vector.multi_reduction <add>, %178, %cst_87 [1] : vector<8x32xf32> to vector<8xf32>
    %184 = vector.shape_cast %183 : vector<8xf32> to vector<8x1xf32>
    %cst_88 = arith.constant 3.200000e+01 : f32
    %185 = vector.broadcast %cst_88 : f32 to vector<8x1xf32>
    %186 = arith.divf %184, %185 : vector<8x1xf32>
    %187 = vector.broadcast %186 : vector<8x1xf32> to vector<8x32xf32>
    %188 = arith.subf %178, %187 : vector<8x32xf32>
    %189 = arith.mulf %188, %188 : vector<8x32xf32>
    %cst_89 = arith.constant dense<0.000000e+00> : vector<8xf32>
    %190 = vector.multi_reduction <add>, %189, %cst_89 [1] : vector<8x32xf32> to vector<8xf32>
    %191 = vector.shape_cast %190 : vector<8xf32> to vector<8x1xf32>
    %cst_90 = arith.constant 3.200000e+01 : f32
    %192 = vector.broadcast %cst_90 : f32 to vector<8x1xf32>
    %193 = arith.divf %191, %192 : vector<8x1xf32>
    %194 = vector.broadcast %186 : vector<8x1xf32> to vector<8x32xf32>
    %195 = arith.subf %178, %194 : vector<8x32xf32>
    %cst_91 = arith.constant 9.99999996E-13 : f32
    %196 = vector.broadcast %cst_91 : f32 to vector<8x1xf32>
    %197 = arith.addf %193, %196 : vector<8x1xf32>
    %198 = math.rsqrt %197 : vector<8x1xf32>
    %199 = vector.broadcast %198 : vector<8x1xf32> to vector<8x32xf32>
    %200 = arith.mulf %195, %199 : vector<8x32xf32>
    %201 = vector.broadcast %180 : vector<1x32xf32> to vector<8x32xf32>
    %202 = arith.mulf %200, %201 : vector<8x32xf32>
    %203 = vector.broadcast %182 : vector<1x32xf32> to vector<8x32xf32>
    %204 = arith.addf %202, %203 : vector<8x32xf32>
    %205 = arith.truncf %204 : vector<8x32xf32> to vector<8x32xbf16>
    %c1 = arith.constant 1 : index
    %c0_92 = arith.constant 0 : index
    %c0_93 = arith.constant 0 : index
    %206 = vector.load %arg9[%c1, %c0_92, %c0_93] : memref<2x32x32xbf16, #tpu.memory_space<vmem>>, vector<1x32x32xbf16>
    %207 = vector.shape_cast %206 : vector<1x32x32xbf16> to vector<32x32xbf16>
    %c1_94 = arith.constant 1 : index
    %c0_95 = arith.constant 0 : index
    %c0_96 = arith.constant 0 : index
    %208 = vector.load %arg3[%c1_94, %c0_95, %c0_96] : memref<2x32x32xbf16, #tpu.memory_space<vmem>>, vector<1x32x32xbf16>
    %209 = vector.shape_cast %208 : vector<1x32x32xbf16> to vector<32x32xbf16>
    %cst_97 = arith.constant dense<0.000000e+00> : vector<8x32xf32>
    %210 = tpu.matmul %205, %209, %cst_97 {dimension_numbers = #tpu.dot_dimension_numbers<[1], [0], [0], [1], [0, 0, 1, 1], [], []>} : vector<8x32xbf16>, vector<32x32xbf16>, vector<8x32xf32> -> vector<8x32xf32>
    %c1_98 = arith.constant 1 : index
    %c0_99 = arith.constant 0 : index
    %c0_100 = arith.constant 0 : index
    %211 = vector.load %arg4[%c1_98, %c0_99, %c0_100] : memref<2x1x32xf32, #tpu.memory_space<vmem>>, vector<1x1x32xf32>
    %212 = vector.shape_cast %211 : vector<1x1x32xf32> to vector<1x32xf32>
    %213 = vector.broadcast %212 : vector<1x32xf32> to vector<8x32xf32>
    %214 = arith.addf %210, %213 : vector<8x32xf32>
    %c1_101 = arith.constant 1 : index
    %c0_102 = arith.constant 0 : index
    %c0_103 = arith.constant 0 : index
    %215 = vector.load %arg5[%c1_101, %c0_102, %c0_103] : memref<2x32x32xbf16, #tpu.memory_space<vmem>>, vector<1x32x32xbf16>
    %216 = vector.shape_cast %215 : vector<1x32x32xbf16> to vector<32x32xbf16>
    %cst_104 = arith.constant dense<0.000000e+00> : vector<8x32xf32>
    %217 = tpu.matmul %205, %216, %cst_104 {dimension_numbers = #tpu.dot_dimension_numbers<[1], [0], [0], [1], [0, 0, 1, 1], [], []>} : vector<8x32xbf16>, vector<32x32xbf16>, vector<8x32xf32> -> vector<8x32xf32>
    %c1_105 = arith.constant 1 : index
    %c0_106 = arith.constant 0 : index
    %c0_107 = arith.constant 0 : index
    %218 = vector.load %arg6[%c1_105, %c0_106, %c0_107] : memref<2x1x32xf32, #tpu.memory_space<vmem>>, vector<1x1x32xf32>
    %219 = vector.shape_cast %218 : vector<1x1x32xf32> to vector<1x32xf32>
    %220 = vector.broadcast %219 : vector<1x32xf32> to vector<8x32xf32>
    %221 = arith.addf %217, %220 : vector<8x32xf32>
    %c1_108 = arith.constant 1 : index
    %c0_109 = arith.constant 0 : index
    %c0_110 = arith.constant 0 : index
    %222 = vector.load %arg7[%c1_108, %c0_109, %c0_110] : memref<2x32x32xbf16, #tpu.memory_space<vmem>>, vector<1x32x32xbf16>
    %223 = vector.shape_cast %222 : vector<1x32x32xbf16> to vector<32x32xbf16>
    %cst_111 = arith.constant dense<0.000000e+00> : vector<8x32xf32>
    %224 = tpu.matmul %205, %223, %cst_111 {dimension_numbers = #tpu.dot_dimension_numbers<[1], [0], [0], [1], [0, 0, 1, 1], [], []>} : vector<8x32xbf16>, vector<32x32xbf16>, vector<8x32xf32> -> vector<8x32xf32>
    %c1_112 = arith.constant 1 : index
    %c0_113 = arith.constant 0 : index
    %c0_114 = arith.constant 0 : index
    %225 = vector.load %arg8[%c1_112, %c0_113, %c0_114] : memref<2x1x32xf32, #tpu.memory_space<vmem>>, vector<1x1x32xf32>
    %226 = vector.shape_cast %225 : vector<1x1x32xf32> to vector<1x32xf32>
    %227 = vector.broadcast %226 : vector<1x32xf32> to vector<8x32xf32>
    %228 = arith.addf %224, %227 : vector<8x32xf32>
    %cst_115 = arith.constant 0.000000e+00 : f32
    %229 = vector.broadcast %cst_115 : f32 to vector<8x32xf32>
    %230 = vector.extract_strided_slice %214 {offsets = [0, 0], sizes = [8, 8], strides = [1, 1]} : vector<8x32xf32> to vector<8x8xf32>
    %231 = arith.truncf %230 : vector<8x8xf32> to vector<8x8xbf16>
    %232 = vector.extract_strided_slice %221 {offsets = [0, 0], sizes = [8, 8], strides = [1, 1]} : vector<8x32xf32> to vector<8x8xf32>
    %233 = tpu.transpose %232, [1, 0] : vector<8x8xf32> -> vector<8x8xf32>
    %234 = arith.truncf %233 : vector<8x8xf32> to vector<8x8xbf16>
    %235 = vector.extract_strided_slice %228 {offsets = [0, 0], sizes = [8, 8], strides = [1, 1]} : vector<8x32xf32> to vector<8x8xf32>
    %236 = arith.truncf %235 : vector<8x8xf32> to vector<8x8xbf16>
    %cst_116 = arith.constant dense<0.000000e+00> : vector<8x8xf32>
    %237 = tpu.matmul %231, %234, %cst_116 {dimension_numbers = #tpu.dot_dimension_numbers<[1], [0], [0], [1], [0, 0, 1, 1], [], []>} : vector<8x8xbf16>, vector<8x8xbf16>, vector<8x8xf32> -> vector<8x8xf32>
    %cst_117 = arith.constant 0.353553385 : f32
    %238 = vector.broadcast %cst_117 : f32 to vector<8x8xf32>
    %239 = arith.mulf %237, %238 : vector<8x8xf32>
    %cst_118 = arith.constant dense<0xFF800000> : vector<8xf32>
    %240 = vector.multi_reduction <maximumf>, %239, %cst_118 [1] : vector<8x8xf32> to vector<8xf32>
    %241 = vector.shape_cast %240 : vector<8xf32> to vector<8x1xf32>
    %242 = vector.broadcast %241 : vector<8x1xf32> to vector<8x8xf32>
    %243 = arith.subf %239, %242 : vector<8x8xf32>
    %244 = math.exp %243 : vector<8x8xf32>
    %cst_119 = arith.constant dense<0.000000e+00> : vector<8xf32>
    %245 = vector.multi_reduction <add>, %244, %cst_119 [1] : vector<8x8xf32> to vector<8xf32>
    %246 = vector.shape_cast %245 : vector<8xf32> to vector<8x1xf32>
    %247 = vector.broadcast %246 : vector<8x1xf32> to vector<8x8xf32>
    %248 = arith.divf %244, %247 : vector<8x8xf32>
    %249 = arith.truncf %248 : vector<8x8xf32> to vector<8x8xbf16>
    %cst_120 = arith.constant dense<0.000000e+00> : vector<8x8xf32>
    %250 = tpu.matmul %249, %236, %cst_120 {dimension_numbers = #tpu.dot_dimension_numbers<[1], [0], [0], [1], [0, 0, 1, 1], [], []>} : vector<8x8xbf16>, vector<8x8xbf16>, vector<8x8xf32> -> vector<8x8xf32>
    %251 = arith.truncf %250 : vector<8x8xf32> to vector<8x8xbf16>
    %252 = vector.extract_strided_slice %207 {offsets = [0, 0], sizes = [8, 32], strides = [1, 1]} : vector<32x32xbf16> to vector<8x32xbf16>
    %cst_121 = arith.constant dense<0.000000e+00> : vector<8x32xf32>
    %253 = tpu.matmul %251, %252, %cst_121 {dimension_numbers = #tpu.dot_dimension_numbers<[1], [0], [0], [1], [0, 0, 1, 1], [], []>} : vector<8x8xbf16>, vector<8x32xbf16>, vector<8x32xf32> -> vector<8x32xf32>
    %254 = arith.addf %229, %253 : vector<8x32xf32>
    %255 = vector.extract_strided_slice %214 {offsets = [0, 8], sizes = [8, 8], strides = [1, 1]} : vector<8x32xf32> to vector<8x8xf32>
    %256 = arith.truncf %255 : vector<8x8xf32> to vector<8x8xbf16>
    %257 = vector.extract_strided_slice %221 {offsets = [0, 8], sizes = [8, 8], strides = [1, 1]} : vector<8x32xf32> to vector<8x8xf32>
    %258 = tpu.transpose %257, [1, 0] : vector<8x8xf32> -> vector<8x8xf32>
    %259 = arith.truncf %258 : vector<8x8xf32> to vector<8x8xbf16>
    %260 = vector.extract_strided_slice %228 {offsets = [0, 8], sizes = [8, 8], strides = [1, 1]} : vector<8x32xf32> to vector<8x8xf32>
    %261 = arith.truncf %260 : vector<8x8xf32> to vector<8x8xbf16>
    %cst_122 = arith.constant dense<0.000000e+00> : vector<8x8xf32>
    %262 = tpu.matmul %256, %259, %cst_122 {dimension_numbers = #tpu.dot_dimension_numbers<[1], [0], [0], [1], [0, 0, 1, 1], [], []>} : vector<8x8xbf16>, vector<8x8xbf16>, vector<8x8xf32> -> vector<8x8xf32>
    %cst_123 = arith.constant 0.353553385 : f32
    %263 = vector.broadcast %cst_123 : f32 to vector<8x8xf32>
    %264 = arith.mulf %262, %263 : vector<8x8xf32>
    %cst_124 = arith.constant dense<0xFF800000> : vector<8xf32>
    %265 = vector.multi_reduction <maximumf>, %264, %cst_124 [1] : vector<8x8xf32> to vector<8xf32>
    %266 = vector.shape_cast %265 : vector<8xf32> to vector<8x1xf32>
    %267 = vector.broadcast %266 : vector<8x1xf32> to vector<8x8xf32>
    %268 = arith.subf %264, %267 : vector<8x8xf32>
    %269 = math.exp %268 : vector<8x8xf32>
    %cst_125 = arith.constant dense<0.000000e+00> : vector<8xf32>
    %270 = vector.multi_reduction <add>, %269, %cst_125 [1] : vector<8x8xf32> to vector<8xf32>
    %271 = vector.shape_cast %270 : vector<8xf32> to vector<8x1xf32>
    %272 = vector.broadcast %271 : vector<8x1xf32> to vector<8x8xf32>
    %273 = arith.divf %269, %272 : vector<8x8xf32>
    %274 = arith.truncf %273 : vector<8x8xf32> to vector<8x8xbf16>
    %cst_126 = arith.constant dense<0.000000e+00> : vector<8x8xf32>
    %275 = tpu.matmul %274, %261, %cst_126 {dimension_numbers = #tpu.dot_dimension_numbers<[1], [0], [0], [1], [0, 0, 1, 1], [], []>} : vector<8x8xbf16>, vector<8x8xbf16>, vector<8x8xf32> -> vector<8x8xf32>
    %276 = arith.truncf %275 : vector<8x8xf32> to vector<8x8xbf16>
    %277 = vector.extract_strided_slice %207 {offsets = [8, 0], sizes = [8, 32], strides = [1, 1]} : vector<32x32xbf16> to vector<8x32xbf16>
    %cst_127 = arith.constant dense<0.000000e+00> : vector<8x32xf32>
    %278 = tpu.matmul %276, %277, %cst_127 {dimension_numbers = #tpu.dot_dimension_numbers<[1], [0], [0], [1], [0, 0, 1, 1], [], []>} : vector<8x8xbf16>, vector<8x32xbf16>, vector<8x32xf32> -> vector<8x32xf32>
    %279 = arith.addf %254, %278 : vector<8x32xf32>
    %280 = vector.extract_strided_slice %214 {offsets = [0, 16], sizes = [8, 8], strides = [1, 1]} : vector<8x32xf32> to vector<8x8xf32>
    %281 = arith.truncf %280 : vector<8x8xf32> to vector<8x8xbf16>
    %282 = vector.extract_strided_slice %221 {offsets = [0, 16], sizes = [8, 8], strides = [1, 1]} : vector<8x32xf32> to vector<8x8xf32>
    %283 = tpu.transpose %282, [1, 0] : vector<8x8xf32> -> vector<8x8xf32>
    %284 = arith.truncf %283 : vector<8x8xf32> to vector<8x8xbf16>
    %285 = vector.extract_strided_slice %228 {offsets = [0, 16], sizes = [8, 8], strides = [1, 1]} : vector<8x32xf32> to vector<8x8xf32>
    %286 = arith.truncf %285 : vector<8x8xf32> to vector<8x8xbf16>
    %cst_128 = arith.constant dense<0.000000e+00> : vector<8x8xf32>
    %287 = tpu.matmul %281, %284, %cst_128 {dimension_numbers = #tpu.dot_dimension_numbers<[1], [0], [0], [1], [0, 0, 1, 1], [], []>} : vector<8x8xbf16>, vector<8x8xbf16>, vector<8x8xf32> -> vector<8x8xf32>
    %cst_129 = arith.constant 0.353553385 : f32
    %288 = vector.broadcast %cst_129 : f32 to vector<8x8xf32>
    %289 = arith.mulf %287, %288 : vector<8x8xf32>
    %cst_130 = arith.constant dense<0xFF800000> : vector<8xf32>
    %290 = vector.multi_reduction <maximumf>, %289, %cst_130 [1] : vector<8x8xf32> to vector<8xf32>
    %291 = vector.shape_cast %290 : vector<8xf32> to vector<8x1xf32>
    %292 = vector.broadcast %291 : vector<8x1xf32> to vector<8x8xf32>
    %293 = arith.subf %289, %292 : vector<8x8xf32>
    %294 = math.exp %293 : vector<8x8xf32>
    %cst_131 = arith.constant dense<0.000000e+00> : vector<8xf32>
    %295 = vector.multi_reduction <add>, %294, %cst_131 [1] : vector<8x8xf32> to vector<8xf32>
    %296 = vector.shape_cast %295 : vector<8xf32> to vector<8x1xf32>
    %297 = vector.broadcast %296 : vector<8x1xf32> to vector<8x8xf32>
    %298 = arith.divf %294, %297 : vector<8x8xf32>
    %299 = arith.truncf %298 : vector<8x8xf32> to vector<8x8xbf16>
    %cst_132 = arith.constant dense<0.000000e+00> : vector<8x8xf32>
    %300 = tpu.matmul %299, %286, %cst_132 {dimension_numbers = #tpu.dot_dimension_numbers<[1], [0], [0], [1], [0, 0, 1, 1], [], []>} : vector<8x8xbf16>, vector<8x8xbf16>, vector<8x8xf32> -> vector<8x8xf32>
    %301 = arith.truncf %300 : vector<8x8xf32> to vector<8x8xbf16>
    %302 = vector.extract_strided_slice %207 {offsets = [16, 0], sizes = [8, 32], strides = [1, 1]} : vector<32x32xbf16> to vector<8x32xbf16>
    %cst_133 = arith.constant dense<0.000000e+00> : vector<8x32xf32>
    %303 = tpu.matmul %301, %302, %cst_133 {dimension_numbers = #tpu.dot_dimension_numbers<[1], [0], [0], [1], [0, 0, 1, 1], [], []>} : vector<8x8xbf16>, vector<8x32xbf16>, vector<8x32xf32> -> vector<8x32xf32>
    %304 = arith.addf %279, %303 : vector<8x32xf32>
    %305 = vector.extract_strided_slice %214 {offsets = [0, 24], sizes = [8, 8], strides = [1, 1]} : vector<8x32xf32> to vector<8x8xf32>
    %306 = arith.truncf %305 : vector<8x8xf32> to vector<8x8xbf16>
    %307 = vector.extract_strided_slice %221 {offsets = [0, 24], sizes = [8, 8], strides = [1, 1]} : vector<8x32xf32> to vector<8x8xf32>
    %308 = tpu.transpose %307, [1, 0] : vector<8x8xf32> -> vector<8x8xf32>
    %309 = arith.truncf %308 : vector<8x8xf32> to vector<8x8xbf16>
    %310 = vector.extract_strided_slice %228 {offsets = [0, 24], sizes = [8, 8], strides = [1, 1]} : vector<8x32xf32> to vector<8x8xf32>
    %311 = arith.truncf %310 : vector<8x8xf32> to vector<8x8xbf16>
    %cst_134 = arith.constant dense<0.000000e+00> : vector<8x8xf32>
    %312 = tpu.matmul %306, %309, %cst_134 {dimension_numbers = #tpu.dot_dimension_numbers<[1], [0], [0], [1], [0, 0, 1, 1], [], []>} : vector<8x8xbf16>, vector<8x8xbf16>, vector<8x8xf32> -> vector<8x8xf32>
    %cst_135 = arith.constant 0.353553385 : f32
    %313 = vector.broadcast %cst_135 : f32 to vector<8x8xf32>
    %314 = arith.mulf %312, %313 : vector<8x8xf32>
    %cst_136 = arith.constant dense<0xFF800000> : vector<8xf32>
    %315 = vector.multi_reduction <maximumf>, %314, %cst_136 [1] : vector<8x8xf32> to vector<8xf32>
    %316 = vector.shape_cast %315 : vector<8xf32> to vector<8x1xf32>
    %317 = vector.broadcast %316 : vector<8x1xf32> to vector<8x8xf32>
    %318 = arith.subf %314, %317 : vector<8x8xf32>
    %319 = math.exp %318 : vector<8x8xf32>
    %cst_137 = arith.constant dense<0.000000e+00> : vector<8xf32>
    %320 = vector.multi_reduction <add>, %319, %cst_137 [1] : vector<8x8xf32> to vector<8xf32>
    %321 = vector.shape_cast %320 : vector<8xf32> to vector<8x1xf32>
    %322 = vector.broadcast %321 : vector<8x1xf32> to vector<8x8xf32>
    %323 = arith.divf %319, %322 : vector<8x8xf32>
    %324 = arith.truncf %323 : vector<8x8xf32> to vector<8x8xbf16>
    %cst_138 = arith.constant dense<0.000000e+00> : vector<8x8xf32>
    %325 = tpu.matmul %324, %311, %cst_138 {dimension_numbers = #tpu.dot_dimension_numbers<[1], [0], [0], [1], [0, 0, 1, 1], [], []>} : vector<8x8xbf16>, vector<8x8xbf16>, vector<8x8xf32> -> vector<8x8xf32>
    %326 = arith.truncf %325 : vector<8x8xf32> to vector<8x8xbf16>
    %327 = vector.extract_strided_slice %207 {offsets = [24, 0], sizes = [8, 32], strides = [1, 1]} : vector<32x32xbf16> to vector<8x32xbf16>
    %cst_139 = arith.constant dense<0.000000e+00> : vector<8x32xf32>
    %328 = tpu.matmul %326, %327, %cst_139 {dimension_numbers = #tpu.dot_dimension_numbers<[1], [0], [0], [1], [0, 0, 1, 1], [], []>} : vector<8x8xbf16>, vector<8x32xbf16>, vector<8x32xf32> -> vector<8x32xf32>
    %329 = arith.addf %304, %328 : vector<8x32xf32>
    %c1_140 = arith.constant 1 : index
    %c0_141 = arith.constant 0 : index
    %c0_142 = arith.constant 0 : index
    %330 = vector.load %arg10[%c1_140, %c0_141, %c0_142] : memref<2x1x32xf32, #tpu.memory_space<vmem>>, vector<1x1x32xf32>
    %331 = vector.shape_cast %330 : vector<1x1x32xf32> to vector<1x32xf32>
    %332 = vector.broadcast %331 : vector<1x32xf32> to vector<8x32xf32>
    %333 = arith.addf %329, %332 : vector<8x32xf32>
    %334 = arith.addf %333, %204 : vector<8x32xf32>
    %c1_143 = arith.constant 1 : index
    %c0_144 = arith.constant 0 : index
    %c0_145 = arith.constant 0 : index
    %335 = vector.load %arg11[%c1_143, %c0_144, %c0_145] : memref<2x1x32xf32, #tpu.memory_space<vmem>>, vector<1x1x32xf32>
    %336 = vector.shape_cast %335 : vector<1x1x32xf32> to vector<1x32xf32>
    %c1_146 = arith.constant 1 : index
    %c0_147 = arith.constant 0 : index
    %c0_148 = arith.constant 0 : index
    %337 = vector.load %arg12[%c1_146, %c0_147, %c0_148] : memref<2x1x32xf32, #tpu.memory_space<vmem>>, vector<1x1x32xf32>
    %338 = vector.shape_cast %337 : vector<1x1x32xf32> to vector<1x32xf32>
    %cst_149 = arith.constant dense<0.000000e+00> : vector<8xf32>
    %339 = vector.multi_reduction <add>, %334, %cst_149 [1] : vector<8x32xf32> to vector<8xf32>
    %340 = vector.shape_cast %339 : vector<8xf32> to vector<8x1xf32>
    %cst_150 = arith.constant 3.200000e+01 : f32
    %341 = vector.broadcast %cst_150 : f32 to vector<8x1xf32>
    %342 = arith.divf %340, %341 : vector<8x1xf32>
    %343 = vector.broadcast %342 : vector<8x1xf32> to vector<8x32xf32>
    %344 = arith.subf %334, %343 : vector<8x32xf32>
    %345 = arith.mulf %344, %344 : vector<8x32xf32>
    %cst_151 = arith.constant dense<0.000000e+00> : vector<8xf32>
    %346 = vector.multi_reduction <add>, %345, %cst_151 [1] : vector<8x32xf32> to vector<8xf32>
    %347 = vector.shape_cast %346 : vector<8xf32> to vector<8x1xf32>
    %cst_152 = arith.constant 3.200000e+01 : f32
    %348 = vector.broadcast %cst_152 : f32 to vector<8x1xf32>
    %349 = arith.divf %347, %348 : vector<8x1xf32>
    %350 = vector.broadcast %342 : vector<8x1xf32> to vector<8x32xf32>
    %351 = arith.subf %334, %350 : vector<8x32xf32>
    %cst_153 = arith.constant 9.99999996E-13 : f32
    %352 = vector.broadcast %cst_153 : f32 to vector<8x1xf32>
    %353 = arith.addf %349, %352 : vector<8x1xf32>
    %354 = math.rsqrt %353 : vector<8x1xf32>
    %355 = vector.broadcast %354 : vector<8x1xf32> to vector<8x32xf32>
    %356 = arith.mulf %351, %355 : vector<8x32xf32>
    %357 = vector.broadcast %336 : vector<1x32xf32> to vector<8x32xf32>
    %358 = arith.mulf %356, %357 : vector<8x32xf32>
    %359 = vector.broadcast %338 : vector<1x32xf32> to vector<8x32xf32>
    %360 = arith.addf %358, %359 : vector<8x32xf32>
    %361 = arith.truncf %333 : vector<8x32xf32> to vector<8x32xbf16>
    %c1_154 = arith.constant 1 : index
    %c0_155 = arith.constant 0 : index
    %c0_156 = arith.constant 0 : index
    %362 = vector.load %arg13[%c1_154, %c0_155, %c0_156] : memref<2x32x128xbf16, #tpu.memory_space<vmem>>, vector<1x32x128xbf16>
    %363 = vector.shape_cast %362 : vector<1x32x128xbf16> to vector<32x128xbf16>
    %cst_157 = arith.constant dense<0.000000e+00> : vector<8x128xf32>
    %364 = tpu.matmul %361, %363, %cst_157 {dimension_numbers = #tpu.dot_dimension_numbers<[1], [0], [0], [1], [0, 0, 1, 1], [], []>} : vector<8x32xbf16>, vector<32x128xbf16>, vector<8x128xf32> -> vector<8x128xf32>
    %c1_158 = arith.constant 1 : index
    %c0_159 = arith.constant 0 : index
    %c0_160 = arith.constant 0 : index
    %365 = vector.load %arg14[%c1_158, %c0_159, %c0_160] : memref<2x1x128xf32, #tpu.memory_space<vmem>>, vector<1x1x128xf32>
    %366 = vector.shape_cast %365 : vector<1x1x128xf32> to vector<1x128xf32>
    %367 = vector.broadcast %366 : vector<1x128xf32> to vector<8x128xf32>
    %368 = arith.addf %364, %367 : vector<8x128xf32>
    %cst_161 = arith.constant 0.000000e+00 : f32
    %369 = vector.broadcast %cst_161 : f32 to vector<8x128xf32>
    %370 = arith.maximumf %368, %369 : vector<8x128xf32>
    %371 = arith.truncf %370 : vector<8x128xf32> to vector<8x128xbf16>
    %c1_162 = arith.constant 1 : index
    %c0_163 = arith.constant 0 : index
    %c0_164 = arith.constant 0 : index
    %372 = vector.load %arg15[%c1_162, %c0_163, %c0_164] : memref<2x128x32xbf16, #tpu.memory_space<vmem>>, vector<1x128x32xbf16>
    %373 = vector.shape_cast %372 : vector<1x128x32xbf16> to vector<128x32xbf16>
    %cst_165 = arith.constant dense<0.000000e+00> : vector<8x32xf32>
    %374 = tpu.matmul %371, %373, %cst_165 {dimension_numbers = #tpu.dot_dimension_numbers<[1], [0], [0], [1], [0, 0, 1, 1], [], []>} : vector<8x128xbf16>, vector<128x32xbf16>, vector<8x32xf32> -> vector<8x32xf32>
    %c1_166 = arith.constant 1 : index
    %c0_167 = arith.constant 0 : index
    %c0_168 = arith.constant 0 : index
    %375 = vector.load %arg16[%c1_166, %c0_167, %c0_168] : memref<2x1x32xf32, #tpu.memory_space<vmem>>, vector<1x1x32xf32>
    %376 = vector.shape_cast %375 : vector<1x1x32xf32> to vector<1x32xf32>
    %377 = vector.broadcast %376 : vector<1x32xf32> to vector<8x32xf32>
    %378 = arith.addf %374, %377 : vector<8x32xf32>
    %379 = arith.addf %378, %360 : vector<8x32xf32>
    %c1_169 = arith.constant 1 : index
    %c0_170 = arith.constant 0 : index
    %c0_171 = arith.constant 0 : index
    %380 = vector.load %arg17[%c1_169, %c0_170, %c0_171] : memref<2x1x32xf32, #tpu.memory_space<vmem>>, vector<1x1x32xf32>
    %381 = vector.shape_cast %380 : vector<1x1x32xf32> to vector<1x32xf32>
    %c1_172 = arith.constant 1 : index
    %c0_173 = arith.constant 0 : index
    %c0_174 = arith.constant 0 : index
    %382 = vector.load %arg18[%c1_172, %c0_173, %c0_174] : memref<2x1x32xf32, #tpu.memory_space<vmem>>, vector<1x1x32xf32>
    %383 = vector.shape_cast %382 : vector<1x1x32xf32> to vector<1x32xf32>
    %cst_175 = arith.constant dense<0.000000e+00> : vector<8xf32>
    %384 = vector.multi_reduction <add>, %379, %cst_175 [1] : vector<8x32xf32> to vector<8xf32>
    %385 = vector.shape_cast %384 : vector<8xf32> to vector<8x1xf32>
    %cst_176 = arith.constant 3.200000e+01 : f32
    %386 = vector.broadcast %cst_176 : f32 to vector<8x1xf32>
    %387 = arith.divf %385, %386 : vector<8x1xf32>
    %388 = vector.broadcast %387 : vector<8x1xf32> to vector<8x32xf32>
    %389 = arith.subf %379, %388 : vector<8x32xf32>
    %390 = arith.mulf %389, %389 : vector<8x32xf32>
    %cst_177 = arith.constant dense<0.000000e+00> : vector<8xf32>
    %391 = vector.multi_reduction <add>, %390, %cst_177 [1] : vector<8x32xf32> to vector<8xf32>
    %392 = vector.shape_cast %391 : vector<8xf32> to vector<8x1xf32>
    %cst_178 = arith.constant 3.200000e+01 : f32
    %393 = vector.broadcast %cst_178 : f32 to vector<8x1xf32>
    %394 = arith.divf %392, %393 : vector<8x1xf32>
    %395 = vector.broadcast %387 : vector<8x1xf32> to vector<8x32xf32>
    %396 = arith.subf %379, %395 : vector<8x32xf32>
    %cst_179 = arith.constant 9.99999996E-13 : f32
    %397 = vector.broadcast %cst_179 : f32 to vector<8x1xf32>
    %398 = arith.addf %394, %397 : vector<8x1xf32>
    %399 = math.rsqrt %398 : vector<8x1xf32>
    %400 = vector.broadcast %399 : vector<8x1xf32> to vector<8x32xf32>
    %401 = arith.mulf %396, %400 : vector<8x32xf32>
    %402 = vector.broadcast %381 : vector<1x32xf32> to vector<8x32xf32>
    %403 = arith.mulf %401, %402 : vector<8x32xf32>
    %404 = vector.broadcast %383 : vector<1x32xf32> to vector<8x32xf32>
    %405 = arith.addf %403, %404 : vector<8x32xf32>
    %c0_180 = arith.constant 0 : index
    %c0_181 = arith.constant 0 : index
    %c0_182 = arith.constant 0 : index
    %406 = vector.load %arg19[%c0_180, %c0_181, %c0_182] : memref<1x8x32xf32, #tpu.memory_space<vmem>>, vector<1x8x32xf32>
    %407 = vector.shape_cast %406 : vector<1x8x32xf32> to vector<8x32xf32>
    %408 = vector.shape_cast %405 : vector<8x32xf32> to vector<1x8x32xf32>
    tpu.vector_store %arg19[%c0_180, %c0_181, %c0_182], %408 {strides = array<i32>} : memref<1x8x32xf32, #tpu.memory_space<vmem>>, vector<1x8x32xf32>,
    return
  }
  func.func @transform_0(%arg0: i32) -> (i32, i32, i32) {
    %c0_i32 = arith.constant 0 : i32
    %c0_i32_0 = arith.constant 0 : i32
    %c0_i32_1 = arith.constant 0 : i32
    return %arg0, %c0_i32, %c0_i32_0 : i32, i32, i32
  }
  func.func @transform_1(%arg0: i32) -> (i32, i32) {
    %c0_i32 = arith.constant 0 : i32
    %c0_i32_0 = arith.constant 0 : i32
    %c0_i32_1 = arith.constant 0 : i32
    return %c0_i32, %c0_i32_0 : i32, i32
  }
  func.func @transform_2(%arg0: i32) -> (i32, i32, i32) {
    %c0_i32 = arith.constant 0 : i32
    %c0_i32_0 = arith.constant 0 : i32
    %c0_i32_1 = arith.constant 0 : i32
    %c0_i32_2 = arith.constant 0 : i32
    return %c0_i32, %c0_i32_0, %c0_i32_1 : i32, i32, i32
  }
  func.func @transform_3(%arg0: i32) -> (i32, i32, i32) {
    %c0_i32 = arith.constant 0 : i32
    %c0_i32_0 = arith.constant 0 : i32
    %c0_i32_1 = arith.constant 0 : i32
    %c0_i32_2 = arith.constant 0 : i32
    return %c0_i32, %c0_i32_0, %c0_i32_1 : i32, i32, i32
  }
  func.func @transform_4(%arg0: i32) -> (i32, i32, i32) {
    %c0_i32 = arith.constant 0 : i32
    %c0_i32_0 = arith.constant 0 : i32
    %c0_i32_1 = arith.constant 0 : i32
    %c0_i32_2 = arith.constant 0 : i32
    return %c0_i32, %c0_i32_0, %c0_i32_1 : i32, i32, i32
  }
  func.func @transform_5(%arg0: i32) -> (i32, i32, i32) {
    %c0_i32 = arith.constant 0 : i32
    %c0_i32_0 = arith.constant 0 : i32
    %c0_i32_1 = arith.constant 0 : i32
    %c0_i32_2 = arith.constant 0 : i32
    return %c0_i32, %c0_i32_0, %c0_i32_1 : i32, i32, i32
  }
  func.func @transform_6(%arg0: i32) -> (i32, i32, i32) {
    %c0_i32 = arith.constant 0 : i32
    %c0_i32_0 = arith.constant 0 : i32
    %c0_i32_1 = arith.constant 0 : i32
    %c0_i32_2 = arith.constant 0 : i32
    return %c0_i32, %c0_i32_0, %c0_i32_1 : i32, i32, i32
  }
  func.func @transform_7(%arg0: i32) -> (i32, i32, i32) {
    %c0_i32 = arith.constant 0 : i32
    %c0_i32_0 = arith.constant 0 : i32
    %c0_i32_1 = arith.constant 0 : i32
    %c0_i32_2 = arith.constant 0 : i32
    return %c0_i32, %c0_i32_0, %c0_i32_1 : i32, i32, i32
  }
  func.func @transform_8(%arg0: i32) -> (i32, i32, i32) {
    %c0_i32 = arith.constant 0 : i32
    %c0_i32_0 = arith.constant 0 : i32
    %c0_i32_1 = arith.constant 0 : i32
    %c0_i32_2 = arith.constant 0 : i32
    return %c0_i32, %c0_i32_0, %c0_i32_1 : i32, i32, i32
  }
  func.func @transform_9(%arg0: i32) -> (i32, i32, i32) {
    %c0_i32 = arith.constant 0 : i32
    %c0_i32_0 = arith.constant 0 : i32
    %c0_i32_1 = arith.constant 0 : i32
    %c0_i32_2 = arith.constant 0 : i32
    return %c0_i32, %c0_i32_0, %c0_i32_1 : i32, i32, i32
  }
  func.func @transform_10(%arg0: i32) -> (i32, i32, i32) {
    %c0_i32 = arith.constant 0 : i32
    %c0_i32_0 = arith.constant 0 : i32
    %c0_i32_1 = arith.constant 0 : i32
    %c0_i32_2 = arith.constant 0 : i32
    return %c0_i32, %c0_i32_0, %c0_i32_1 : i32, i32, i32
  }
  func.func @transform_11(%arg0: i32) -> (i32, i32, i32) {
    %c0_i32 = arith.constant 0 : i32
    %c0_i32_0 = arith.constant 0 : i32
    %c0_i32_1 = arith.constant 0 : i32
    %c0_i32_2 = arith.constant 0 : i32
    return %c0_i32, %c0_i32_0, %c0_i32_1 : i32, i32, i32
  }
  func.func @transform_12(%arg0: i32) -> (i32, i32, i32) {
    %c0_i32 = arith.constant 0 : i32
    %c0_i32_0 = arith.constant 0 : i32
    %c0_i32_1 = arith.constant 0 : i32
    %c0_i32_2 = arith.constant 0 : i32
    return %c0_i32, %c0_i32_0, %c0_i32_1 : i32, i32, i32
  }
  func.func @transform_13(%arg0: i32) -> (i32, i32, i32) {
    %c0_i32 = arith.constant 0 : i32
    %c0_i32_0 = arith.constant 0 : i32
    %c0_i32_1 = arith.constant 0 : i32
    %c0_i32_2 = arith.constant 0 : i32
    return %c0_i32, %c0_i32_0, %c0_i32_1 : i32, i32, i32
  }
  func.func @transform_14(%arg0: i32) -> (i32, i32, i32) {
    %c0_i32 = arith.constant 0 : i32
    %c0_i32_0 = arith.constant 0 : i32
    %c0_i32_1 = arith.constant 0 : i32
    %c0_i32_2 = arith.constant 0 : i32
    return %c0_i32, %c0_i32_0, %c0_i32_1 : i32, i32, i32
  }
  func.func @transform_15(%arg0: i32) -> (i32, i32, i32) {
    %c0_i32 = arith.constant 0 : i32
    %c0_i32_0 = arith.constant 0 : i32
    %c0_i32_1 = arith.constant 0 : i32
    %c0_i32_2 = arith.constant 0 : i32
    return %c0_i32, %c0_i32_0, %c0_i32_1 : i32, i32, i32
  }
  func.func @transform_16(%arg0: i32) -> (i32, i32, i32) {
    %c0_i32 = arith.constant 0 : i32
    %c0_i32_0 = arith.constant 0 : i32
    %c0_i32_1 = arith.constant 0 : i32
    %c0_i32_2 = arith.constant 0 : i32
    return %c0_i32, %c0_i32_0, %c0_i32_1 : i32, i32, i32
  }
  func.func @transform_17(%arg0: i32) -> (i32, i32, i32) {
    %c0_i32 = arith.constant 0 : i32
    %c0_i32_0 = arith.constant 0 : i32
    %c0_i32_1 = arith.constant 0 : i32
    %c0_i32_2 = arith.constant 0 : i32
    return %c0_i32, %c0_i32_0, %c0_i32_1 : i32, i32, i32
  }
  func.func @transform_18(%arg0: i32) -> (i32, i32, i32) {
    %c0_i32 = arith.constant 0 : i32
    %c0_i32_0 = arith.constant 0 : i32
    %c0_i32_1 = arith.constant 0 : i32
    return %arg0, %c0_i32, %c0_i32_0 : i32, i32, i32
  }
}

</mosaic_0001>

<llo_original>
// kernel: encoder_forward.1
$region0: #{encoder_forward.1}
  #allocation0 [shape = 'u32[]', space=smem, size = 0x4, offset = 0x4, fixed_abs, tag = 'smem constant byte address 0x4 - core index']
  #allocation1 [shape = 'u32[72,128]{1,0:T(1,128)}', space=vmem, size = 0x9000, scoped, tag = 'internal scratch']
  %s0 = inlined_call_operand.vmem [shape: f32[2,8,32], index: 0, kind: input, shape index: {}]
  %s1 = inlined_call_operand.vmem [shape: f32[8,32], index: 1, kind: input, shape index: {}]
  %s2 = inlined_call_operand.vmem [shape: bf16[2,32,32], index: 2, kind: input, shape index: {}]
  %s3 = inlined_call_operand.vmem [shape: f32[2,1,32], index: 3, kind: input, shape index: {}]
  %s4 = inlined_call_operand.vmem [shape: bf16[2,32,32], index: 4, kind: input, shape index: {}]
  %s5 = inlined_call_operand.vmem [shape: f32[2,1,32], index: 5, kind: input, shape index: {}]
  %s6 = inlined_call_operand.vmem [shape: bf16[2,32,32], index: 6, kind: input, shape index: {}]
  %s7 = inlined_call_operand.vmem [shape: f32[2,1,32], index: 7, kind: input, shape index: {}]
  %s8 = inlined_call_operand.vmem [shape: bf16[2,32,32], index: 8, kind: input, shape index: {}]
  %s9 = inlined_call_operand.vmem [shape: f32[2,1,32], index: 9, kind: input, shape index: {}]
  %s10 = inlined_call_operand.vmem [shape: f32[2,1,32], index: 10, kind: input, shape index: {}]
  %s11 = inlined_call_operand.vmem [shape: f32[2,1,32], index: 11, kind: input, shape index: {}]
  %s12 = inlined_call_operand.vmem [shape: bf16[2,32,128], index: 12, kind: input, shape index: {}]
  %s13 = inlined_call_operand.vmem [shape: f32[2,1,128], index: 13, kind: input, shape index: {}]
  %s14 = inlined_call_operand.vmem [shape: bf16[2,128,32], index: 14, kind: input, shape index: {}]
  %s15 = inlined_call_operand.vmem [shape: f32[2,1,32], index: 15, kind: input, shape index: {}]
  %s16 = inlined_call_operand.vmem [shape: f32[2,1,32], index: 16, kind: input, shape index: {}]
  %s17 = inlined_call_operand.vmem [shape: f32[2,1,32], index: 17, kind: input, shape index: {}]
  %s18 = inlined_call_operand.hbm [shape: f32[2,8,32], index: 18, kind: output, shape index: {}]
  %s19 = sld [smem:[#allocation0]]
  $region105: #{encoder_forward.1} parent=0
    _
  %s21 = ssub.s32 1, %s19
  %s22 = scalar_select 0, %s21, %s19
  $region1: #{encoder_forward.1} parent=0
    #allocation2 [shape = 'u8[8192]{0}', space=vmem, size = 0x2000, scoped, tag = 'output window, operand 0']
    #allocation3 [shape = 's32[2]{0}', space=sflag, size = 0x8, scoped, tag = 'scoped memory for encoder_forward.1']
    %23 = vsyncpa [#allocation3], 0
    %s24 = scalar_lea.sflag [#allocation3], 1
    %25 = vsyncpa %s24, 0
    loop: start=0, step=1, limit=4
    $region2: #{encoder_forward.1} parent=1 // loop_pre_header
      _
    $region3: #{encoder_forward.1} parent=1 // loop_header
      %s27 = sphi 0, %s31
      %p28 = scmp.ge.s32.totalorder %s27, 4
      %s37 = sphi 0, %s39
      %s40 = sphi 0, %s37
      %s41 = sphi 0, %s40
      %s57 = sphi 0, %s41
      %s61 = sphi 0, %s61
      %s63 = sphi 0, %s61
      %s64 = sphi 0, %s63
      %s78 = sphi 0, %s64
      %s82 = sphi 0, %s82
      %s84 = sphi 0, %s82
      %s85 = sphi 0, %s84
      %s99 = sphi 0, %s85
      %s103 = sphi 0, %s103
      %s105 = sphi 0, %s103
      %s106 = sphi 0, %s105
      %s120 = sphi 0, %s106
      %s124 = sphi 0, %s124
      %s126 = sphi 0, %s124
      %s127 = sphi 0, %s126
      %s141 = sphi 0, %s127
      %s145 = sphi 0, %s145
      %s147 = sphi 0, %s145
      %s148 = sphi 0, %s147
      %s162 = sphi 0, %s148
      %s166 = sphi 0, %s166
      %s168 = sphi 0, %s166
      %s169 = sphi 0, %s168
      %s183 = sphi 0, %s169
      %s187 = sphi 0, %s187
      %s189 = sphi 0, %s187
      %s190 = sphi 0, %s189
      %s204 = sphi 0, %s190
      %s208 = sphi 0, %s208
      %s210 = sphi 0, %s208
      %s211 = sphi 0, %s210
      %s225 = sphi 0, %s211
      %s229 = sphi 0, %s229
      %s231 = sphi 0, %s229
      %s232 = sphi 0, %s231
      %s246 = sphi 0, %s232
      %s250 = sphi 0, %s250
      %s252 = sphi 0, %s250
      %s253 = sphi 0, %s252
      %s267 = sphi 0, %s253
      %s271 = sphi 0, %s271
      %s273 = sphi 0, %s271
      %s274 = sphi 0, %s273
      %s288 = sphi 0, %s274
      %s292 = sphi 0, %s292
      %s294 = sphi 0, %s292
      %s295 = sphi 0, %s294
      %s309 = sphi 0, %s295
      %s313 = sphi 0, %s313
      %s315 = sphi 0, %s313
      %s316 = sphi 0, %s315
      %s330 = sphi 0, %s316
      %s334 = sphi 0, %s334
      %s336 = sphi 0, %s334
      %s337 = sphi 0, %s336
      %s351 = sphi 0, %s337
      %s355 = sphi 0, %s355
      %s357 = sphi 0, %s355
      %s358 = sphi 0, %s357
      %s372 = sphi 0, %s358
      %s376 = sphi 0, %s376
      %s378 = sphi 0, %s376
      %s379 = sphi 0, %s378
      %s393 = sphi 0, %s379
      %s397 = sphi 0, %s397
      %s399 = sphi 0, %s397
      %s400 = sphi 0, %s399
      %s414 = sphi 0, %s400
      %s420 = sphi 0, %s422
      %s423 = sphi 0, %s420
      %s424 = sphi 0, %s423
      %s440 = sphi 0, %s424
    $region4: #{encoder_forward.1} parent=1 // loop_header_branch
      %30 = sbr.rel (%p28) target = $region8
    $region5: #{encoder_forward.1} parent=1 // loop_body
      %s32 = ssub.s32 %s27, 1
      %s33 = ssub.s32 %s27, 2
      %s34 = sadd.s32 %s27, 1
      %s35 = ssub.s32 %s27, %s34
      %p36 = scmp.eq.s32.totalorder %s35, 0
      %s38 = sadd.s32 %s37, 1
      %s39 = scalar_select %p36, %s37, %s38
      %p42 = pneg %p36
      %p43 = scmp.eq.s32.totalorder %s27, 1
      %p44 = por %p42, %p43
      %p45 = scmp.ne.s32.totalorder %s37, %s40
      %p46 = scmp.eq.s32.totalorder %s27, 0
      %p47 = por %p45, %p46
      %p48 = scmp.ne.s32.totalorder %s37, %s40
      %p49 = scmp.eq.s32.totalorder %s32, 1
      %p50 = por %p48, %p49
      %p51 = scmp.ne.s32.totalorder %s40, %s41
      %p52 = scmp.eq.s32.totalorder %s32, 0
      %p53 = por %p51, %p52
      %p54 = scmp.ne.s32.totalorder %s40, %s41
      %p55 = scmp.eq.s32.totalorder %s33, 1
      %p56 = por %p54, %p55
      %p58 = scmp.ne.s32.totalorder %s41, %s57
      %p59 = scmp.eq.s32.totalorder %s33, 0
      %p60 = por %p58, %p59
      %s62 = sadd.s32 %s61, 1
      %p65 = scmp.eq.s32.totalorder %s27, 1
      %p66 = scmp.ne.s32.totalorder %s61, %s63
      %p67 = scmp.eq.s32.totalorder %s27, 0
      %p68 = por %p66, %p67
      %p69 = scmp.ne.s32.totalorder %s61, %s63
      %p70 = scmp.eq.s32.totalorder %s32, 1
      %p71 = por %p69, %p70
      %p72 = scmp.ne.s32.totalorder %s63, %s64
      %p73 = scmp.eq.s32.totalorder %s32, 0
      %p74 = por %p72, %p73
      %p75 = scmp.ne.s32.totalorder %s63, %s64
      %p76 = scmp.eq.s32.totalorder %s33, 1
      %p77 = por %p75, %p76
      %p79 = scmp.ne.s32.totalorder %s64, %s78
      %p80 = scmp.eq.s32.totalorder %s33, 0
      %p81 = por %p79, %p80
      %s83 = sadd.s32 %s82, 1
      %p86 = scmp.eq.s32.totalorder %s27, 1
      %p87 = scmp.ne.s32.totalorder %s82, %s84
      %p88 = scmp.eq.s32.totalorder %s27, 0
      %p89 = por %p87, %p88
      %p90 = scmp.ne.s32.totalorder %s82, %s84
      %p91 = scmp.eq.s32.totalorder %s32, 1
      %p92 = por %p90, %p91
      %p93 = scmp.ne.s32.totalorder %s84, %s85
      %p94 = scmp.eq.s32.totalorder %s32, 0
      %p95 = por %p93, %p94
      %p96 = scmp.ne.s32.totalorder %s84, %s85
      %p97 = scmp.eq.s32.totalorder %s33, 1
      %p98 = por %p96, %p97
      %p100 = scmp.ne.s32.totalorder %s85, %s99
      %p101 = scmp.eq.s32.totalorder %s33, 0
      %p102 = por %p100, %p101
      %s104 = sadd.s32 %s103, 1
      %p107 = scmp.eq.s32.totalorder %s27, 1
      %p108 = scmp.ne.s32.totalorder %s103, %s105
      %p109 = scmp.eq.s32.totalorder %s27, 0
      %p110 = por %p108, %p109
      %p111 = scmp.ne.s32.totalorder %s103, %s105
      %p112 = scmp.eq.s32.totalorder %s32, 1
      %p113 = por %p111, %p112
      %p114 = scmp.ne.s32.totalorder %s105, %s106
      %p115 = scmp.eq.s32.totalorder %s32, 0
      %p116 = por %p114, %p115
      %p117 = scmp.ne.s32.totalorder %s105, %s106
      %p118 = scmp.eq.s32.totalorder %s33, 1
      %p119 = por %p117, %p118
      %p121 = scmp.ne.s32.totalorder %s106, %s120
      %p122 = scmp.eq.s32.totalorder %s33, 0
      %p123 = por %p121, %p122
      %s125 = sadd.s32 %s124, 1
      %p128 = scmp.eq.s32.totalorder %s27, 1
      %p129 = scmp.ne.s32.totalorder %s124, %s126
      %p130 = scmp.eq.s32.totalorder %s27, 0
      %p131 = por %p129, %p130
      %p132 = scmp.ne.s32.totalorder %s124, %s126
      %p133 = scmp.eq.s32.totalorder %s32, 1
      %p134 = por %p132, %p133
      %p135 = scmp.ne.s32.totalorder %s126, %s127
      %p136 = scmp.eq.s32.totalorder %s32, 0
      %p137 = por %p135, %p136
      %p138 = scmp.ne.s32.totalorder %s126, %s127
      %p139 = scmp.eq.s32.totalorder %s33, 1
      %p140 = por %p138, %p139
      %p142 = scmp.ne.s32.totalorder %s127, %s141
      %p143 = scmp.eq.s32.totalorder %s33, 0
      %p144 = por %p142, %p143
      %s146 = sadd.s32 %s145, 1
      %p149 = scmp.eq.s32.totalorder %s27, 1
      %p150 = scmp.ne.s32.totalorder %s145, %s147
      %p151 = scmp.eq.s32.totalorder %s27, 0
      %p152 = por %p150, %p151
      %p153 = scmp.ne.s32.totalorder %s145, %s147
      %p154 = scmp.eq.s32.totalorder %s32, 1
      %p155 = por %p153, %p154
      %p156 = scmp.ne.s32.totalorder %s147, %s148
      %p157 = scmp.eq.s32.totalorder %s32, 0
      %p158 = por %p156, %p157
      %p159 = scmp.ne.s32.totalorder %s147, %s148
      %p160 = scmp.eq.s32.totalorder %s33, 1
      %p161 = por %p159, %p160
      %p163 = scmp.ne.s32.totalorder %s148, %s162
      %p164 = scmp.eq.s32.totalorder %s33, 0
      %p165 = por %p163, %p164
      %s167 = sadd.s32 %s166, 1
      %p170 = scmp.eq.s32.totalorder %s27, 1
      %p171 = scmp.ne.s32.totalorder %s166, %s168
      %p172 = scmp.eq.s32.totalorder %s27, 0
      %p173 = por %p171, %p172
      %p174 = scmp.ne.s32.totalorder %s166, %s168
      %p175 = scmp.eq.s32.totalorder %s32, 1
      %p176 = por %p174, %p175
      %p177 = scmp.ne.s32.totalorder %s168, %s169
      %p178 = scmp.eq.s32.totalorder %s32, 0
      %p179 = por %p177, %p178
      %p180 = scmp.ne.s32.totalorder %s168, %s169
      %p181 = scmp.eq.s32.totalorder %s33, 1
      %p182 = por %p180, %p181
      %p184 = scmp.ne.s32.totalorder %s169, %s183
      %p185 = scmp.eq.s32.totalorder %s33, 0
      %p186 = por %p184, %p185
      %s188 = sadd.s32 %s187, 1
      %p191 = scmp.eq.s32.totalorder %s27, 1
      %p192 = scmp.ne.s32.totalorder %s187, %s189
      %p193 = scmp.eq.s32.totalorder %s27, 0
      %p194 = por %p192, %p193
      %p195 = scmp.ne.s32.totalorder %s187, %s189
      %p196 = scmp.eq.s32.totalorder %s32, 1
      %p197 = por %p195, %p196
      %p198 = scmp.ne.s32.totalorder %s189, %s190
      %p199 = scmp.eq.s32.totalorder %s32, 0
      %p200 = por %p198, %p199
      %p201 = scmp.ne.s32.totalorder %s189, %s190
      %p202 = scmp.eq.s32.totalorder %s33, 1
      %p203 = por %p201, %p202
      %p205 = scmp.ne.s32.totalorder %s190, %s204
      %p206 = scmp.eq.s32.totalorder %s33, 0
      %p207 = por %p205, %p206
      %s209 = sadd.s32 %s208, 1
      %p212 = scmp.eq.s32.totalorder %s27, 1
      %p213 = scmp.ne.s32.totalorder %s208, %s210
      %p214 = scmp.eq.s32.totalorder %s27, 0
      %p215 = por %p213, %p214
      %p216 = scmp.ne.s32.totalorder %s208, %s210
      %p217 = scmp.eq.s32.totalorder %s32, 1
      %p218 = por %p216, %p217
      %p219 = scmp.ne.s32.totalorder %s210, %s211
      %p220 = scmp.eq.s32.totalorder %s32, 0
      %p221 = por %p219, %p220
      %p222 = scmp.ne.s32.totalorder %s210, %s211
      %p223 = scmp.eq.s32.totalorder %s33, 1
      %p224 = por %p222, %p223
      %p226 = scmp.ne.s32.totalorder %s211, %s225
      %p227 = scmp.eq.s32.totalorder %s33, 0
      %p228 = por %p226, %p227
      %s230 = sadd.s32 %s229, 1
      %p233 = scmp.eq.s32.totalorder %s27, 1
      %p234 = scmp.ne.s32.totalorder %s229, %s231
      %p235 = scmp.eq.s32.totalorder %s27, 0
      %p236 = por %p234, %p235
      %p237 = scmp.ne.s32.totalorder %s229, %s231
      %p238 = scmp.eq.s32.totalorder %s32, 1
      %p239 = por %p237, %p238
      %p240 = scmp.ne.s32.totalorder %s231, %s232
      %p241 = scmp.eq.s32.totalorder %s32, 0
      %p242 = por %p240, %p241
      %p243 = scmp.ne.s32.totalorder %s231, %s232
      %p244 = scmp.eq.s32.totalorder %s33, 1
      %p245 = por %p243, %p244
      %p247 = scmp.ne.s32.totalorder %s232, %s246
      %p248 = scmp.eq.s32.totalorder %s33, 0
      %p249 = por %p247, %p248
      %s251 = sadd.s32 %s250, 1
      %p254 = scmp.eq.s32.totalorder %s27, 1
      %p255 = scmp.ne.s32.totalorder %s250, %s252
      %p256 = scmp.eq.s32.totalorder %s27, 0
      %p257 = por %p255, %p256
      %p258 = scmp.ne.s32.totalorder %s250, %s252
      %p259 = scmp.eq.s32.totalorder %s32, 1
      %p260 = por %p258, %p259
      %p261 = scmp.ne.s32.totalorder %s252, %s253
      %p262 = scmp.eq.s32.totalorder %s32, 0
      %p263 = por %p261, %p262
      %p264 = scmp.ne.s32.totalorder %s252, %s253
      %p265 = scmp.eq.s32.totalorder %s33, 1
      %p266 = por %p264, %p265
      %p268 = scmp.ne.s32.totalorder %s253, %s267
      %p269 = scmp.eq.s32.totalorder %s33, 0
      %p270 = por %p268, %p269
      %s272 = sadd.s32 %s271, 1
      %p275 = scmp.eq.s32.totalorder %s27, 1
      %p276 = scmp.ne.s32.totalorder %s271, %s273
      %p277 = scmp.eq.s32.totalorder %s27, 0
      %p278 = por %p276, %p277
      %p279 = scmp.ne.s32.totalorder %s271, %s273
      %p280 = scmp.eq.s32.totalorder %s32, 1
      %p281 = por %p279, %p280
      %p282 = scmp.ne.s32.totalorder %s273, %s274
      %p283 = scmp.eq.s32.totalorder %s32, 0
      %p284 = por %p282, %p283
      %p285 = scmp.ne.s32.totalorder %s273, %s274
      %p286 = scmp.eq.s32.totalorder %s33, 1
      %p287 = por %p285, %p286
      %p289 = scmp.ne.s32.totalorder %s274, %s288
      %p290 = scmp.eq.s32.totalorder %s33, 0
      %p291 = por %p289, %p290
      %s293 = sadd.s32 %s292, 1
      %p296 = scmp.eq.s32.totalorder %s27, 1
      %p297 = scmp.ne.s32.totalorder %s292, %s294
      %p298 = scmp.eq.s32.totalorder %s27, 0
      %p299 = por %p297, %p298
      %p300 = scmp.ne.s32.totalorder %s292, %s294
      %p301 = scmp.eq.s32.totalorder %s32, 1
      %p302 = por %p300, %p301
      %p303 = scmp.ne.s32.totalorder %s294, %s295
      %p304 = scmp.eq.s32.totalorder %s32, 0
      %p305 = por %p303, %p304
      %p306 = scmp.ne.s32.totalorder %s294, %s295
      %p307 = scmp.eq.s32.totalorder %s33, 1
      %p308 = por %p306, %p307
      %p310 = scmp.ne.s32.totalorder %s295, %s309
      %p311 = scmp.eq.s32.totalorder %s33, 0
      %p312 = por %p310, %p311
      %s314 = sadd.s32 %s313, 1
      %p317 = scmp.eq.s32.totalorder %s27, 1
      %p318 = scmp.ne.s32.totalorder %s313, %s315
      %p319 = scmp.eq.s32.totalorder %s27, 0
      %p320 = por %p318, %p319
      %p321 = scmp.ne.s32.totalorder %s313, %s315
      %p322 = scmp.eq.s32.totalorder %s32, 1
      %p323 = por %p321, %p322
      %p324 = scmp.ne.s32.totalorder %s315, %s316
      %p325 = scmp.eq.s32.totalorder %s32, 0
      %p326 = por %p324, %p325
      %p327 = scmp.ne.s32.totalorder %s315, %s316
      %p328 = scmp.eq.s32.totalorder %s33, 1
      %p329 = por %p327, %p328
      %p331 = scmp.ne.s32.totalorder %s316, %s330
      %p332 = scmp.eq.s32.totalorder %s33, 0
      %p333 = por %p331, %p332
      %s335 = sadd.s32 %s334, 1
      %p338 = scmp.eq.s32.totalorder %s27, 1
      %p339 = scmp.ne.s32.totalorder %s334, %s336
      %p340 = scmp.eq.s32.totalorder %s27, 0
      %p341 = por %p339, %p340
      %p342 = scmp.ne.s32.totalorder %s334, %s336
      %p343 = scmp.eq.s32.totalorder %s32, 1
      %p344 = por %p342, %p343
      %p345 = scmp.ne.s32.totalorder %s336, %s337
      %p346 = scmp.eq.s32.totalorder %s32, 0
      %p347 = por %p345, %p346
      %p348 = scmp.ne.s32.totalorder %s336, %s337
      %p349 = scmp.eq.s32.totalorder %s33, 1
      %p350 = por %p348, %p349
      %p352 = scmp.ne.s32.totalorder %s337, %s351
      %p353 = scmp.eq.s32.totalorder %s33, 0
      %p354 = por %p352, %p353
      %s356 = sadd.s32 %s355, 1
      %p359 = scmp.eq.s32.totalorder %s27, 1
      %p360 = scmp.ne.s32.totalorder %s355, %s357
      %p361 = scmp.eq.s32.totalorder %s27, 0
      %p362 = por %p360, %p361
      %p363 = scmp.ne.s32.totalorder %s355, %s357
      %p364 = scmp.eq.s32.totalorder %s32, 1
      %p365 = por %p363, %p364
      %p366 = scmp.ne.s32.totalorder %s357, %s358
      %p367 = scmp.eq.s32.totalorder %s32, 0
      %p368 = por %p366, %p367
      %p369 = scmp.ne.s32.totalorder %s357, %s358
      %p370 = scmp.eq.s32.totalorder %s33, 1
      %p371 = por %p369, %p370
      %p373 = scmp.ne.s32.totalorder %s358, %s372
      %p374 = scmp.eq.s32.totalorder %s33, 0
      %p375 = por %p373, %p374
      %s377 = sadd.s32 %s376, 1
      %p380 = scmp.eq.s32.totalorder %s27, 1
      %p381 = scmp.ne.s32.totalorder %s376, %s378
      %p382 = scmp.eq.s32.totalorder %s27, 0
      %p383 = por %p381, %p382
      %p384 = scmp.ne.s32.totalorder %s376, %s378
      %p385 = scmp.eq.s32.totalorder %s32, 1
      %p386 = por %p384, %p385
      %p387 = scmp.ne.s32.totalorder %s378, %s379
      %p388 = scmp.eq.s32.totalorder %s32, 0
      %p389 = por %p387, %p388
      %p390 = scmp.ne.s32.totalorder %s378, %s379
      %p391 = scmp.eq.s32.totalorder %s33, 1
      %p392 = por %p390, %p391
      %p394 = scmp.ne.s32.totalorder %s379, %s393
      %p395 = scmp.eq.s32.totalorder %s33, 0
      %p396 = por %p394, %p395
      %s398 = sadd.s32 %s397, 1
      %p401 = scmp.eq.s32.totalorder %s27, 1
      %p402 = scmp.ne.s32.totalorder %s397, %s399
      %p403 = scmp.eq.s32.totalorder %s27, 0
      %p404 = por %p402, %p403
      %p405 = scmp.ne.s32.totalorder %s397, %s399
      %p406 = scmp.eq.s32.totalorder %s32, 1
      %p407 = por %p405, %p406
      %p408 = scmp.ne.s32.totalorder %s399, %s400
      %p409 = scmp.eq.s32.totalorder %s32, 0
      %p410 = por %p408, %p409
      %p411 = scmp.ne.s32.totalorder %s399, %s400
      %p412 = scmp.eq.s32.totalorder %s33, 1
      %p413 = por %p411, %p412
      %p415 = scmp.ne.s32.totalorder %s400, %s414
      %p416 = scmp.eq.s32.totalorder %s33, 0
      %p417 = por %p415, %p416
      %s418 = ssub.s32 %s27, %s34
      %p419 = scmp.eq.s32.totalorder %s418, 0
      %s421 = sadd.s32 %s420, 1
      %s422 = scalar_select %p419, %s420, %s421
      %p425 = pneg %p419
      %p426 = scmp.eq.s32.totalorder %s27, 1
      %p427 = por %p425, %p426
      %p428 = scmp.ne.s32.totalorder %s420, %s423
      %p429 = scmp.eq.s32.totalorder %s27, 0
      %p430 = por %p428, %p429
      %p431 = scmp.ne.s32.totalorder %s420, %s423
      %p432 = scmp.eq.s32.totalorder %s32, 1
      %p433 = por %p431, %p432
      %p434 = scmp.ne.s32.totalorder %s423, %s424
      %p435 = scmp.eq.s32.totalorder %s32, 0
      %p436 = por %p434, %p435
      %p437 = scmp.ne.s32.totalorder %s423, %s424
      %p438 = scmp.eq.s32.totalorder %s33, 1
      %p439 = por %p437, %p438
      %p441 = scmp.ne.s32.totalorder %s424, %s440
      %p442 = scmp.eq.s32.totalorder %s33, 0
      %p443 = por %p441, %p442
      %p444 = scmp.le.s32.totalorder 1, %s27
      %p445 = scmp.lt.s32.totalorder %s27, 3
      %p446 = pnand %p444, %p445
      %p447 = pneg %p446
      // Predicated region
      $region9: #{encoder_forward.1} parent=5 // pred_check
        _
      $region10: #{encoder_forward.1} parent=5 // pred_check_branch
        %449 = sbr.rel (%p446) target = $region12
      $region11: #{encoder_forward.1} parent=5 // pred_region
        %s450 = ssub.s32 %s27, 1
        // Predicated region
        $region13: #{encoder_forward.1} parent=11 // pred_check
          %p451 = pneg %p74
        $region14: #{encoder_forward.1} parent=11 // pred_check_branch
          %453 = sbr.rel (%p451) target = $region16
        $region15: #{encoder_forward.1} parent=11 // pred_region
          _
        $region16: #{encoder_forward.1} parent=11 // pred_fallthru
          _
        // Predicated region
        $region17: #{encoder_forward.1} parent=11 // pred_check
          %p454 = pneg %p95
        $region18: #{encoder_forward.1} parent=11 // pred_check_branch
          %456 = sbr.rel (%p454) target = $region20
        $region19: #{encoder_forward.1} parent=11 // pred_region
          _
        $region20: #{encoder_forward.1} parent=11 // pred_fallthru
          _
        // Predicated region
        $region21: #{encoder_forward.1} parent=11 // pred_check
          %p457 = pneg %p116
        $region22: #{encoder_forward.1} parent=11 // pred_check_branch
          %459 = sbr.rel (%p457) target = $region24
        $region23: #{encoder_forward.1} parent=11 // pred_region
          _
        $region24: #{encoder_forward.1} parent=11 // pred_fallthru
          _
        // Predicated region
        $region25: #{encoder_forward.1} parent=11 // pred_check
          %p460 = pneg %p137
        $region26: #{encoder_forward.1} parent=11 // pred_check_branch
          %462 = sbr.rel (%p460) target = $region28
        $region27: #{encoder_forward.1} parent=11 // pred_region
          _
        $region28: #{encoder_forward.1} parent=11 // pred_fallthru
          _
        // Predicated region
        $region29: #{encoder_forward.1} parent=11 // pred_check
          %p463 = pneg %p158
        $region30: #{encoder_forward.1} parent=11 // pred_check_branch
          %465 = sbr.rel (%p463) target = $region32
        $region31: #{encoder_forward.1} parent=11 // pred_region
          _
        $region32: #{encoder_forward.1} parent=11 // pred_fallthru
          _
        // Predicated region
        $region33: #{encoder_forward.1} parent=11 // pred_check
          %p466 = pneg %p179
        $region34: #{encoder_forward.1} parent=11 // pred_check_branch
          %468 = sbr.rel (%p466) target = $region36
        $region35: #{encoder_forward.1} parent=11 // pred_region
          _
        $region36: #{encoder_forward.1} parent=11 // pred_fallthru
          _
        // Predicated region
        $region37: #{encoder_forward.1} parent=11 // pred_check
          %p469 = pneg %p200
        $region38: #{encoder_forward.1} parent=11 // pred_check_branch
          %471 = sbr.rel (%p469) target = $region40
        $region39: #{encoder_forward.1} parent=11 // pred_region
          _
        $region40: #{encoder_forward.1} parent=11 // pred_fallthru
          _
        // Predicated region
        $region41: #{encoder_forward.1} parent=11 // pred_check
          %p472 = pneg %p221
        $region42: #{encoder_forward.1} parent=11 // pred_check_branch
          %474 = sbr.rel (%p472) target = $region44
        $region43: #{encoder_forward.1} parent=11 // pred_region
          _
        $region44: #{encoder_forward.1} parent=11 // pred_fallthru
          _
        // Predicated region
        $region45: #{encoder_forward.1} parent=11 // pred_check
          %p475 = pneg %p242
        $region46: #{encoder_forward.1} parent=11 // pred_check_branch
          %477 = sbr.rel (%p475) target = $region48
        $region47: #{encoder_forward.1} parent=11 // pred_region
          _
        $region48: #{encoder_forward.1} parent=11 // pred_fallthru
          _
        // Predicated region
        $region49: #{encoder_forward.1} parent=11 // pred_check
          %p478 = pneg %p263
        $region50: #{encoder_forward.1} parent=11 // pred_check_branch
          %480 = sbr.rel (%p478) target = $region52
        $region51: #{encoder_forward.1} parent=11 // pred_region
          _
        $region52: #{encoder_forward.1} parent=11 // pred_fallthru
          _
        // Predicated region
        $region53: #{encoder_forward.1} parent=11 // pred_check
          %p481 = pneg %p284
        $region54: #{encoder_forward.1} parent=11 // pred_check_branch
          %483 = sbr.rel (%p481) target = $region56
        $region55: #{encoder_forward.1} parent=11 // pred_region
          _
        $region56: #{encoder_forward.1} parent=11 // pred_fallthru
          _
        // Predicated region
        $region57: #{encoder_forward.1} parent=11 // pred_check
          %p484 = pneg %p305
        $region58: #{encoder_forward.1} parent=11 // pred_check_branch
          %486 = sbr.rel (%p484) target = $region60
        $region59: #{encoder_forward.1} parent=11 // pred_region
          _
        $region60: #{encoder_forward.1} parent=11 // pred_fallthru
          _
        // Predicated region
        $region61: #{encoder_forward.1} parent=11 // pred_check
          %p487 = pneg %p326
        $region62: #{encoder_forward.1} parent=11 // pred_check_branch
          %489 = sbr.rel (%p487) target = $region64
        $region63: #{encoder_forward.1} parent=11 // pred_region
          _
        $region64: #{encoder_forward.1} parent=11 // pred_fallthru
          _
        // Predicated region
        $region65: #{encoder_forward.1} parent=11 // pred_check
          %p490 = pneg %p347
        $region66: #{encoder_forward.1} parent=11 // pred_check_branch
          %492 = sbr.rel (%p490) target = $region68
        $region67: #{encoder_forward.1} parent=11 // pred_region
          _
        $region68: #{encoder_forward.1} parent=11 // pred_fallthru
          _
        // Predicated region
        $region69: #{encoder_forward.1} parent=11 // pred_check
          %p493 = pneg %p368
        $region70: #{encoder_forward.1} parent=11 // pred_check_branch
          %495 = sbr.rel (%p493) target = $region72
        $region71: #{encoder_forward.1} parent=11 // pred_region
          _
        $region72: #{encoder_forward.1} parent=11 // pred_fallthru
          _
        // Predicated region
        $region73: #{encoder_forward.1} parent=11 // pred_check
          %p496 = pneg %p389
        $region74: #{encoder_forward.1} parent=11 // pred_check_branch
          %498 = sbr.rel (%p496) target = $region76
        $region75: #{encoder_forward.1} parent=11 // pred_region
          _
        $region76: #{encoder_forward.1} parent=11 // pred_fallthru
          _
        // Predicated region
        $region77: #{encoder_forward.1} parent=11 // pred_check
          %p499 = pneg %p410
        $region78: #{encoder_forward.1} parent=11 // pred_check_branch
          %501 = sbr.rel (%p499) target = $region80
        $region79: #{encoder_forward.1} parent=11 // pred_region
          _
        $region80: #{encoder_forward.1} parent=11 // pred_fallthru
          _
      $region12: #{encoder_forward.1} parent=5 // pred_fallthru
        _
      %p502 = scmp.lt.s32.totalorder %s27, 2
      // Predicated region
      $region81: #{encoder_forward.1} parent=5 // pred_check
        %p503 = pneg %p502
      $region82: #{encoder_forward.1} parent=5 // pred_check_branch
        %505 = sbr.rel (%p503) target = $region84
      $region83: #{encoder_forward.1} parent=5 // pred_region
        // Predicated region
        $region85: #{encoder_forward.1} parent=83 // pred_check
          %p506 = pneg %p47
        $region86: #{encoder_forward.1} parent=83 // pred_check_branch
          %508 = sbr.rel (%p506) target = $region88
        $region87: #{encoder_forward.1} parent=83 // pred_region
          %p509 = scmp.lt.s32.totalorder %s27, 1
          %s510 = scalar_select %p509, %s27, 1
          %s511 = smul.addr %s510, 8
          %s512 = scalar_lea.vmem %s0, %s511
        $region88: #{encoder_forward.1} parent=83 // pred_fallthru
          _
      $region84: #{encoder_forward.1} parent=5 // pred_fallthru
        _
      %p513 = scmp.le.s32.totalorder 1, %s27
      %p514 = scmp.lt.s32.totalorder %s27, 3
      %p515 = pnand %p513, %p514
      %p516 = pneg %p515
      // Predicated region
      $region89: #{encoder_forward.1} parent=5 // pred_check
        _
      $region90: #{encoder_forward.1} parent=5 // pred_check_branch
        %518 = sbr.rel (%p515) target = $region92
      $region91: #{encoder_forward.1} parent=5 // pred_region
        %s519 = ssub.s32 %s27, 1
        %p520 = scmp.lt.s32.totalorder %s32, 1
        %s521 = scalar_select %p520, %s32, 1
        %s522 = smul.addr %s521, 8
        %s523 = scalar_lea.vmem %s0, %s522
        %p524 = pneg %p53
        %p525 = pneg %p50
        %p526 = pneg %p74
        %p527 = pneg %p71
        %p528 = pneg %p95
        %p529 = pneg %p92
        %p530 = pneg %p116
        %p531 = pneg %p113
        %p532 = pneg %p137
        %p533 = pneg %p134
        %p534 = pneg %p158
        %p535 = pneg %p155
        %p536 = pneg %p179
        %p537 = pneg %p176
        %p538 = pneg %p200
        %p539 = pneg %p197
        %p540 = pneg %p221
        %p541 = pneg %p218
        %p542 = pneg %p242
        %p543 = pneg %p239
        %p544 = pneg %p263
        %p545 = pneg %p260
        %p546 = pneg %p284
        %p547 = pneg %p281
        %p548 = pneg %p305
        %p549 = pneg %p302
        %p550 = pneg %p326
        %p551 = pneg %p323
        %p552 = pneg %p347
        %p553 = pneg %p344
        %p554 = pneg %p368
        %p555 = pneg %p365
        %p556 = pneg %p389
        %p557 = pneg %p386
        %p558 = pneg %p410
        %p559 = pneg %p407
        %p560 = pneg %p436
        %p561 = pneg %p433
        %s562 = sand.u32 %s423, 1
        %s563 = scalar_lea.sflag [#allocation3], %s562
        %s564 = sand.u32 %s423, 1
        %s565 = smul.addr %s564, 8
        %s566 = scalar_lea.vmem [#allocation2], %s565
        %p567 = scmp.lt.s32.totalorder %s32, 1
        %s568 = scalar_select %p567, %s32, 1
        %s569 = smul.addr %s568, 8
        %s570 = scalar_lea.vmem %s0, %s569
        %v572 = vld [vmem:[%s570] sm:$0xff]
        %v573 = vld [vmem:[%s1] sm:$0xff]
        %v574 = vadd.f32 %v572, %v573
        %v575 = vpack.c.bf16 %v574, %v574
        %v576 = vld [vmem:[%s8] sm:$0xf]
        %v577 = vld [vmem:[%s8 + $0x4] sm:$0xf]
        %v578 = vld [vmem:[%s8 + $0x8] sm:$0xf]
        %v579 = vld [vmem:[%s8 + $0xc] sm:$0xf]
        %v580 = vld [vmem:[%s2] sm:$0xf]
        %v581 = vld [vmem:[%s2 + $0x4] sm:$0xf]
        %v582 = vld [vmem:[%s2 + $0x8] sm:$0xf]
        %v583 = vld [vmem:[%s2 + $0xc] sm:$0xf]
        %v584 = vld [vmem:[%s3] sm:$0x1]
        %v586 = vperm.slane %v584, 0
        %v592 = vunpack.c.l.b16 %v580
        %v593 = vunpack.c.l.b16 %v581
        %v594 = vunpack.c.l.b16 %v582
        %v595 = vunpack.c.l.b16 %v583
        %v596 = vpack.c.b16 %v593, %v592
        %v597 = vpack.c.b16 %v595, %v594
        %vm600 = vcmask 261120
        %v602 = vsel %vm600, %v575, 0
        %604 = vmatpush.bf16.msra.mxu0 0
        %605 = vmatpush.bf16.msra.mxu0 0
        %606 = vmatpush.bf16.msra.mxu0 0
        %607 = vmatpush.bf16.msra.mxu0 0
        %608 = vmatpush.bf16.msra.mxu0 0
        %609 = vmatpush.bf16.msra.mxu0 0
        %610 = vmatpush.bf16.msra.mxu0 %v597
        %611 = vmatpush.bf16.msra.mxu0 %v596
        %612 = vmatmul.bf16.gmra.mxu0 %v602
        %v613 = vpop.f32.mrf.mxu0
        %v614 = vadd.f32 %v586, %v613
        %v615 = vpop.f32.mrf.mxu0
        %616 = vdwg.mxu0
        %v617 = vld [vmem:[%s4] sm:$0xf]
        %v618 = vld [vmem:[%s4 + $0x4] sm:$0xf]
        %v619 = vld [vmem:[%s4 + $0x8] sm:$0xf]
        %v620 = vld [vmem:[%s4 + $0xc] sm:$0xf]
        %v621 = vld [vmem:[%s5] sm:$0x1]
        %v623 = vperm.slane %v621, 0
        %v629 = vunpack.c.l.b16 %v617
        %v630 = vunpack.c.l.b16 %v618
        %v631 = vunpack.c.l.b16 %v619
        %v632 = vunpack.c.l.b16 %v620
        %v633 = vpack.c.b16 %v630, %v629
        %v634 = vpack.c.b16 %v632, %v631
        %637 = vmatpush.bf16.msra.mxu0 0
        %638 = vmatpush.bf16.msra.mxu0 0
        %639 = vmatpush.bf16.msra.mxu0 0
        %640 = vmatpush.bf16.msra.mxu0 0
        %641 = vmatpush.bf16.msra.mxu0 0
        %642 = vmatpush.bf16.msra.mxu0 0
        %643 = vmatpush.bf16.msra.mxu0 %v634
        %644 = vmatpush.bf16.msra.mxu0 %v633
        %645 = vmatmul.bf16.gmra.mxu0 %v602
        %v646 = vpop.f32.mrf.mxu0
        %v647 = vadd.f32 %v623, %v646
        %v648 = vpop.f32.mrf.mxu0
        %649 = vdwg.mxu0
        %v650 = vld [vmem:[%s6] sm:$0xf]
        %v651 = vld [vmem:[%s6 + $0x4] sm:$0xf]
        %v652 = vld [vmem:[%s6 + $0x8] sm:$0xf]
        %v653 = vld [vmem:[%s6 + $0xc] sm:$0xf]
        %v654 = vld [vmem:[%s7] sm:$0x1]
        %v656 = vperm.slane %v654, 0
        %v662 = vunpack.c.l.b16 %v650
        %v663 = vunpack.c.l.b16 %v651
        %v664 = vunpack.c.l.b16 %v652
        %v665 = vunpack.c.l.b16 %v653
        %v666 = vpack.c.b16 %v663, %v662
        %v667 = vpack.c.b16 %v665, %v664
        %670 = vmatpush.bf16.msra.mxu0 0
        %671 = vmatpush.bf16.msra.mxu0 0
        %672 = vmatpush.bf16.msra.mxu0 0
        %673 = vmatpush.bf16.msra.mxu0 0
        %674 = vmatpush.bf16.msra.mxu0 0
        %675 = vmatpush.bf16.msra.mxu0 0
        %676 = vmatpush.bf16.msra.mxu0 %v667
        %677 = vmatpush.bf16.msra.mxu0 %v666
        %678 = vmatmul.bf16.gmra.mxu0 %v602
        %v679 = vpop.f32.mrf.mxu0
        %v680 = vadd.f32 %v656, %v679
        %v681 = vpop.f32.mrf.mxu0
        %682 = vdwg.mxu0
        %v683 = vpack.c.bf16 %v614, %v614
        %684 = vxpose.xlu0.b32.start [1/16] %v647, 128
        %685 = vxpose.xlu0.b32.cont [2/16] 0.0, 128
        %686 = vxpose.xlu0.b32.cont [3/16] 0.0, 128
        %687 = vxpose.xlu0.b32.cont [4/16] 0.0, 128
        %688 = vxpose.xlu0.b32.cont [5/16] 0.0, 128
        %689 = vxpose.xlu0.b32.cont [6/16] 0.0, 128
        %690 = vxpose.xlu0.b32.cont [7/16] 0.0, 128
        %691 = vxpose.xlu0.b32.cont [8/16] 0.0, 128
        %692 = vxpose.xlu0.b32.cont [9/16] 0.0, 128
        %693 = vxpose.xlu0.b32.cont [10/16] 0.0, 128
        %694 = vxpose.xlu0.b32.cont [11/16] 0.0, 128
        %695 = vxpose.xlu0.b32.cont [12/16] 0.0, 128
        %696 = vxpose.xlu0.b32.cont [13/16] 0.0, 128
        %697 = vxpose.xlu0.b32.cont [14/16] 0.0, 128
        %698 = vxpose.xlu0.b32.cont [15/16] 0.0, 128
        %699 = vxpose.xlu0.b32.end [16/16] 0.0, 128
        %v700 = vpop.trf.xlu0
        %v701 = vpop.trf.xlu0
        %v702 = vpop.trf.xlu0
        %v703 = vpop.trf.xlu0
        %v704 = vpop.trf.xlu0
        %v705 = vpop.trf.xlu0
        %v706 = vpop.trf.xlu0
        %v707 = vpop.trf.xlu0
        %v708 = vpop.trf.xlu0
        %v709 = vpop.trf.xlu0
        %v710 = vpop.trf.xlu0
        %v711 = vpop.trf.xlu0
        %v712 = vpop.trf.xlu0
        %v713 = vpop.trf.xlu0
        %v714 = vpop.trf.xlu0
        %v715 = vpop.trf.xlu0
        %v716 = vpack.c.bf16 %v700, %v700
        %v717 = vpack.c.bf16 %v680, %v680
        %vm718 = vcmask 64512
        %v720 = vsel %vm718, %v683, 0
        %vm722 = vcmask 1043456
        %v724 = vsel %vm722, %v716, 0
        %726 = vmatpush.bf16.msra.mxu0 0
        %727 = vmatpush.bf16.msra.mxu0 0
        %728 = vmatpush.bf16.msra.mxu0 0
        %729 = vmatpush.bf16.msra.mxu0 0
        %730 = vmatpush.bf16.msra.mxu0 0
        %731 = vmatpush.bf16.msra.mxu0 0
        %732 = vmatpush.bf16.msra.mxu0 0
        %733 = vmatpush.bf16.msra.mxu0 %v724
        %734 = vmatmul.bf16.gmra.mxu0 %v720
        %v735 = vpop.f32.mrf.mxu0
        %v736 = vadd.f32 0.0, %v735
        %v737 = vpop.f32.mrf.mxu0
        %738 = vdwg.mxu0
        %v739 = vmul.f32 %v736, 0.35355338
        %v740 = vsel %vm718, %v739, -inf
        %741 = vmax.xlane.f32.xlu0 %v740
        %v742 = vpop.xlane.xlu0 %741
        %v743 = vsub.f32 %v739, %v742
        %v744 = vmul.f32 %v743, 1.442695
        %v745 = vpow.pop %v744
        %v746 = vsel %vm718, %v745, 0.0
        %747 = vadd.xlane.f32.xlu0 %v746
        %v748 = vpop.xlane.xlu0 %747
        %v749 = vrcp.pop %v748
        %v750 = vmul.f32 %v748, %v749
        %v751 = vsub.f32 1.0, %v750
        %v752 = vmul.f32 %v749, %v751
        %v753 = vadd.f32 %v749, %v752
        %vm754 = vweird.f32 %v748
        %vm755 = vweird.f32 %v749
        %vm756 = vmor %vm754, %vm755
        %v757 = vsel %vm756, %v749, %v753
        %v758 = vand.u32 2147483647, %v748
        %vm759 = vcmp.eq.f32.partialorder %v758, 8.507059e+37
        %v760 = vand.u32 %v748, 2147483648
        %v761 = vor.u32 1.1754944e-38, %v760
        %v762 = vsel %vm759, %v761, %v757
        %v763 = vmul.f32 %v745, %v762
        %v764 = vpack.c.bf16 %v763, %v763
        %v766 = vsel %vm718, %v764, 0
        %v769 = vsel %vm722, %v717, 0
        %771 = vmatpush.bf16.msra.mxu0 0
        %772 = vmatpush.bf16.msra.mxu0 0
        %773 = vmatpush.bf16.msra.mxu0 0
        %774 = vmatpush.bf16.msra.mxu0 0
        %775 = vmatpush.bf16.msra.mxu0 0
        %776 = vmatpush.bf16.msra.mxu0 0
        %777 = vmatpush.bf16.msra.mxu0 0
        %778 = vmatpush.bf16.msra.mxu0 %v769
        %779 = vmatmul.bf16.gmra.mxu0 %v766
        %v780 = vpop.f32.mrf.mxu0
        %v781 = vadd.f32 0.0, %v780
        %v782 = vpop.f32.mrf.mxu0
        %783 = vdwg.mxu0
        %v784 = vpack.c.bf16 %v781, %v781
        %786 = vrot.lane.b32.xlu0 %v647, 120
        %v787 = vpop.permute.xlu0 %786
        %789 = vxpose.xlu0.b32.start [1/16] %v787, 128
        %790 = vxpose.xlu0.b32.cont [2/16] 0.0, 128
        %791 = vxpose.xlu0.b32.cont [3/16] 0.0, 128
        %792 = vxpose.xlu0.b32.cont [4/16] 0.0, 128
        %793 = vxpose.xlu0.b32.cont [5/16] 0.0, 128
        %794 = vxpose.xlu0.b32.cont [6/16] 0.0, 128
        %795 = vxpose.xlu0.b32.cont [7/16] 0.0, 128
        %796 = vxpose.xlu0.b32.cont [8/16] 0.0, 128
        %797 = vxpose.xlu0.b32.cont [9/16] 0.0, 128
        %798 = vxpose.xlu0.b32.cont [10/16] 0.0, 128
        %799 = vxpose.xlu0.b32.cont [11/16] 0.0, 128
        %800 = vxpose.xlu0.b32.cont [12/16] 0.0, 128
        %801 = vxpose.xlu0.b32.cont [13/16] 0.0, 128
        %802 = vxpose.xlu0.b32.cont [14/16] 0.0, 128
        %803 = vxpose.xlu0.b32.cont [15/16] 0.0, 128
        %804 = vxpose.xlu0.b32.end [16/16] 0.0, 128
        %v805 = vpop.trf.xlu0
        %v806 = vpop.trf.xlu0
        %v807 = vpop.trf.xlu0
        %v808 = vpop.trf.xlu0
        %v809 = vpop.trf.xlu0
        %v810 = vpop.trf.xlu0
        %v811 = vpop.trf.xlu0
        %v812 = vpop.trf.xlu0
        %v813 = vpop.trf.xlu0
        %v814 = vpop.trf.xlu0
        %v815 = vpop.trf.xlu0
        %v816 = vpop.trf.xlu0
        %v817 = vpop.trf.xlu0
        %v818 = vpop.trf.xlu0
        %v819 = vpop.trf.xlu0
        %v820 = vpop.trf.xlu0
        %v821 = vpack.c.bf16 %v805, %v805
        %823 = vrot.lane.b32.xlu0 %v683, 120
        %v824 = vpop.permute.xlu0 %823
        %v826 = vsel %vm718, %v824, 0
        %v829 = vsel %vm722, %v821, 0
        %831 = vmatpush.bf16.msra.mxu0 0
        %832 = vmatpush.bf16.msra.mxu0 0
        %833 = vmatpush.bf16.msra.mxu0 0
        %834 = vmatpush.bf16.msra.mxu0 0
        %835 = vmatpush.bf16.msra.mxu0 0
        %836 = vmatpush.bf16.msra.mxu0 0
        %837 = vmatpush.bf16.msra.mxu0 0
        %838 = vmatpush.bf16.msra.mxu0 %v829
        %839 = vmatmul.bf16.gmra.mxu0 %v826
        %v840 = vpop.f32.mrf.mxu0
        %v841 = vadd.f32 0.0, %v840
        %v842 = vpop.f32.mrf.mxu0
        %843 = vdwg.mxu0
        %v844 = vmul.f32 %v841, 0.35355338
        %v845 = vsel %vm718, %v844, -inf
        %846 = vmax.xlane.f32.xlu0 %v845
        %v847 = vpop.xlane.xlu0 %846
        %v848 = vsub.f32 %v844, %v847
        %v849 = vmul.f32 %v848, 1.442695
        %v850 = vpow.pop %v849
        %v851 = vsel %vm718, %v850, 0.0
        %852 = vadd.xlane.f32.xlu0 %v851
        %v853 = vpop.xlane.xlu0 %852
        %v854 = vrcp.pop %v853
        %v855 = vmul.f32 %v853, %v854
        %v856 = vsub.f32 1.0, %v855
        %v857 = vmul.f32 %v854, %v856
        %v858 = vadd.f32 %v854, %v857
        %vm859 = vweird.f32 %v853
        %vm860 = vweird.f32 %v854
        %vm861 = vmor %vm859, %vm860
        %v862 = vsel %vm861, %v854, %v858
        %v863 = vand.u32 2147483647, %v853
        %vm864 = vcmp.eq.f32.partialorder %v863, 8.507059e+37
        %v865 = vand.u32 %v853, 2147483648
        %v866 = vor.u32 1.1754944e-38, %v865
        %v867 = vsel %vm864, %v866, %v862
        %v868 = vmul.f32 %v850, %v867
        %v869 = vpack.c.bf16 %v868, %v868
        %871 = vrot.lane.b32.xlu0 %v717, 120
        %v872 = vpop.permute.xlu0 %871
        %v874 = vsel %vm718, %v869, 0
        %v877 = vsel %vm722, %v872, 0
        %879 = vmatpush.bf16.msra.mxu0 0
        %880 = vmatpush.bf16.msra.mxu0 0
        %881 = vmatpush.bf16.msra.mxu0 0
        %882 = vmatpush.bf16.msra.mxu0 0
        %883 = vmatpush.bf16.msra.mxu0 0
        %884 = vmatpush.bf16.msra.mxu0 0
        %885 = vmatpush.bf16.msra.mxu0 0
        %886 = vmatpush.bf16.msra.mxu0 %v877
        %887 = vmatmul.bf16.gmra.mxu0 %v874
        %v888 = vpop.f32.mrf.mxu0
        %v889 = vadd.f32 0.0, %v888
        %v890 = vpop.f32.mrf.mxu0
        %891 = vdwg.mxu0
        %v892 = vpack.c.bf16 %v889, %v889
        %v894 = vsel %vm718, %v892, 0
        %v897 = vsel %vm722, %v577, 0
        %899 = vmatpush.bf16.msra.mxu0 0
        %900 = vmatpush.bf16.msra.mxu0 0
        %901 = vmatpush.bf16.msra.mxu0 0
        %902 = vmatpush.bf16.msra.mxu0 0
        %903 = vmatpush.bf16.msra.mxu0 0
        %904 = vmatpush.bf16.msra.mxu0 0
        %905 = vmatpush.bf16.msra.mxu0 0
        %906 = vmatpush.bf16.msra.mxu0 %v897
        %907 = vmatmul.bf16.gmra.mxu0 %v894
        %v908 = vpop.f32.mrf.mxu0
        %v909 = vadd.f32 0.0, %v908
        %v910 = vpop.f32.mrf.mxu0
        %911 = vdwg.mxu0
        %v913 = vsel %vm718, %v784, 0
        %v916 = vsel %vm722, %v576, 0
        %918 = vmatpush.bf16.msra.mxu0 0
        %919 = vmatpush.bf16.msra.mxu0 0
        %920 = vmatpush.bf16.msra.mxu0 0
        %921 = vmatpush.bf16.msra.mxu0 0
        %922 = vmatpush.bf16.msra.mxu0 0
        %923 = vmatpush.bf16.msra.mxu0 0
        %924 = vmatpush.bf16.msra.mxu0 0
        %925 = vmatpush.bf16.msra.mxu0 %v916
        %926 = vmatmul.bf16.gmra.mxu0 %v913
        %v927 = vpop.f32.mrf.mxu0
        %v928 = vadd.f32 %v909, %v927
        %v929 = vpop.f32.mrf.mxu0
        %930 = vdwg.mxu0
        %931 = vrot.lane.b32.xlu0 %v647, 112
        %v932 = vpop.permute.xlu0 %931
        %934 = vxpose.xlu0.b32.start [1/16] %v932, 128
        %935 = vxpose.xlu0.b32.cont [2/16] 0.0, 128
        %936 = vxpose.xlu0.b32.cont [3/16] 0.0, 128
        %937 = vxpose.xlu0.b32.cont [4/16] 0.0, 128
        %938 = vxpose.xlu0.b32.cont [5/16] 0.0, 128
        %939 = vxpose.xlu0.b32.cont [6/16] 0.0, 128
        %940 = vxpose.xlu0.b32.cont [7/16] 0.0, 128
        %941 = vxpose.xlu0.b32.cont [8/16] 0.0, 128
        %942 = vxpose.xlu0.b32.cont [9/16] 0.0, 128
        %943 = vxpose.xlu0.b32.cont [10/16] 0.0, 128
        %944 = vxpose.xlu0.b32.cont [11/16] 0.0, 128
        %945 = vxpose.xlu0.b32.cont [12/16] 0.0, 128
        %946 = vxpose.xlu0.b32.cont [13/16] 0.0, 128
        %947 = vxpose.xlu0.b32.cont [14/16] 0.0, 128
        %948 = vxpose.xlu0.b32.cont [15/16] 0.0, 128
        %949 = vxpose.xlu0.b32.end [16/16] 0.0, 128
        %v950 = vpop.trf.xlu0
        %v951 = vpop.trf.xlu0
        %v952 = vpop.trf.xlu0
        %v953 = vpop.trf.xlu0
        %v954 = vpop.trf.xlu0
        %v955 = vpop.trf.xlu0
        %v956 = vpop.trf.xlu0
        %v957 = vpop.trf.xlu0
        %v958 = vpop.trf.xlu0
        %v959 = vpop.trf.xlu0
        %v960 = vpop.trf.xlu0
        %v961 = vpop.trf.xlu0
        %v962 = vpop.trf.xlu0
        %v963 = vpop.trf.xlu0
        %v964 = vpop.trf.xlu0
        %v965 = vpop.trf.xlu0
        %v966 = vpack.c.bf16 %v950, %v950
        %967 = vrot.lane.b32.xlu0 %v683, 112
        %v968 = vpop.permute.xlu0 %967
        %v970 = vsel %vm718, %v968, 0
        %v973 = vsel %vm722, %v966, 0
        %975 = vmatpush.bf16.msra.mxu0 0
        %976 = vmatpush.bf16.msra.mxu0 0
        %977 = vmatpush.bf16.msra.mxu0 0
        %978 = vmatpush.bf16.msra.mxu0 0
        %979 = vmatpush.bf16.msra.mxu0 0
        %980 = vmatpush.bf16.msra.mxu0 0
        %981 = vmatpush.bf16.msra.mxu0 0
        %982 = vmatpush.bf16.msra.mxu0 %v973
        %983 = vmatmul.bf16.gmra.mxu0 %v970
        %v984 = vpop.f32.mrf.mxu0
        %v985 = vadd.f32 0.0, %v984
        %v986 = vpop.f32.mrf.mxu0
        %987 = vdwg.mxu0
        %v988 = vmul.f32 %v985, 0.35355338
        %v989 = vsel %vm718, %v988, -inf
        %990 = vmax.xlane.f32.xlu0 %v989
        %v991 = vpop.xlane.xlu0 %990
        %v992 = vsub.f32 %v988, %v991
        %v993 = vmul.f32 %v992, 1.442695
        %v994 = vpow.pop %v993
        %v995 = vsel %vm718, %v994, 0.0
        %996 = vadd.xlane.f32.xlu0 %v995
        %v997 = vpop.xlane.xlu0 %996
        %v998 = vrcp.pop %v997
        %v999 = vmul.f32 %v997, %v998
        %v1000 = vsub.f32 1.0, %v999
        %v1001 = vmul.f32 %v998, %v1000
        %v1002 = vadd.f32 %v998, %v1001
        %vm1003 = vweird.f32 %v997
        %vm1004 = vweird.f32 %v998
        %vm1005 = vmor %vm1003, %vm1004
        %v1006 = vsel %vm1005, %v998, %v1002
        %v1007 = vand.u32 2147483647, %v997
        %vm1008 = vcmp.eq.f32.partialorder %v1007, 8.507059e+37
        %v1009 = vand.u32 %v997, 2147483648
        %v1010 = vor.u32 1.1754944e-38, %v1009
        %v1011 = vsel %vm1008, %v1010, %v1006
        %v1012 = vmul.f32 %v994, %v1011
        %v1013 = vpack.c.bf16 %v1012, %v1012
        %1014 = vrot.lane.b32.xlu0 %v717, 112
        %v1015 = vpop.permute.xlu0 %1014
        %v1017 = vsel %vm718, %v1013, 0
        %v1020 = vsel %vm722, %v1015, 0
        %1022 = vmatpush.bf16.msra.mxu0 0
        %1023 = vmatpush.bf16.msra.mxu0 0
        %1024 = vmatpush.bf16.msra.mxu0 0
        %1025 = vmatpush.bf16.msra.mxu0 0
        %1026 = vmatpush.bf16.msra.mxu0 0
        %1027 = vmatpush.bf16.msra.mxu0 0
        %1028 = vmatpush.bf16.msra.mxu0 0
        %1029 = vmatpush.bf16.msra.mxu0 %v1020
        %1030 = vmatmul.bf16.gmra.mxu0 %v1017
        %v1031 = vpop.f32.mrf.mxu0
        %v1032 = vadd.f32 0.0, %v1031
        %v1033 = vpop.f32.mrf.mxu0
        %1034 = vdwg.mxu0
        %v1035 = vpack.c.bf16 %v1032, %v1032
        %v1037 = vsel %vm718, %v1035, 0
        %v1040 = vsel %vm722, %v578, 0
        %1042 = vmatpush.bf16.msra.mxu0 0
        %1043 = vmatpush.bf16.msra.mxu0 0
        %1044 = vmatpush.bf16.msra.mxu0 0
        %1045 = vmatpush.bf16.msra.mxu0 0
        %1046 = vmatpush.bf16.msra.mxu0 0
        %1047 = vmatpush.bf16.msra.mxu0 0
        %1048 = vmatpush.bf16.msra.mxu0 0
        %1049 = vmatpush.bf16.msra.mxu0 %v1040
        %1050 = vmatmul.bf16.gmra.mxu0 %v1037
        %v1051 = vpop.f32.mrf.mxu0
        %v1052 = vadd.f32 0.0, %v1051
        %v1053 = vpop.f32.mrf.mxu0
        %1054 = vdwg.mxu0
        %v1055 = vadd.f32 %v928, %v1052
        %1056 = vrot.lane.b32.xlu0 %v647, 104
        %v1057 = vpop.permute.xlu0 %1056
        %1059 = vxpose.xlu0.b32.start [1/16] %v1057, 128
        %1060 = vxpose.xlu0.b32.cont [2/16] 0.0, 128
        %1061 = vxpose.xlu0.b32.cont [3/16] 0.0, 128
        %1062 = vxpose.xlu0.b32.cont [4/16] 0.0, 128
        %1063 = vxpose.xlu0.b32.cont [5/16] 0.0, 128
        %1064 = vxpose.xlu0.b32.cont [6/16] 0.0, 128
        %1065 = vxpose.xlu0.b32.cont [7/16] 0.0, 128
        %1066 = vxpose.xlu0.b32.cont [8/16] 0.0, 128
        %1067 = vxpose.xlu0.b32.cont [9/16] 0.0, 128
        %1068 = vxpose.xlu0.b32.cont [10/16] 0.0, 128
        %1069 = vxpose.xlu0.b32.cont [11/16] 0.0, 128
        %1070 = vxpose.xlu0.b32.cont [12/16] 0.0, 128
        %1071 = vxpose.xlu0.b32.cont [13/16] 0.0, 128
        %1072 = vxpose.xlu0.b32.cont [14/16] 0.0, 128
        %1073 = vxpose.xlu0.b32.cont [15/16] 0.0, 128
        %1074 = vxpose.xlu0.b32.end [16/16] 0.0, 128
        %v1075 = vpop.trf.xlu0
        %v1076 = vpop.trf.xlu0
        %v1077 = vpop.trf.xlu0
        %v1078 = vpop.trf.xlu0
        %v1079 = vpop.trf.xlu0
        %v1080 = vpop.trf.xlu0
        %v1081 = vpop.trf.xlu0
        %v1082 = vpop.trf.xlu0
        %v1083 = vpop.trf.xlu0
        %v1084 = vpop.trf.xlu0
        %v1085 = vpop.trf.xlu0
        %v1086 = vpop.trf.xlu0
        %v1087 = vpop.trf.xlu0
        %v1088 = vpop.trf.xlu0
        %v1089 = vpop.trf.xlu0
        %v1090 = vpop.trf.xlu0
        %v1091 = vpack.c.bf16 %v1075, %v1075
        %1092 = vrot.lane.b32.xlu0 %v683, 104
        %v1093 = vpop.permute.xlu0 %1092
        %v1095 = vsel %vm718, %v1093, 0
        %v1098 = vsel %vm722, %v1091, 0
        %1100 = vmatpush.bf16.msra.mxu0 0
        %1101 = vmatpush.bf16.msra.mxu0 0
        %1102 = vmatpush.bf16.msra.mxu0 0
        %1103 = vmatpush.bf16.msra.mxu0 0
        %1104 = vmatpush.bf16.msra.mxu0 0
        %1105 = vmatpush.bf16.msra.mxu0 0
        %1106 = vmatpush.bf16.msra.mxu0 0
        %1107 = vmatpush.bf16.msra.mxu0 %v1098
        %1108 = vmatmul.bf16.gmra.mxu0 %v1095
        %v1109 = vpop.f32.mrf.mxu0
        %v1110 = vadd.f32 0.0, %v1109
        %v1111 = vpop.f32.mrf.mxu0
        %1112 = vdwg.mxu0
        %v1113 = vmul.f32 %v1110, 0.35355338
        %v1114 = vsel %vm718, %v1113, -inf
        %1115 = vmax.xlane.f32.xlu0 %v1114
        %v1116 = vpop.xlane.xlu0 %1115
        %v1117 = vsub.f32 %v1113, %v1116
        %v1118 = vmul.f32 %v1117, 1.442695
        %v1119 = vpow.pop %v1118
        %v1120 = vsel %vm718, %v1119, 0.0
        %1121 = vadd.xlane.f32.xlu0 %v1120
        %v1122 = vpop.xlane.xlu0 %1121
        %v1123 = vrcp.pop %v1122
        %v1124 = vmul.f32 %v1122, %v1123
        %v1125 = vsub.f32 1.0, %v1124
        %v1126 = vmul.f32 %v1123, %v1125
        %v1127 = vadd.f32 %v1123, %v1126
        %vm1128 = vweird.f32 %v1122
        %vm1129 = vweird.f32 %v1123
        %vm1130 = vmor %vm1128, %vm1129
        %v1131 = vsel %vm1130, %v1123, %v1127
        %v1132 = vand.u32 2147483647, %v1122
        %vm1133 = vcmp.eq.f32.partialorder %v1132, 8.507059e+37
        %v1134 = vand.u32 %v1122, 2147483648
        %v1135 = vor.u32 1.1754944e-38, %v1134
        %v1136 = vsel %vm1133, %v1135, %v1131
        %v1137 = vmul.f32 %v1119, %v1136
        %v1138 = vpack.c.bf16 %v1137, %v1137
        %1139 = vrot.lane.b32.xlu0 %v717, 104
        %v1140 = vpop.permute.xlu0 %1139
        %v1142 = vsel %vm718, %v1138, 0
        %v1145 = vsel %vm722, %v1140, 0
        %1147 = vmatpush.bf16.msra.mxu0 0
        %1148 = vmatpush.bf16.msra.mxu0 0
        %1149 = vmatpush.bf16.msra.mxu0 0
        %1150 = vmatpush.bf16.msra.mxu0 0
        %1151 = vmatpush.bf16.msra.mxu0 0
        %1152 = vmatpush.bf16.msra.mxu0 0
        %1153 = vmatpush.bf16.msra.mxu0 0
        %1154 = vmatpush.bf16.msra.mxu0 %v1145
        %1155 = vmatmul.bf16.gmra.mxu0 %v1142
        %v1156 = vpop.f32.mrf.mxu0
        %v1157 = vadd.f32 0.0, %v1156
        %v1158 = vpop.f32.mrf.mxu0
        %1159 = vdwg.mxu0
        %v1160 = vpack.c.bf16 %v1157, %v1157
        %v1162 = vsel %vm718, %v1160, 0
        %v1165 = vsel %vm722, %v579, 0
        %1167 = vmatpush.bf16.msra.mxu0 0
        %1168 = vmatpush.bf16.msra.mxu0 0
        %1169 = vmatpush.bf16.msra.mxu0 0
        %1170 = vmatpush.bf16.msra.mxu0 0
        %1171 = vmatpush.bf16.msra.mxu0 0
        %1172 = vmatpush.bf16.msra.mxu0 0
        %1173 = vmatpush.bf16.msra.mxu0 0
        %1174 = vmatpush.bf16.msra.mxu0 %v1165
        %1175 = vmatmul.bf16.gmra.mxu0 %v1162
        %v1176 = vpop.f32.mrf.mxu0
        %v1177 = vadd.f32 0.0, %v1176
        %v1178 = vpop.f32.mrf.mxu0
        %1179 = vdwg.mxu0
        %v1180 = vadd.f32 %v1055, %v1177
        %v1181 = vld [vmem:[%s9] sm:$0x1]
        %v1183 = vperm.slane %v1181, 0
        %v1185 = vadd.f32 %v1180, %v1183
        %v1186 = vadd.f32 %v1185, %v574
        %v1187 = vld [vmem:[%s10] sm:$0x1]
        %v1188 = vld [vmem:[%s11] sm:$0x1]
        %v1189 = vsel %vm600, %v1186, 0.0
        %1190 = vadd.xlane.f32.xlu0 %v1189
        %v1191 = vpop.xlane.xlu0 %1190
        %v1192 = vrcp.pop 32.0
        %v1193 = vmul.f32 32.0, %v1192
        %v1194 = vsub.f32 1.0, %v1193
        %v1195 = vmul.f32 %v1192, %v1194
        %v1196 = vadd.f32 %v1192, %v1195
        %vm1197 = vweird.f32 %v1192
        %v1198 = vsel %vm1197, %v1192, %v1196
        %v1199 = vmul.f32 %v1191, %v1198
        %v1200 = vsub.f32 %v1186, %v1199
        %v1201 = vmul.f32 %v1200, %v1200
        %v1202 = vsel %vm600, %v1201, 0.0
        %1203 = vadd.xlane.f32.xlu0 %v1202
        %v1204 = vpop.xlane.xlu0 %1203
        %v1205 = vmul.f32 %v1204, %v1198
        %v1206 = vadd.f32 %v1205, 1e-12
        %v1207 = vrsqrt.pop %v1206
        %v1208 = vmul.f32 %v1207, %v1206
        %v1209 = vmul.f32 %v1208, %v1207
        %v1210 = vmul.f32 0.5, %v1209
        %v1211 = vsub.f32 1.5, %v1210
        %v1212 = vmul.f32 %v1207, %v1211
        %vm1213 = vweird.f32 %v1206
        %vm1214 = vweird.f32 %v1207
        %vm1215 = vmor %vm1213, %vm1214
        %v1216 = vsel %vm1215, %v1207, %v1212
        %v1217 = vmul.f32 %v1200, %v1216
        %v1219 = vperm.slane %v1187, 0
        %v1221 = vmul.f32 %v1217, %v1219
        %v1223 = vperm.slane %v1188, 0
        %v1225 = vadd.f32 %v1221, %v1223
        %v1226 = vpack.c.bf16 %v1185, %v1185
        %v1227 = vld [vmem:[%s12] sm:$0xf]
        %v1228 = vld [vmem:[%s12 + $0x4] sm:$0xf]
        %v1229 = vld [vmem:[%s12 + $0x8] sm:$0xf]
        %v1230 = vld [vmem:[%s12 + $0xc] sm:$0xf]
        %v1231 = vld [vmem:[%s13] sm:$0x1]
        %v1233 = vperm.slane %v1231, 0
        %v1239 = vunpack.c.l.b16 %v1227
        %v1240 = vunpack.c.l.b16 %v1228
        %v1241 = vunpack.c.l.b16 %v1229
        %v1242 = vunpack.c.l.b16 %v1230
        %v1243 = vpack.c.b16 %v1240, %v1239
        %v1244 = vpack.c.b16 %v1242, %v1241
        %v1248 = vsel %vm600, %v1226, 0
        %1250 = vmatpush.bf16.msra.mxu0 0
        %1251 = vmatpush.bf16.msra.mxu0 0
        %1252 = vmatpush.bf16.msra.mxu0 0
        %1253 = vmatpush.bf16.msra.mxu0 0
        %1254 = vmatpush.bf16.msra.mxu0 0
        %1255 = vmatpush.bf16.msra.mxu0 0
        %1256 = vmatpush.bf16.msra.mxu0 %v1244
        %1257 = vmatpush.bf16.msra.mxu0 %v1243
        %1258 = vmatmul.bf16.gmra.mxu0 %v1248
        %v1259 = vpop.f32.mrf.mxu0
        %v1260 = vadd.f32 %v1233, %v1259
        %v1261 = vpop.f32.mrf.mxu0
        %1262 = vdwg.mxu0
        %v1263 = vmax.f32 %v1260, 0.0
        %v1264 = vpack.c.bf16 %v1263, %v1263
        %v1265 = vld [vmem:[%s14] sm:$0xf]
        %v1266 = vld [vmem:[%s14 + $0x4] sm:$0xf]
        %v1267 = vld [vmem:[%s14 + $0x8] sm:$0xf]
        %v1268 = vld [vmem:[%s14 + $0xc] sm:$0xf]
        %v1269 = vld [vmem:[%s14 + $0x10] sm:$0xf]
        %v1270 = vld [vmem:[%s14 + $0x14] sm:$0xf]
        %v1271 = vld [vmem:[%s14 + $0x18] sm:$0xf]
        %v1272 = vld [vmem:[%s14 + $0x1c] sm:$0xf]
        %v1273 = vld [vmem:[%s14 + $0x20] sm:$0xf]
        %v1274 = vld [vmem:[%s14 + $0x24] sm:$0xf]
        %v1275 = vld [vmem:[%s14 + $0x28] sm:$0xf]
        %v1276 = vld [vmem:[%s14 + $0x2c] sm:$0xf]
        %v1277 = vld [vmem:[%s14 + $0x30] sm:$0xf]
        %v1278 = vld [vmem:[%s14 + $0x34] sm:$0xf]
        %v1279 = vld [vmem:[%s14 + $0x38] sm:$0xf]
        %v1280 = vld [vmem:[%s14 + $0x3c] sm:$0xf]
        %v1281 = vld [vmem:[%s15] sm:$0x1]
        %v1283 = vperm.slane %v1281, 0
        %v1301 = vunpack.c.l.b16 %v1265
        %v1302 = vunpack.c.l.b16 %v1266
        %v1303 = vunpack.c.l.b16 %v1267
        %v1304 = vunpack.c.l.b16 %v1268
        %v1305 = vunpack.c.l.b16 %v1269
        %v1306 = vunpack.c.l.b16 %v1270
        %v1307 = vunpack.c.l.b16 %v1271
        %v1308 = vunpack.c.l.b16 %v1272
        %v1309 = vunpack.c.l.b16 %v1273
        %v1310 = vunpack.c.l.b16 %v1274
        %v1311 = vunpack.c.l.b16 %v1275
        %v1312 = vunpack.c.l.b16 %v1276
        %v1313 = vunpack.c.l.b16 %v1277
        %v1314 = vunpack.c.l.b16 %v1278
        %v1315 = vunpack.c.l.b16 %v1279
        %v1316 = vunpack.c.l.b16 %v1280
        %v1317 = vpack.c.b16 %v1302, %v1301
        %v1318 = vpack.c.b16 %v1304, %v1303
        %v1319 = vpack.c.b16 %v1306, %v1305
        %v1320 = vpack.c.b16 %v1308, %v1307
        %v1321 = vpack.c.b16 %v1310, %v1309
        %v1322 = vpack.c.b16 %v1312, %v1311
        %v1323 = vpack.c.b16 %v1314, %v1313
        %v1324 = vpack.c.b16 %v1316, %v1315
        %1333 = vmatpush.bf16.msra.mxu0 %v1324
        %1334 = vmatpush.bf16.msra.mxu0 %v1323
        %1335 = vmatpush.bf16.msra.mxu0 %v1322
        %1336 = vmatpush.bf16.msra.mxu0 %v1321
        %1337 = vmatpush.bf16.msra.mxu0 %v1320
        %1338 = vmatpush.bf16.msra.mxu0 %v1319
        %1339 = vmatpush.bf16.msra.mxu0 %v1318
        %1340 = vmatpush.bf16.msra.mxu0 %v1317
        %1341 = vmatmul.bf16.gmra.mxu0 %v1264
        %v1342 = vpop.f32.mrf.mxu0
        %v1343 = vadd.f32 %v1283, %v1342
        %v1344 = vpop.f32.mrf.mxu0
        %1345 = vdwg.mxu0
        %v1346 = vadd.f32 %v1343, %v1225
        %v1347 = vld [vmem:[%s16] sm:$0x1]
        %v1348 = vld [vmem:[%s17] sm:$0x1]
        %v1349 = vsel %vm600, %v1346, 0.0
        %1350 = vadd.xlane.f32.xlu0 %v1349
        %v1351 = vpop.xlane.xlu0 %1350
        %v1352 = vmul.f32 %v1351, %v1198
        %v1353 = vsub.f32 %v1346, %v1352
        %v1354 = vmul.f32 %v1353, %v1353
        %v1355 = vsel %vm600, %v1354, 0.0
        %1356 = vadd.xlane.f32.xlu0 %v1355
        %v1357 = vpop.xlane.xlu0 %1356
        %v1358 = vmul.f32 %v1357, %v1198
        %v1359 = vadd.f32 %v1358, 1e-12
        %v1360 = vrsqrt.pop %v1359
        %v1361 = vmul.f32 %v1360, %v1359
        %v1362 = vmul.f32 %v1361, %v1360
        %v1363 = vmul.f32 0.5, %v1362
        %v1364 = vsub.f32 1.5, %v1363
        %v1365 = vmul.f32 %v1360, %v1364
        %vm1366 = vweird.f32 %v1359
        %vm1367 = vweird.f32 %v1360
        %vm1368 = vmor %vm1366, %vm1367
        %v1369 = vsel %vm1368, %v1360, %v1365
        %v1370 = vmul.f32 %v1353, %v1369
        %v1372 = vperm.slane %v1347, 0
        %v1374 = vmul.f32 %v1370, %v1372
        %v1376 = vperm.slane %v1348, 0
        %v1378 = vadd.f32 %v1374, %v1376
        %v1379 = vpack.c.bf16 %v1378, %v1378
        %s1380 = scalar_lea.vmem %s8, 16
        %v1381 = vld [vmem:[%s1380] sm:$0xf]
        %v1382 = vld [vmem:[%s1380 + $0x4] sm:$0xf]
        %v1383 = vld [vmem:[%s1380 + $0x8] sm:$0xf]
        %v1384 = vld [vmem:[%s1380 + $0xc] sm:$0xf]
        %s1385 = scalar_lea.vmem %s2, 16
        %v1386 = vld [vmem:[%s1385] sm:$0xf]
        %v1387 = vld [vmem:[%s1385 + $0x4] sm:$0xf]
        %v1388 = vld [vmem:[%s1385 + $0x8] sm:$0xf]
        %v1389 = vld [vmem:[%s1385 + $0xc] sm:$0xf]
        %s1390 = scalar_lea.vmem %s3, 1
        %v1391 = vld [vmem:[%s1390] sm:$0x1]
        %v1393 = vperm.slane %v1391, 0
        %v1399 = vunpack.c.l.b16 %v1386
        %v1400 = vunpack.c.l.b16 %v1387
        %v1401 = vunpack.c.l.b16 %v1388
        %v1402 = vunpack.c.l.b16 %v1389
        %v1403 = vpack.c.b16 %v1400, %v1399
        %v1404 = vpack.c.b16 %v1402, %v1401
        %v1408 = vsel %vm600, %v1379, 0
        %1410 = vmatpush.bf16.msra.mxu0 0
        %1411 = vmatpush.bf16.msra.mxu0 0
        %1412 = vmatpush.bf16.msra.mxu0 0
        %1413 = vmatpush.bf16.msra.mxu0 0
        %1414 = vmatpush.bf16.msra.mxu0 0
        %1415 = vmatpush.bf16.msra.mxu0 0
        %1416 = vmatpush.bf16.msra.mxu0 %v1404
        %1417 = vmatpush.bf16.msra.mxu0 %v1403
        %1418 = vmatmul.bf16.gmra.mxu0 %v1408
        %v1419 = vpop.f32.mrf.mxu0
        %v1420 = vadd.f32 %v1393, %v1419
        %v1421 = vpop.f32.mrf.mxu0
        %1422 = vdwg.mxu0
        %s1423 = scalar_lea.vmem %s4, 16
        %v1424 = vld [vmem:[%s1423] sm:$0xf]
        %v1425 = vld [vmem:[%s1423 + $0x4] sm:$0xf]
        %v1426 = vld [vmem:[%s1423 + $0x8] sm:$0xf]
        %v1427 = vld [vmem:[%s1423 + $0xc] sm:$0xf]
        %s1428 = scalar_lea.vmem %s5, 1
        %v1429 = vld [vmem:[%s1428] sm:$0x1]
        %v1431 = vperm.slane %v1429, 0
        %v1437 = vunpack.c.l.b16 %v1424
        %v1438 = vunpack.c.l.b16 %v1425
        %v1439 = vunpack.c.l.b16 %v1426
        %v1440 = vunpack.c.l.b16 %v1427
        %v1441 = vpack.c.b16 %v1438, %v1437
        %v1442 = vpack.c.b16 %v1440, %v1439
        %1445 = vmatpush.bf16.msra.mxu0 0
        %1446 = vmatpush.bf16.msra.mxu0 0
        %1447 = vmatpush.bf16.msra.mxu0 0
        %1448 = vmatpush.bf16.msra.mxu0 0
        %1449 = vmatpush.bf16.msra.mxu0 0
        %1450 = vmatpush.bf16.msra.mxu0 0
        %1451 = vmatpush.bf16.msra.mxu0 %v1442
        %1452 = vmatpush.bf16.msra.mxu0 %v1441
        %1453 = vmatmul.bf16.gmra.mxu0 %v1408
        %v1454 = vpop.f32.mrf.mxu0
        %v1455 = vadd.f32 %v1431, %v1454
        %v1456 = vpop.f32.mrf.mxu0
        %1457 = vdwg.mxu0
        %s1458 = scalar_lea.vmem %s6, 16
        %v1459 = vld [vmem:[%s1458] sm:$0xf]
        %v1460 = vld [vmem:[%s1458 + $0x4] sm:$0xf]
        %v1461 = vld [vmem:[%s1458 + $0x8] sm:$0xf]
        %v1462 = vld [vmem:[%s1458 + $0xc] sm:$0xf]
        %s1463 = scalar_lea.vmem %s7, 1
        %v1464 = vld [vmem:[%s1463] sm:$0x1]
        %v1466 = vperm.slane %v1464, 0
        %v1472 = vunpack.c.l.b16 %v1459
        %v1473 = vunpack.c.l.b16 %v1460
        %v1474 = vunpack.c.l.b16 %v1461
        %v1475 = vunpack.c.l.b16 %v1462
        %v1476 = vpack.c.b16 %v1473, %v1472
        %v1477 = vpack.c.b16 %v1475, %v1474
        %1480 = vmatpush.bf16.msra.mxu0 0
        %1481 = vmatpush.bf16.msra.mxu0 0
        %1482 = vmatpush.bf16.msra.mxu0 0
        %1483 = vmatpush.bf16.msra.mxu0 0
        %1484 = vmatpush.bf16.msra.mxu0 0
        %1485 = vmatpush.bf16.msra.mxu0 0
        %1486 = vmatpush.bf16.msra.mxu0 %v1477
        %1487 = vmatpush.bf16.msra.mxu0 %v1476
        %1488 = vmatmul.bf16.gmra.mxu0 %v1408
        %v1489 = vpop.f32.mrf.mxu0
        %v1490 = vadd.f32 %v1466, %v1489
        %v1491 = vpop.f32.mrf.mxu0
        %1492 = vdwg.mxu0
        %v1493 = vpack.c.bf16 %v1420, %v1420
        %1494 = vxpose.xlu0.b32.start [1/16] %v1455, 128
        %1495 = vxpose.xlu0.b32.cont [2/16] 0.0, 128
        %1496 = vxpose.xlu0.b32.cont [3/16] 0.0, 128
        %1497 = vxpose.xlu0.b32.cont [4/16] 0.0, 128
        %1498 = vxpose.xlu0.b32.cont [5/16] 0.0, 128
        %1499 = vxpose.xlu0.b32.cont [6/16] 0.0, 128
        %1500 = vxpose.xlu0.b32.cont [7/16] 0.0, 128
        %1501 = vxpose.xlu0.b32.cont [8/16] 0.0, 128
        %1502 = vxpose.xlu0.b32.cont [9/16] 0.0, 128
        %1503 = vxpose.xlu0.b32.cont [10/16] 0.0, 128
        %1504 = vxpose.xlu0.b32.cont [11/16] 0.0, 128
        %1505 = vxpose.xlu0.b32.cont [12/16] 0.0, 128
        %1506 = vxpose.xlu0.b32.cont [13/16] 0.0, 128
        %1507 = vxpose.xlu0.b32.cont [14/16] 0.0, 128
        %1508 = vxpose.xlu0.b32.cont [15/16] 0.0, 128
        %1509 = vxpose.xlu0.b32.end [16/16] 0.0, 128
        %v1510 = vpop.trf.xlu0
        %v1511 = vpop.trf.xlu0
        %v1512 = vpop.trf.xlu0
        %v1513 = vpop.trf.xlu0
        %v1514 = vpop.trf.xlu0
        %v1515 = vpop.trf.xlu0
        %v1516 = vpop.trf.xlu0
        %v1517 = vpop.trf.xlu0
        %v1518 = vpop.trf.xlu0
        %v1519 = vpop.trf.xlu0
        %v1520 = vpop.trf.xlu0
        %v1521 = vpop.trf.xlu0
        %v1522 = vpop.trf.xlu0
        %v1523 = vpop.trf.xlu0
        %v1524 = vpop.trf.xlu0
        %v1525 = vpop.trf.xlu0
        %v1526 = vpack.c.bf16 %v1510, %v1510
        %v1527 = vpack.c.bf16 %v1490, %v1490
        %v1529 = vsel %vm718, %v1493, 0
        %v1532 = vsel %vm722, %v1526, 0
        %1534 = vmatpush.bf16.msra.mxu0 0
        %1535 = vmatpush.bf16.msra.mxu0 0
        %1536 = vmatpush.bf16.msra.mxu0 0
        %1537 = vmatpush.bf16.msra.mxu0 0
        %1538 = vmatpush.bf16.msra.mxu0 0
        %1539 = vmatpush.bf16.msra.mxu0 0
        %1540 = vmatpush.bf16.msra.mxu0 0
        %1541 = vmatpush.bf16.msra.mxu0 %v1532
        %1542 = vmatmul.bf16.gmra.mxu0 %v1529
        %v1543 = vpop.f32.mrf.mxu0
        %v1544 = vadd.f32 0.0, %v1543
        %v1545 = vpop.f32.mrf.mxu0
        %1546 = vdwg.mxu0
        %v1547 = vmul.f32 %v1544, 0.35355338
        %v1548 = vsel %vm718, %v1547, -inf
        %1549 = vmax.xlane.f32.xlu0 %v1548
        %v1550 = vpop.xlane.xlu0 %1549
        %v1551 = vsub.f32 %v1547, %v1550
        %v1552 = vmul.f32 %v1551, 1.442695
        %v1553 = vpow.pop %v1552
        %v1554 = vsel %vm718, %v1553, 0.0
        %1555 = vadd.xlane.f32.xlu0 %v1554
        %v1556 = vpop.xlane.xlu0 %1555
        %v1557 = vrcp.pop %v1556
        %v1558 = vmul.f32 %v1556, %v1557
        %v1559 = vsub.f32 1.0, %v1558
        %v1560 = vmul.f32 %v1557, %v1559
        %v1561 = vadd.f32 %v1557, %v1560
        %vm1562 = vweird.f32 %v1556
        %vm1563 = vweird.f32 %v1557
        %vm1564 = vmor %vm1562, %vm1563
        %v1565 = vsel %vm1564, %v1557, %v1561
        %v1566 = vand.u32 2147483647, %v1556
        %vm1567 = vcmp.eq.f32.partialorder %v1566, 8.507059e+37
        %v1568 = vand.u32 %v1556, 2147483648
        %v1569 = vor.u32 1.1754944e-38, %v1568
        %v1570 = vsel %vm1567, %v1569, %v1565
        %v1571 = vmul.f32 %v1553, %v1570
        %v1572 = vpack.c.bf16 %v1571, %v1571
        %v1574 = vsel %vm718, %v1572, 0
        %v1577 = vsel %vm722, %v1527, 0
        %1579 = vmatpush.bf16.msra.mxu0 0
        %1580 = vmatpush.bf16.msra.mxu0 0
        %1581 = vmatpush.bf16.msra.mxu0 0
        %1582 = vmatpush.bf16.msra.mxu0 0
        %1583 = vmatpush.bf16.msra.mxu0 0
        %1584 = vmatpush.bf16.msra.mxu0 0
        %1585 = vmatpush.bf16.msra.mxu0 0
        %1586 = vmatpush.bf16.msra.mxu0 %v1577
        %1587 = vmatmul.bf16.gmra.mxu0 %v1574
        %v1588 = vpop.f32.mrf.mxu0
        %v1589 = vadd.f32 0.0, %v1588
        %v1590 = vpop.f32.mrf.mxu0
        %1591 = vdwg.mxu0
        %v1592 = vpack.c.bf16 %v1589, %v1589
        %1594 = vrot.lane.b32.xlu0 %v1455, 120
        %v1595 = vpop.permute.xlu0 %1594
        %1597 = vxpose.xlu0.b32.start [1/16] %v1595, 128
        %1598 = vxpose.xlu0.b32.cont [2/16] 0.0, 128
        %1599 = vxpose.xlu0.b32.cont [3/16] 0.0, 128
        %1600 = vxpose.xlu0.b32.cont [4/16] 0.0, 128
        %1601 = vxpose.xlu0.b32.cont [5/16] 0.0, 128
        %1602 = vxpose.xlu0.b32.cont [6/16] 0.0, 128
        %1603 = vxpose.xlu0.b32.cont [7/16] 0.0, 128
        %1604 = vxpose.xlu0.b32.cont [8/16] 0.0, 128
        %1605 = vxpose.xlu0.b32.cont [9/16] 0.0, 128
        %1606 = vxpose.xlu0.b32.cont [10/16] 0.0, 128
        %1607 = vxpose.xlu0.b32.cont [11/16] 0.0, 128
        %1608 = vxpose.xlu0.b32.cont [12/16] 0.0, 128
        %1609 = vxpose.xlu0.b32.cont [13/16] 0.0, 128
        %1610 = vxpose.xlu0.b32.cont [14/16] 0.0, 128
        %1611 = vxpose.xlu0.b32.cont [15/16] 0.0, 128
        %1612 = vxpose.xlu0.b32.end [16/16] 0.0, 128
        %v1613 = vpop.trf.xlu0
        %v1614 = vpop.trf.xlu0
        %v1615 = vpop.trf.xlu0
        %v1616 = vpop.trf.xlu0
        %v1617 = vpop.trf.xlu0
        %v1618 = vpop.trf.xlu0
        %v1619 = vpop.trf.xlu0
        %v1620 = vpop.trf.xlu0
        %v1621 = vpop.trf.xlu0
        %v1622 = vpop.trf.xlu0
        %v1623 = vpop.trf.xlu0
        %v1624 = vpop.trf.xlu0
        %v1625 = vpop.trf.xlu0
        %v1626 = vpop.trf.xlu0
        %v1627 = vpop.trf.xlu0
        %v1628 = vpop.trf.xlu0
        %v1629 = vpack.c.bf16 %v1613, %v1613
        %1631 = vrot.lane.b32.xlu0 %v1493, 120
        %v1632 = vpop.permute.xlu0 %1631
        %v1634 = vsel %vm718, %v1632, 0
        %v1637 = vsel %vm722, %v1629, 0
        %1639 = vmatpush.bf16.msra.mxu0 0
        %1640 = vmatpush.bf16.msra.mxu0 0
        %1641 = vmatpush.bf16.msra.mxu0 0
        %1642 = vmatpush.bf16.msra.mxu0 0
        %1643 = vmatpush.bf16.msra.mxu0 0
        %1644 = vmatpush.bf16.msra.mxu0 0
        %1645 = vmatpush.bf16.msra.mxu0 0
        %1646 = vmatpush.bf16.msra.mxu0 %v1637
        %1647 = vmatmul.bf16.gmra.mxu0 %v1634
        %v1648 = vpop.f32.mrf.mxu0
        %v1649 = vadd.f32 0.0, %v1648
        %v1650 = vpop.f32.mrf.mxu0
        %1651 = vdwg.mxu0
        %v1652 = vmul.f32 %v1649, 0.35355338
        %v1653 = vsel %vm718, %v1652, -inf
        %1654 = vmax.xlane.f32.xlu0 %v1653
        %v1655 = vpop.xlane.xlu0 %1654
        %v1656 = vsub.f32 %v1652, %v1655
        %v1657 = vmul.f32 %v1656, 1.442695
        %v1658 = vpow.pop %v1657
        %v1659 = vsel %vm718, %v1658, 0.0
        %1660 = vadd.xlane.f32.xlu0 %v1659
        %v1661 = vpop.xlane.xlu0 %1660
        %v1662 = vrcp.pop %v1661
        %v1663 = vmul.f32 %v1661, %v1662
        %v1664 = vsub.f32 1.0, %v1663
        %v1665 = vmul.f32 %v1662, %v1664
        %v1666 = vadd.f32 %v1662, %v1665
        %vm1667 = vweird.f32 %v1661
        %vm1668 = vweird.f32 %v1662
        %vm1669 = vmor %vm1667, %vm1668
        %v1670 = vsel %vm1669, %v1662, %v1666
        %v1671 = vand.u32 2147483647, %v1661
        %vm1672 = vcmp.eq.f32.partialorder %v1671, 8.507059e+37
        %v1673 = vand.u32 %v1661, 2147483648
        %v1674 = vor.u32 1.1754944e-38, %v1673
        %v1675 = vsel %vm1672, %v1674, %v1670
        %v1676 = vmul.f32 %v1658, %v1675
        %v1677 = vpack.c.bf16 %v1676, %v1676
        %1679 = vrot.lane.b32.xlu0 %v1527, 120
        %v1680 = vpop.permute.xlu0 %1679
        %v1682 = vsel %vm718, %v1677, 0
        %v1685 = vsel %vm722, %v1680, 0
        %1687 = vmatpush.bf16.msra.mxu0 0
        %1688 = vmatpush.bf16.msra.mxu0 0
        %1689 = vmatpush.bf16.msra.mxu0 0
        %1690 = vmatpush.bf16.msra.mxu0 0
        %1691 = vmatpush.bf16.msra.mxu0 0
        %1692 = vmatpush.bf16.msra.mxu0 0
        %1693 = vmatpush.bf16.msra.mxu0 0
        %1694 = vmatpush.bf16.msra.mxu0 %v1685
        %1695 = vmatmul.bf16.gmra.mxu0 %v1682
        %v1696 = vpop.f32.mrf.mxu0
        %v1697 = vadd.f32 0.0, %v1696
        %v1698 = vpop.f32.mrf.mxu0
        %1699 = vdwg.mxu0
        %v1700 = vpack.c.bf16 %v1697, %v1697
        %v1702 = vsel %vm718, %v1700, 0
        %v1705 = vsel %vm722, %v1382, 0
        %1707 = vmatpush.bf16.msra.mxu0 0
        %1708 = vmatpush.bf16.msra.mxu0 0
        %1709 = vmatpush.bf16.msra.mxu0 0
        %1710 = vmatpush.bf16.msra.mxu0 0
        %1711 = vmatpush.bf16.msra.mxu0 0
        %1712 = vmatpush.bf16.msra.mxu0 0
        %1713 = vmatpush.bf16.msra.mxu0 0
        %1714 = vmatpush.bf16.msra.mxu0 %v1705
        %1715 = vmatmul.bf16.gmra.mxu0 %v1702
        %v1716 = vpop.f32.mrf.mxu0
        %v1717 = vadd.f32 0.0, %v1716
        %v1718 = vpop.f32.mrf.mxu0
        %1719 = vdwg.mxu0
        %v1721 = vsel %vm718, %v1592, 0
        %v1724 = vsel %vm722, %v1381, 0
        %1726 = vmatpush.bf16.msra.mxu0 0
        %1727 = vmatpush.bf16.msra.mxu0 0
        %1728 = vmatpush.bf16.msra.mxu0 0
        %1729 = vmatpush.bf16.msra.mxu0 0
        %1730 = vmatpush.bf16.msra.mxu0 0
        %1731 = vmatpush.bf16.msra.mxu0 0
        %1732 = vmatpush.bf16.msra.mxu0 0
        %1733 = vmatpush.bf16.msra.mxu0 %v1724
        %1734 = vmatmul.bf16.gmra.mxu0 %v1721
        %v1735 = vpop.f32.mrf.mxu0
        %v1736 = vadd.f32 %v1717, %v1735
        %v1737 = vpop.f32.mrf.mxu0
        %1738 = vdwg.mxu0
        %1739 = vrot.lane.b32.xlu0 %v1455, 112
        %v1740 = vpop.permute.xlu0 %1739
        %1742 = vxpose.xlu0.b32.start [1/16] %v1740, 128
        %1743 = vxpose.xlu0.b32.cont [2/16] 0.0, 128
        %1744 = vxpose.xlu0.b32.cont [3/16] 0.0, 128
        %1745 = vxpose.xlu0.b32.cont [4/16] 0.0, 128
        %1746 = vxpose.xlu0.b32.cont [5/16] 0.0, 128
        %1747 = vxpose.xlu0.b32.cont [6/16] 0.0, 128
        %1748 = vxpose.xlu0.b32.cont [7/16] 0.0, 128
        %1749 = vxpose.xlu0.b32.cont [8/16] 0.0, 128
        %1750 = vxpose.xlu0.b32.cont [9/16] 0.0, 128
        %1751 = vxpose.xlu0.b32.cont [10/16] 0.0, 128
        %1752 = vxpose.xlu0.b32.cont [11/16] 0.0, 128
        %1753 = vxpose.xlu0.b32.cont [12/16] 0.0, 128
        %1754 = vxpose.xlu0.b32.cont [13/16] 0.0, 128
        %1755 = vxpose.xlu0.b32.cont [14/16] 0.0, 128
        %1756 = vxpose.xlu0.b32.cont [15/16] 0.0, 128
        %1757 = vxpose.xlu0.b32.end [16/16] 0.0, 128
        %v1758 = vpop.trf.xlu0
        %v1759 = vpop.trf.xlu0
        %v1760 = vpop.trf.xlu0
        %v1761 = vpop.trf.xlu0
        %v1762 = vpop.trf.xlu0
        %v1763 = vpop.trf.xlu0
        %v1764 = vpop.trf.xlu0
        %v1765 = vpop.trf.xlu0
        %v1766 = vpop.trf.xlu0
        %v1767 = vpop.trf.xlu0
        %v1768 = vpop.trf.xlu0
        %v1769 = vpop.trf.xlu0
        %v1770 = vpop.trf.xlu0
        %v1771 = vpop.trf.xlu0
        %v1772 = vpop.trf.xlu0
        %v1773 = vpop.trf.xlu0
        %v1774 = vpack.c.bf16 %v1758, %v1758
        %1775 = vrot.lane.b32.xlu0 %v1493, 112
        %v1776 = vpop.permute.xlu0 %1775
        %v1778 = vsel %vm718, %v1776, 0
        %v1781 = vsel %vm722, %v1774, 0
        %1783 = vmatpush.bf16.msra.mxu0 0
        %1784 = vmatpush.bf16.msra.mxu0 0
        %1785 = vmatpush.bf16.msra.mxu0 0
        %1786 = vmatpush.bf16.msra.mxu0 0
        %1787 = vmatpush.bf16.msra.mxu0 0
        %1788 = vmatpush.bf16.msra.mxu0 0
        %1789 = vmatpush.bf16.msra.mxu0 0
        %1790 = vmatpush.bf16.msra.mxu0 %v1781
        %1791 = vmatmul.bf16.gmra.mxu0 %v1778
        %v1792 = vpop.f32.mrf.mxu0
        %v1793 = vadd.f32 0.0, %v1792
        %v1794 = vpop.f32.mrf.mxu0
        %1795 = vdwg.mxu0
        %v1796 = vmul.f32 %v1793, 0.35355338
        %v1797 = vsel %vm718, %v1796, -inf
        %1798 = vmax.xlane.f32.xlu0 %v1797
        %v1799 = vpop.xlane.xlu0 %1798
        %v1800 = vsub.f32 %v1796, %v1799
        %v1801 = vmul.f32 %v1800, 1.442695
        %v1802 = vpow.pop %v1801
        %v1803 = vsel %vm718, %v1802, 0.0
        %1804 = vadd.xlane.f32.xlu0 %v1803
        %v1805 = vpop.xlane.xlu0 %1804
        %v1806 = vrcp.pop %v1805
        %v1807 = vmul.f32 %v1805, %v1806
        %v1808 = vsub.f32 1.0, %v1807
        %v1809 = vmul.f32 %v1806, %v1808
        %v1810 = vadd.f32 %v1806, %v1809
        %vm1811 = vweird.f32 %v1805
        %vm1812 = vweird.f32 %v1806
        %vm1813 = vmor %vm1811, %vm1812
        %v1814 = vsel %vm1813, %v1806, %v1810
        %v1815 = vand.u32 2147483647, %v1805
        %vm1816 = vcmp.eq.f32.partialorder %v1815, 8.507059e+37
        %v1817 = vand.u32 %v1805, 2147483648
        %v1818 = vor.u32 1.1754944e-38, %v1817
        %v1819 = vsel %vm1816, %v1818, %v1814
        %v1820 = vmul.f32 %v1802, %v1819
        %v1821 = vpack.c.bf16 %v1820, %v1820
        %1822 = vrot.lane.b32.xlu0 %v1527, 112
        %v1823 = vpop.permute.xlu0 %1822
        %v1825 = vsel %vm718, %v1821, 0
        %v1828 = vsel %vm722, %v1823, 0
        %1830 = vmatpush.bf16.msra.mxu0 0
        %1831 = vmatpush.bf16.msra.mxu0 0
        %1832 = vmatpush.bf16.msra.mxu0 0
        %1833 = vmatpush.bf16.msra.mxu0 0
        %1834 = vmatpush.bf16.msra.mxu0 0
        %1835 = vmatpush.bf16.msra.mxu0 0
        %1836 = vmatpush.bf16.msra.mxu0 0
        %1837 = vmatpush.bf16.msra.mxu0 %v1828
        %1838 = vmatmul.bf16.gmra.mxu0 %v1825
        %v1839 = vpop.f32.mrf.mxu0
        %v1840 = vadd.f32 0.0, %v1839
        %v1841 = vpop.f32.mrf.mxu0
        %1842 = vdwg.mxu0
        %v1843 = vpack.c.bf16 %v1840, %v1840
        %v1845 = vsel %vm718, %v1843, 0
        %v1848 = vsel %vm722, %v1383, 0
        %1850 = vmatpush.bf16.msra.mxu0 0
        %1851 = vmatpush.bf16.msra.mxu0 0
        %1852 = vmatpush.bf16.msra.mxu0 0
        %1853 = vmatpush.bf16.msra.mxu0 0
        %1854 = vmatpush.bf16.msra.mxu0 0
        %1855 = vmatpush.bf16.msra.mxu0 0
        %1856 = vmatpush.bf16.msra.mxu0 0
        %1857 = vmatpush.bf16.msra.mxu0 %v1848
        %1858 = vmatmul.bf16.gmra.mxu0 %v1845
        %v1859 = vpop.f32.mrf.mxu0
        %v1860 = vadd.f32 0.0, %v1859
        %v1861 = vpop.f32.mrf.mxu0
        %1862 = vdwg.mxu0
        %v1863 = vadd.f32 %v1736, %v1860
        %1864 = vrot.lane.b32.xlu0 %v1455, 104
        %v1865 = vpop.permute.xlu0 %1864
        %1867 = vxpose.xlu0.b32.start [1/16] %v1865, 128
        %1868 = vxpose.xlu0.b32.cont [2/16] 0.0, 128
        %1869 = vxpose.xlu0.b32.cont [3/16] 0.0, 128
        %1870 = vxpose.xlu0.b32.cont [4/16] 0.0, 128
        %1871 = vxpose.xlu0.b32.cont [5/16] 0.0, 128
        %1872 = vxpose.xlu0.b32.cont [6/16] 0.0, 128
        %1873 = vxpose.xlu0.b32.cont [7/16] 0.0, 128
        %1874 = vxpose.xlu0.b32.cont [8/16] 0.0, 128
        %1875 = vxpose.xlu0.b32.cont [9/16] 0.0, 128
        %1876 = vxpose.xlu0.b32.cont [10/16] 0.0, 128
        %1877 = vxpose.xlu0.b32.cont [11/16] 0.0, 128
        %1878 = vxpose.xlu0.b32.cont [12/16] 0.0, 128
        %1879 = vxpose.xlu0.b32.cont [13/16] 0.0, 128
        %1880 = vxpose.xlu0.b32.cont [14/16] 0.0, 128
        %1881 = vxpose.xlu0.b32.cont [15/16] 0.0, 128
        %1882 = vxpose.xlu0.b32.end [16/16] 0.0, 128
        %v1883 = vpop.trf.xlu0
        %v1884 = vpop.trf.xlu0
        %v1885 = vpop.trf.xlu0
        %v1886 = vpop.trf.xlu0
        %v1887 = vpop.trf.xlu0
        %v1888 = vpop.trf.xlu0
        %v1889 = vpop.trf.xlu0
        %v1890 = vpop.trf.xlu0
        %v1891 = vpop.trf.xlu0
        %v1892 = vpop.trf.xlu0
        %v1893 = vpop.trf.xlu0
        %v1894 = vpop.trf.xlu0
        %v1895 = vpop.trf.xlu0
        %v1896 = vpop.trf.xlu0
        %v1897 = vpop.trf.xlu0
        %v1898 = vpop.trf.xlu0
        %v1899 = vpack.c.bf16 %v1883, %v1883
        %1900 = vrot.lane.b32.xlu0 %v1493, 104
        %v1901 = vpop.permute.xlu0 %1900
        %v1903 = vsel %vm718, %v1901, 0
        %v1906 = vsel %vm722, %v1899, 0
        %1908 = vmatpush.bf16.msra.mxu0 0
        %1909 = vmatpush.bf16.msra.mxu0 0
        %1910 = vmatpush.bf16.msra.mxu0 0
        %1911 = vmatpush.bf16.msra.mxu0 0
        %1912 = vmatpush.bf16.msra.mxu0 0
        %1913 = vmatpush.bf16.msra.mxu0 0
        %1914 = vmatpush.bf16.msra.mxu0 0
        %1915 = vmatpush.bf16.msra.mxu0 %v1906
        %1916 = vmatmul.bf16.gmra.mxu0 %v1903
        %v1917 = vpop.f32.mrf.mxu0
        %v1918 = vadd.f32 0.0, %v1917
        %v1919 = vpop.f32.mrf.mxu0
        %1920 = vdwg.mxu0
        %v1921 = vmul.f32 %v1918, 0.35355338
        %v1922 = vsel %vm718, %v1921, -inf
        %1923 = vmax.xlane.f32.xlu0 %v1922
        %v1924 = vpop.xlane.xlu0 %1923
        %v1925 = vsub.f32 %v1921, %v1924
        %v1926 = vmul.f32 %v1925, 1.442695
        %v1927 = vpow.pop %v1926
        %v1928 = vsel %vm718, %v1927, 0.0
        %1929 = vadd.xlane.f32.xlu0 %v1928
        %v1930 = vpop.xlane.xlu0 %1929
        %v1931 = vrcp.pop %v1930
        %v1932 = vmul.f32 %v1930, %v1931
        %v1933 = vsub.f32 1.0, %v1932
        %v1934 = vmul.f32 %v1931, %v1933
        %v1935 = vadd.f32 %v1931, %v1934
        %vm1936 = vweird.f32 %v1930
        %vm1937 = vweird.f32 %v1931
        %vm1938 = vmor %vm1936, %vm1937
        %v1939 = vsel %vm1938, %v1931, %v1935
        %v1940 = vand.u32 2147483647, %v1930
        %vm1941 = vcmp.eq.f32.partialorder %v1940, 8.507059e+37
        %v1942 = vand.u32 %v1930, 2147483648
        %v1943 = vor.u32 1.1754944e-38, %v1942
        %v1944 = vsel %vm1941, %v1943, %v1939
        %v1945 = vmul.f32 %v1927, %v1944
        %v1946 = vpack.c.bf16 %v1945, %v1945
        %1947 = vrot.lane.b32.xlu0 %v1527, 104
        %v1948 = vpop.permute.xlu0 %1947
        %v1950 = vsel %vm718, %v1946, 0
        %v1953 = vsel %vm722, %v1948, 0
        %1955 = vmatpush.bf16.msra.mxu0 0
        %1956 = vmatpush.bf16.msra.mxu0 0
        %1957 = vmatpush.bf16.msra.mxu0 0
        %1958 = vmatpush.bf16.msra.mxu0 0
        %1959 = vmatpush.bf16.msra.mxu0 0
        %1960 = vmatpush.bf16.msra.mxu0 0
        %1961 = vmatpush.bf16.msra.mxu0 0
        %1962 = vmatpush.bf16.msra.mxu0 %v1953
        %1963 = vmatmul.bf16.gmra.mxu0 %v1950
        %v1964 = vpop.f32.mrf.mxu0
        %v1965 = vadd.f32 0.0, %v1964
        %v1966 = vpop.f32.mrf.mxu0
        %1967 = vdwg.mxu0
        %v1968 = vpack.c.bf16 %v1965, %v1965
        %v1970 = vsel %vm718, %v1968, 0
        %v1973 = vsel %vm722, %v1384, 0
        %1975 = vmatpush.bf16.msra.mxu0 0
        %1976 = vmatpush.bf16.msra.mxu0 0
        %1977 = vmatpush.bf16.msra.mxu0 0
        %1978 = vmatpush.bf16.msra.mxu0 0
        %1979 = vmatpush.bf16.msra.mxu0 0
        %1980 = vmatpush.bf16.msra.mxu0 0
        %1981 = vmatpush.bf16.msra.mxu0 0
        %1982 = vmatpush.bf16.msra.mxu0 %v1973
        %1983 = vmatmul.bf16.gmra.mxu0 %v1970
        %v1984 = vpop.f32.mrf.mxu0
        %v1985 = vadd.f32 0.0, %v1984
        %v1986 = vpop.f32.mrf.mxu0
        %1987 = vdwg.mxu0
        %v1988 = vadd.f32 %v1863, %v1985
        %s1989 = scalar_lea.vmem %s9, 1
        %v1990 = vld [vmem:[%s1989] sm:$0x1]
        %v1992 = vperm.slane %v1990, 0
        %v1994 = vadd.f32 %v1988, %v1992
        %v1995 = vadd.f32 %v1994, %v1378
        %s1996 = scalar_lea.vmem %s10, 1
        %v1997 = vld [vmem:[%s1996] sm:$0x1]
        %s1998 = scalar_lea.vmem %s11, 1
        %v1999 = vld [vmem:[%s1998] sm:$0x1]
        %v2000 = vsel %vm600, %v1995, 0.0
        %2001 = vadd.xlane.f32.xlu0 %v2000
        %v2002 = vpop.xlane.xlu0 %2001
        %v2003 = vmul.f32 %v2002, %v1198
        %v2004 = vsub.f32 %v1995, %v2003
        %v2005 = vmul.f32 %v2004, %v2004
        %v2006 = vsel %vm600, %v2005, 0.0
        %2007 = vadd.xlane.f32.xlu0 %v2006
        %v2008 = vpop.xlane.xlu0 %2007
        %v2009 = vmul.f32 %v2008, %v1198
        %v2010 = vadd.f32 %v2009, 1e-12
        %v2011 = vrsqrt.pop %v2010
        %v2012 = vmul.f32 %v2011, %v2010
        %v2013 = vmul.f32 %v2012, %v2011
        %v2014 = vmul.f32 0.5, %v2013
        %v2015 = vsub.f32 1.5, %v2014
        %v2016 = vmul.f32 %v2011, %v2015
        %vm2017 = vweird.f32 %v2010
        %vm2018 = vweird.f32 %v2011
        %vm2019 = vmor %vm2017, %vm2018
        %v2020 = vsel %vm2019, %v2011, %v2016
        %v2021 = vmul.f32 %v2004, %v2020
        %v2023 = vperm.slane %v1997, 0
        %v2025 = vmul.f32 %v2021, %v2023
        %v2027 = vperm.slane %v1999, 0
        %v2029 = vadd.f32 %v2025, %v2027
        %v2030 = vpack.c.bf16 %v1994, %v1994
        %s2031 = scalar_lea.vmem %s12, 16
        %v2032 = vld [vmem:[%s2031] sm:$0xf]
        %v2033 = vld [vmem:[%s2031 + $0x4] sm:$0xf]
        %v2034 = vld [vmem:[%s2031 + $0x8] sm:$0xf]
        %v2035 = vld [vmem:[%s2031 + $0xc] sm:$0xf]
        %s2036 = scalar_lea.vmem %s13, 1
        %v2037 = vld [vmem:[%s2036] sm:$0x1]
        %v2039 = vperm.slane %v2037, 0
        %v2045 = vunpack.c.l.b16 %v2032
        %v2046 = vunpack.c.l.b16 %v2033
        %v2047 = vunpack.c.l.b16 %v2034
        %v2048 = vunpack.c.l.b16 %v2035
        %v2049 = vpack.c.b16 %v2046, %v2045
        %v2050 = vpack.c.b16 %v2048, %v2047
        %v2054 = vsel %vm600, %v2030, 0
        %2056 = vmatpush.bf16.msra.mxu0 0
        %2057 = vmatpush.bf16.msra.mxu0 0
        %2058 = vmatpush.bf16.msra.mxu0 0
        %2059 = vmatpush.bf16.msra.mxu0 0
        %2060 = vmatpush.bf16.msra.mxu0 0
        %2061 = vmatpush.bf16.msra.mxu0 0
        %2062 = vmatpush.bf16.msra.mxu0 %v2050
        %2063 = vmatpush.bf16.msra.mxu0 %v2049
        %2064 = vmatmul.bf16.gmra.mxu0 %v2054
        %v2065 = vpop.f32.mrf.mxu0
        %v2066 = vadd.f32 %v2039, %v2065
        %v2067 = vpop.f32.mrf.mxu0
        %2068 = vdwg.mxu0
        %v2069 = vmax.f32 %v2066, 0.0
        %v2070 = vpack.c.bf16 %v2069, %v2069
        %s2071 = scalar_lea.vmem %s14, 64
        %v2072 = vld [vmem:[%s2071] sm:$0xf]
        %v2073 = vld [vmem:[%s2071 + $0x4] sm:$0xf]
        %v2074 = vld [vmem:[%s2071 + $0x8] sm:$0xf]
        %v2075 = vld [vmem:[%s2071 + $0xc] sm:$0xf]
        %v2076 = vld [vmem:[%s2071 + $0x10] sm:$0xf]
        %v2077 = vld [vmem:[%s2071 + $0x14] sm:$0xf]
        %v2078 = vld [vmem:[%s2071 + $0x18] sm:$0xf]
        %v2079 = vld [vmem:[%s2071 + $0x1c] sm:$0xf]
        %v2080 = vld [vmem:[%s2071 + $0x20] sm:$0xf]
        %v2081 = vld [vmem:[%s2071 + $0x24] sm:$0xf]
        %v2082 = vld [vmem:[%s2071 + $0x28] sm:$0xf]
        %v2083 = vld [vmem:[%s2071 + $0x2c] sm:$0xf]
        %v2084 = vld [vmem:[%s2071 + $0x30] sm:$0xf]
        %v2085 = vld [vmem:[%s2071 + $0x34] sm:$0xf]
        %v2086 = vld [vmem:[%s2071 + $0x38] sm:$0xf]
        %v2087 = vld [vmem:[%s2071 + $0x3c] sm:$0xf]
        %s2088 = scalar_lea.vmem %s15, 1
        %v2089 = vld [vmem:[%s2088] sm:$0x1]
        %v2091 = vperm.slane %v2089, 0
        %v2109 = vunpack.c.l.b16 %v2072
        %v2110 = vunpack.c.l.b16 %v2073
        %v2111 = vunpack.c.l.b16 %v2074
        %v2112 = vunpack.c.l.b16 %v2075
        %v2113 = vunpack.c.l.b16 %v2076
        %v2114 = vunpack.c.l.b16 %v2077
        %v2115 = vunpack.c.l.b16 %v2078
        %v2116 = vunpack.c.l.b16 %v2079
        %v2117 = vunpack.c.l.b16 %v2080
        %v2118 = vunpack.c.l.b16 %v2081
        %v2119 = vunpack.c.l.b16 %v2082
        %v2120 = vunpack.c.l.b16 %v2083
        %v2121 = vunpack.c.l.b16 %v2084
        %v2122 = vunpack.c.l.b16 %v2085
        %v2123 = vunpack.c.l.b16 %v2086
        %v2124 = vunpack.c.l.b16 %v2087
        %v2125 = vpack.c.b16 %v2110, %v2109
        %v2126 = vpack.c.b16 %v2112, %v2111
        %v2127 = vpack.c.b16 %v2114, %v2113
        %v2128 = vpack.c.b16 %v2116, %v2115
        %v2129 = vpack.c.b16 %v2118, %v2117
        %v2130 = vpack.c.b16 %v2120, %v2119
        %v2131 = vpack.c.b16 %v2122, %v2121
        %v2132 = vpack.c.b16 %v2124, %v2123
        %2141 = vmatpush.bf16.msra.mxu0 %v2132
        %2142 = vmatpush.bf16.msra.mxu0 %v2131
        %2143 = vmatpush.bf16.msra.mxu0 %v2130
        %2144 = vmatpush.bf16.msra.mxu0 %v2129
        %2145 = vmatpush.bf16.msra.mxu0 %v2128
        %2146 = vmatpush.bf16.msra.mxu0 %v2127
        %2147 = vmatpush.bf16.msra.mxu0 %v2126
        %2148 = vmatpush.bf16.msra.mxu0 %v2125
        %2149 = vmatmul.bf16.gmra.mxu0 %v2070
        %v2150 = vpop.f32.mrf.mxu0
        %v2151 = vadd.f32 %v2091, %v2150
        %v2152 = vpop.f32.mrf.mxu0
        %2153 = vdwg.mxu0
        %v2154 = vadd.f32 %v2151, %v2029
        %s2155 = scalar_lea.vmem %s16, 1
        %v2156 = vld [vmem:[%s2155] sm:$0x1]
        %s2157 = scalar_lea.vmem %s17, 1
        %v2158 = vld [vmem:[%s2157] sm:$0x1]
        %v2159 = vsel %vm600, %v2154, 0.0
        %2160 = vadd.xlane.f32.xlu0 %v2159
        %v2161 = vpop.xlane.xlu0 %2160
        %v2162 = vmul.f32 %v2161, %v1198
        %v2163 = vsub.f32 %v2154, %v2162
        %v2164 = vmul.f32 %v2163, %v2163
        %v2165 = vsel %vm600, %v2164, 0.0
        %2166 = vadd.xlane.f32.xlu0 %v2165
        %v2167 = vpop.xlane.xlu0 %2166
        %v2168 = vmul.f32 %v2167, %v1198
        %v2169 = vadd.f32 %v2168, 1e-12
        %v2170 = vrsqrt.pop %v2169
        %v2171 = vmul.f32 %v2170, %v2169
        %v2172 = vmul.f32 %v2171, %v2170
        %v2173 = vmul.f32 0.5, %v2172
        %v2174 = vsub.f32 1.5, %v2173
        %v2175 = vmul.f32 %v2170, %v2174
        %vm2176 = vweird.f32 %v2169
        %vm2177 = vweird.f32 %v2170
        %vm2178 = vmor %vm2176, %vm2177
        %v2179 = vsel %vm2178, %v2170, %v2175
        %v2180 = vmul.f32 %v2163, %v2179
        %v2182 = vperm.slane %v2156, 0
        %v2184 = vmul.f32 %v2180, %v2182
        %v2186 = vperm.slane %v2158, 0
        %v2188 = vadd.f32 %v2184, %v2186
        %2189 = vst.msk [vmem:[%s566] sm:$0xff] %vm600, %v2188
        %s2190 = sand.u32 %s423, 1
        %s2191 = scalar_lea.sflag [#allocation3], %s2190
        %s2192 = sand.u32 %s423, 1
        %s2193 = smul.addr %s2192, 8
        %s2194 = scalar_lea.vmem [#allocation2], %s2193
        // Predicated region
        $region93: #{encoder_forward.1} parent=91 // pred_check
          %p2195 = pneg %p433
        $region94: #{encoder_forward.1} parent=91 // pred_check_branch
          %2197 = sbr.rel (%p2195) target = $region96
        $region95: #{encoder_forward.1} parent=91 // pred_region
          %2199 = vsyncadd %s2191, 0
          %s2200 = smul.addr %s32, 8
          %s2201 = scalar_lea.hbm %s18, %s2200
          %s2203 = sshll.u32 %s2194, 4
          %s2204 = int_to_ptr.vmem [resolvable:$true] %s2203
          %s2205 = sshll.u32 %s2201, 4
          %s2206 = int_to_ptr.hbm [resolvable:$true] %s2205
          %2208 = dma.vmem_to_hbm [thread:$0]  %s2204, 128, %s2206, %s2191
        $region96: #{encoder_forward.1} parent=91 // pred_fallthru
          _
      $region92: #{encoder_forward.1} parent=5 // pred_fallthru
        _
      %p2209 = scmp.le.s32.totalorder 2, %s27
      // Predicated region
      $region97: #{encoder_forward.1} parent=5 // pred_check
        %p2210 = pneg %p2209
      $region98: #{encoder_forward.1} parent=5 // pred_check_branch
        %2212 = sbr.rel (%p2210) target = $region100
      $region99: #{encoder_forward.1} parent=5 // pred_region
        %s2213 = ssub.s32 %s27, 2
        // Predicated region
        $region101: #{encoder_forward.1} parent=99 // pred_check
          %p2214 = pneg %p439
        $region102: #{encoder_forward.1} parent=99 // pred_check_branch
          %2216 = sbr.rel (%p2214) target = $region104
        $region103: #{encoder_forward.1} parent=99 // pred_region
          %s2217 = sand.u32 %s424, 1
          %s2218 = scalar_lea.sflag [#allocation3], %s2217
          %s2219 = sand.u32 %s424, 1
          %s2220 = smul.addr %s2219, 8
          %s2221 = scalar_lea.vmem [#allocation2], %s2220
          %2223 = dma.done %s2218, 128
        $region104: #{encoder_forward.1} parent=99 // pred_fallthru
          _
      $region100: #{encoder_forward.1} parent=5 // pred_fallthru
        _
    $region6: #{encoder_forward.1} parent=1 // loop_footer
      %s31 = sadd.s32 1, %s27
    $region7: #{encoder_forward.1} parent=1 // loop_footer_branch
      %26 = sbr.rel target = $region3
    $region8: #{encoder_forward.1} parent=1 // loop_exit
      _
    %2224 = vsyncpa [#allocation3], 1
    %s2225 = scalar_lea.sflag [#allocation3], 1
    %2226 = vsyncpa %s2225, 1

</llo_original>
